<compile_context>
chip_gen: v7x
topology: tpu7x:2x2x1
jax: 0.10.0
libtpu: 0.0.40
codegen_flags: <defaults>
</compile_context>

<pallas_src>
import numpy as np
import jax
import jax.numpy as jnp
from jax.experimental import pallas as pl
from jax.experimental.pallas import tpu as pltpu


# (4, 1, 3, 3) base Sobel kernels, identical to the PyTorch buffer.
_SOBEL_BASE = np.array(
    [[[[-1., -2., -1.], [0., 0., 0.], [1., 2., 1.]]],
     [[[-1., 0., 1.], [-2., 0., 2.], [-1., 0., 1.]]],
     [[[-2., -1., 0.], [-1., 0., 1.], [0., 1., 2.]]],
     [[[0., 1., 2.], [-1., 0., 1.], [-2., -1., 0.]]]], dtype=np.float32)


def make_sobel_kernel(in_channels, out_channels):
    """Replicates `_sobel_kernel.repeat(groups, in_channels, 1, 1)`."""
    assert out_channels % 4 == 0, 'out channels must be times of 4'
    groups = out_channels // 4
    return jnp.asarray(np.tile(_SOBEL_BASE, (groups, in_channels, 1, 1)))


def _border_masks(H, W):
    """(9, 1, P) f32 masks.  Tap t = (dy+1)*3 + (dx+1) is valid at output
    pixel (h, w) iff (h+dy, w+dx) lies inside the HxW image -- this IS the
    conv's pad=1 zero halo (so no jnp.pad / padded input is ever needed)."""
    P = H * W
    rows = np.arange(P, dtype=np.int64) // W
    cols = np.arange(P, dtype=np.int64) % W
    m = np.zeros((9, 1, P), np.float32)
    t = 0
    for dy in (-1, 0, 1):
        for dx in (-1, 0, 1):
            valid = ((rows + dy >= 0) & (rows + dy < H) &
                     (cols + dx >= 0) & (cols + dx < W))
            m[t, 0, :] = valid
            t += 1
    return m


def _pick_batch_tile(N, bytes_per_image, budget=2 << 20):
    """Largest divisor of N whose per-step (in + out) block stays ~<= budget."""
    bt = int(max(1, min(N, budget // max(bytes_per_image, 1))))
    while N % bt:
        bt -= 1
    return bt


def sobel_conv2d(x, scale, bias, sobel_kernel):
    """SobelConv2d.forward.  x: (N, Cin, H, W) NCHW.  Returns (N, Cin+Cout, H, W)."""
    N, Cin, H, W = x.shape
    Cout = sobel_kernel.shape[0]
    P = H * W
    K = 9 * Cin

    # Effective conv weight (tiny; plain-JAX glue), laid out tap-major /
    # cin-minor with Cout on the SUBLANE axis:
    #   w_taps[(ky*3 + kx)*Cin + ci, co, 0] == (scale * kernel)[co, ci, ky, kx]
    weight = (scale * sobel_kernel).astype(jnp.float32)            # (Cout, Cin, 3, 3)
    w_taps = jnp.transpose(weight, (2, 3, 1, 0)).reshape(K, Cout, 1)
    if bias is None:
        bias = jnp.zeros((Cout,), jnp.float32)
    b_col = bias.astype(jnp.float32).reshape(Cout, 1)

    masks = jnp.asarray(_border_masks(H, W))                        # (9, 1, P)

    # Lane-dense input: free reshape of contiguous NCHW (spatial -> lanes).
    x_flat = x.reshape(N, Cin, P)

    # Fold several images into one grid step (whole batch for small frames).
    itemsize = jnp.dtype(x.dtype).itemsize
    bytes_per_image = (Cin + (Cin + Cout)) * P * itemsize
    bt = _pick_batch_tile(N, bytes_per_image)
    grid = (N // bt,)

    def kernel(x_ref, w_ref, m_ref, b_ref, o_ref):
        # Fused concat, part 1: passthrough channels stored unchanged
        # (no f32 round trip for the x channels).
        o_ref[:, 0:Cin, :] = x_ref[...]

        xv = x_ref[...].astype(jnp.float32)                         # (bt, Cin, P)
        acc = jnp.zeros((bt, Cout, P), jnp.float32)

        t = 0
        for dy in (-1, 0, 1):
            for dx in (-1, 0, 1):
                s = dy * W + dx
                if s == 0:
                    tap = xv                                        # center tap == x
                else:
                    # tap[q] = x[q + s]  (circular rotate; out-of-image reads
                    # are zeroed by the precomputed border mask).
                    tap = pltpu.roll(xv, shift=(-s) % P, axis=2)
                    tap = tap * m_ref[t]                            # (1, P) mask
                for c in range(Cin):
                    wk = w_ref[t * Cin + c]                         # (Cout, 1)
                    # rank-1 VPU FMA: (Cout,1) x (bt,1,P) -> (bt,Cout,P)
                    acc = acc + wk * tap[:, c:c + 1, :]
                t += 1

        acc = acc + b_ref[...]                                      # (Cout, 1) bias
        # Fused concat, part 2: conv channels.
        o_ref[:, Cin:Cin + Cout, :] = acc.astype(o_ref.dtype)

    out = pl.pallas_call(
        kernel,
        out_shape=jax.ShapeDtypeStruct((N, Cin + Cout, P), x.dtype),
        grid=grid,
        in_specs=[
            pl.BlockSpec((bt, Cin, P), lambda n: (n, 0, 0)),
            pl.BlockSpec((K, Cout, 1), lambda n: (0, 0, 0)),
            pl.BlockSpec((9, 1, P), lambda n: (0, 0, 0)),
            pl.BlockSpec((Cout, 1), lambda n: (0, 0)),
        ],
        out_specs=pl.BlockSpec((bt, Cin + Cout, P), lambda n: (n, 0, 0)),
        compiler_params=pltpu.CompilerParams(dimension_semantics=("parallel",)),
    )(x_flat, w_taps, masks, b_col)

    return out.reshape(N, Cin + Cout, H, W)


if __name__ == "__main__":
    key = jax.random.PRNGKey(0)
    k_x, k_s, k_b = jax.random.split(key, 3)

    # Small shapes consistent with the module.
    N, Cin, H, W = 2, 4, 16, 16
    Cout = 32                                      # must be a multiple of 4

    x = jax.random.normal(k_x, (N, Cin, H, W), jnp.float32)
    # PyTorch init is scale=ones / bias=zeros; perturb so both paths are exercised.
    scale = 1.0 + 0.1 * jax.random.normal(k_s, (Cout, Cin, 1, 1), jnp.float32)
    bias = 0.1 * jax.random.normal(k_b, (Cout,), jnp.float32)
    sobel_k = make_sobel_kernel(Cin, Cout)

    fwd = jax.jit(sobel_conv2d)
    out = fwd(x, scale, bias, sobel_k)
    jax.block_until_ready(out)

    assert out.shape == (N, Cin + Cout, H, W), out.shape
    assert bool(jnp.all(jnp.isfinite(out)))

    # Pure-JAX reference (high-precision conv) for a correctness sanity check.
    ref_conv = jax.lax.conv_general_dilated(
        x, scale * sobel_k, window_strides=(1, 1), padding=((1, 1), (1, 1)),
        dimension_numbers=("NCHW", "OIHW", "NCHW"),
        precision=jax.lax.Precision.HIGHEST)
    ref = jnp.concatenate([x, ref_conv + bias.reshape(1, Cout, 1, 1)], axis=1)
    assert bool(jnp.allclose(out, ref, rtol=1e-3, atol=1e-3)), \
        float(jnp.max(jnp.abs(out - ref)))

    print("KERNEL_OK")
</pallas_src>

<mosaic_0001>
module attributes {stable_mosaic.version = 11 : i64} {
  func.func @kernel(%arg0: i32, %arg1: memref<2x4x256xf32, #tpu.memory_space<vmem>>, %arg2: memref<36x32x1xf32, #tpu.memory_space<vmem>>, %arg3: memref<9x1x256xf32, #tpu.memory_space<vmem>>, %arg4: memref<32x1xf32, #tpu.memory_space<vmem>>, %arg5: memref<2x36x256xf32, #tpu.memory_space<vmem>>) attributes {dimension_semantics = [#tpu.dimension_semantics<parallel>], iteration_bounds = array<i64: 1>, scalar_prefetch = 0 : i64, scratch_operands = 0 : i64, tpu.core_type = #tpu.core_type<tc>, window_params = [{transform_indices = @transform_0, window_bounds = array<i64: 2, 4, 256>}, {pipeline_mode = #tpu.pipeline_mode<synchronous>, transform_indices = @transform_1, window_bounds = array<i64: 36, 32, 1>}, {pipeline_mode = #tpu.pipeline_mode<synchronous>, transform_indices = @transform_2, window_bounds = array<i64: 9, 1, 256>}, {pipeline_mode = #tpu.pipeline_mode<synchronous>, transform_indices = @transform_3, window_bounds = array<i64: 32, 1>}, {transform_indices = @transform_4, window_bounds = array<i64: 2, 36, 256>}]} {
    %c0 = arith.constant 0 : index
    %c0_0 = arith.constant 0 : index
    %c0_1 = arith.constant 0 : index
    %0 = vector.load %arg1[%c0, %c0_0, %c0_1] : memref<2x4x256xf32, #tpu.memory_space<vmem>>, vector<2x4x256xf32>
    %c0_2 = arith.constant 0 : index
    %c0_3 = arith.constant 0 : index
    %c0_4 = arith.constant 0 : index
    %1 = vector.load %arg5[%c0_2, %c0_3, %c0_4] : memref<2x36x256xf32, #tpu.memory_space<vmem>>, vector<2x4x256xf32>
    tpu.vector_store %arg5[%c0_2, %c0_3, %c0_4], %0 {strides = array<i32>} : memref<2x36x256xf32, #tpu.memory_space<vmem>>, vector<2x4x256xf32>,
    %c0_5 = arith.constant 0 : index
    %c0_6 = arith.constant 0 : index
    %c0_7 = arith.constant 0 : index
    %2 = vector.load %arg1[%c0_5, %c0_6, %c0_7] : memref<2x4x256xf32, #tpu.memory_space<vmem>>, vector<2x4x256xf32>
    %cst = arith.constant 0.000000e+00 : f32
    %3 = vector.broadcast %cst : f32 to vector<2x32x256xf32>
    %c17_i32 = arith.constant 17 : i32
    %4 = tpu.dynamic_rotate %2 by %c17_i32 dim 2 : vector<2x4x256xf32>, i32 -> vector<2x4x256xf32>
    %c0_8 = arith.constant 0 : index
    %c0_9 = arith.constant 0 : index
    %c0_10 = arith.constant 0 : index
    %5 = vector.load %arg3[%c0_8, %c0_9, %c0_10] : memref<9x1x256xf32, #tpu.memory_space<vmem>>, vector<1x1x256xf32>
    %6 = vector.shape_cast %5 : vector<1x1x256xf32> to vector<1x256xf32>
    %7 = vector.shape_cast %6 : vector<1x256xf32> to vector<1x1x256xf32>
    %8 = vector.broadcast %7 : vector<1x1x256xf32> to vector<2x4x256xf32>
    %9 = arith.mulf %4, %8 : vector<2x4x256xf32>
    %c0_11 = arith.constant 0 : index
    %c0_12 = arith.constant 0 : index
    %c0_13 = arith.constant 0 : index
    %10 = vector.load %arg2[%c0_11, %c0_12, %c0_13] : memref<36x32x1xf32, #tpu.memory_space<vmem>>, vector<1x32x1xf32>
    %11 = vector.shape_cast %10 : vector<1x32x1xf32> to vector<32x1xf32>
    %12 = vector.extract_strided_slice %9 {offsets = [0, 0, 0], sizes = [2, 1, 256], strides = [1, 1, 1]} : vector<2x4x256xf32> to vector<2x1x256xf32>
    %13 = vector.shape_cast %11 : vector<32x1xf32> to vector<1x32x1xf32>
    %14 = vector.broadcast %13 : vector<1x32x1xf32> to vector<2x32x256xf32>
    %15 = vector.broadcast %12 : vector<2x1x256xf32> to vector<2x32x256xf32>
    %16 = arith.mulf %14, %15 : vector<2x32x256xf32>
    %17 = arith.addf %3, %16 : vector<2x32x256xf32>
    %c1 = arith.constant 1 : index
    %c0_14 = arith.constant 0 : index
    %c0_15 = arith.constant 0 : index
    %18 = vector.load %arg2[%c1, %c0_14, %c0_15] : memref<36x32x1xf32, #tpu.memory_space<vmem>>, vector<1x32x1xf32>
    %19 = vector.shape_cast %18 : vector<1x32x1xf32> to vector<32x1xf32>
    %20 = vector.extract_strided_slice %9 {offsets = [0, 1, 0], sizes = [2, 1, 256], strides = [1, 1, 1]} : vector<2x4x256xf32> to vector<2x1x256xf32>
    %21 = vector.shape_cast %19 : vector<32x1xf32> to vector<1x32x1xf32>
    %22 = vector.broadcast %21 : vector<1x32x1xf32> to vector<2x32x256xf32>
    %23 = vector.broadcast %20 : vector<2x1x256xf32> to vector<2x32x256xf32>
    %24 = arith.mulf %22, %23 : vector<2x32x256xf32>
    %25 = arith.addf %17, %24 : vector<2x32x256xf32>
    %c2 = arith.constant 2 : index
    %c0_16 = arith.constant 0 : index
    %c0_17 = arith.constant 0 : index
    %26 = vector.load %arg2[%c2, %c0_16, %c0_17] : memref<36x32x1xf32, #tpu.memory_space<vmem>>, vector<1x32x1xf32>
    %27 = vector.shape_cast %26 : vector<1x32x1xf32> to vector<32x1xf32>
    %28 = vector.extract_strided_slice %9 {offsets = [0, 2, 0], sizes = [2, 1, 256], strides = [1, 1, 1]} : vector<2x4x256xf32> to vector<2x1x256xf32>
    %29 = vector.shape_cast %27 : vector<32x1xf32> to vector<1x32x1xf32>
    %30 = vector.broadcast %29 : vector<1x32x1xf32> to vector<2x32x256xf32>
    %31 = vector.broadcast %28 : vector<2x1x256xf32> to vector<2x32x256xf32>
    %32 = arith.mulf %30, %31 : vector<2x32x256xf32>
    %33 = arith.addf %25, %32 : vector<2x32x256xf32>
    %c3 = arith.constant 3 : index
    %c0_18 = arith.constant 0 : index
    %c0_19 = arith.constant 0 : index
    %34 = vector.load %arg2[%c3, %c0_18, %c0_19] : memref<36x32x1xf32, #tpu.memory_space<vmem>>, vector<1x32x1xf32>
    %35 = vector.shape_cast %34 : vector<1x32x1xf32> to vector<32x1xf32>
    %36 = vector.extract_strided_slice %9 {offsets = [0, 3, 0], sizes = [2, 1, 256], strides = [1, 1, 1]} : vector<2x4x256xf32> to vector<2x1x256xf32>
    %37 = vector.shape_cast %35 : vector<32x1xf32> to vector<1x32x1xf32>
    %38 = vector.broadcast %37 : vector<1x32x1xf32> to vector<2x32x256xf32>
    %39 = vector.broadcast %36 : vector<2x1x256xf32> to vector<2x32x256xf32>
    %40 = arith.mulf %38, %39 : vector<2x32x256xf32>
    %41 = arith.addf %33, %40 : vector<2x32x256xf32>
    %c16_i32 = arith.constant 16 : i32
    %42 = tpu.dynamic_rotate %2 by %c16_i32 dim 2 : vector<2x4x256xf32>, i32 -> vector<2x4x256xf32>
    %c1_20 = arith.constant 1 : index
    %c0_21 = arith.constant 0 : index
    %c0_22 = arith.constant 0 : index
    %43 = vector.load %arg3[%c1_20, %c0_21, %c0_22] : memref<9x1x256xf32, #tpu.memory_space<vmem>>, vector<1x1x256xf32>
    %44 = vector.shape_cast %43 : vector<1x1x256xf32> to vector<1x256xf32>
    %45 = vector.shape_cast %44 : vector<1x256xf32> to vector<1x1x256xf32>
    %46 = vector.broadcast %45 : vector<1x1x256xf32> to vector<2x4x256xf32>
    %47 = arith.mulf %42, %46 : vector<2x4x256xf32>
    %c4 = arith.constant 4 : index
    %c0_23 = arith.constant 0 : index
    %c0_24 = arith.constant 0 : index
    %48 = vector.load %arg2[%c4, %c0_23, %c0_24] : memref<36x32x1xf32, #tpu.memory_space<vmem>>, vector<1x32x1xf32>
    %49 = vector.shape_cast %48 : vector<1x32x1xf32> to vector<32x1xf32>
    %50 = vector.extract_strided_slice %47 {offsets = [0, 0, 0], sizes = [2, 1, 256], strides = [1, 1, 1]} : vector<2x4x256xf32> to vector<2x1x256xf32>
    %51 = vector.shape_cast %49 : vector<32x1xf32> to vector<1x32x1xf32>
    %52 = vector.broadcast %51 : vector<1x32x1xf32> to vector<2x32x256xf32>
    %53 = vector.broadcast %50 : vector<2x1x256xf32> to vector<2x32x256xf32>
    %54 = arith.mulf %52, %53 : vector<2x32x256xf32>
    %55 = arith.addf %41, %54 : vector<2x32x256xf32>
    %c5 = arith.constant 5 : index
    %c0_25 = arith.constant 0 : index
    %c0_26 = arith.constant 0 : index
    %56 = vector.load %arg2[%c5, %c0_25, %c0_26] : memref<36x32x1xf32, #tpu.memory_space<vmem>>, vector<1x32x1xf32>
    %57 = vector.shape_cast %56 : vector<1x32x1xf32> to vector<32x1xf32>
    %58 = vector.extract_strided_slice %47 {offsets = [0, 1, 0], sizes = [2, 1, 256], strides = [1, 1, 1]} : vector<2x4x256xf32> to vector<2x1x256xf32>
    %59 = vector.shape_cast %57 : vector<32x1xf32> to vector<1x32x1xf32>
    %60 = vector.broadcast %59 : vector<1x32x1xf32> to vector<2x32x256xf32>
    %61 = vector.broadcast %58 : vector<2x1x256xf32> to vector<2x32x256xf32>
    %62 = arith.mulf %60, %61 : vector<2x32x256xf32>
    %63 = arith.addf %55, %62 : vector<2x32x256xf32>
    %c6 = arith.constant 6 : index
    %c0_27 = arith.constant 0 : index
    %c0_28 = arith.constant 0 : index
    %64 = vector.load %arg2[%c6, %c0_27, %c0_28] : memref<36x32x1xf32, #tpu.memory_space<vmem>>, vector<1x32x1xf32>
    %65 = vector.shape_cast %64 : vector<1x32x1xf32> to vector<32x1xf32>
    %66 = vector.extract_strided_slice %47 {offsets = [0, 2, 0], sizes = [2, 1, 256], strides = [1, 1, 1]} : vector<2x4x256xf32> to vector<2x1x256xf32>
    %67 = vector.shape_cast %65 : vector<32x1xf32> to vector<1x32x1xf32>
    %68 = vector.broadcast %67 : vector<1x32x1xf32> to vector<2x32x256xf32>
    %69 = vector.broadcast %66 : vector<2x1x256xf32> to vector<2x32x256xf32>
    %70 = arith.mulf %68, %69 : vector<2x32x256xf32>
    %71 = arith.addf %63, %70 : vector<2x32x256xf32>
    %c7 = arith.constant 7 : index
    %c0_29 = arith.constant 0 : index
    %c0_30 = arith.constant 0 : index
    %72 = vector.load %arg2[%c7, %c0_29, %c0_30] : memref<36x32x1xf32, #tpu.memory_space<vmem>>, vector<1x32x1xf32>
    %73 = vector.shape_cast %72 : vector<1x32x1xf32> to vector<32x1xf32>
    %74 = vector.extract_strided_slice %47 {offsets = [0, 3, 0], sizes = [2, 1, 256], strides = [1, 1, 1]} : vector<2x4x256xf32> to vector<2x1x256xf32>
    %75 = vector.shape_cast %73 : vector<32x1xf32> to vector<1x32x1xf32>
    %76 = vector.broadcast %75 : vector<1x32x1xf32> to vector<2x32x256xf32>
    %77 = vector.broadcast %74 : vector<2x1x256xf32> to vector<2x32x256xf32>
    %78 = arith.mulf %76, %77 : vector<2x32x256xf32>
    %79 = arith.addf %71, %78 : vector<2x32x256xf32>
    %c15_i32 = arith.constant 15 : i32
    %80 = tpu.dynamic_rotate %2 by %c15_i32 dim 2 : vector<2x4x256xf32>, i32 -> vector<2x4x256xf32>
    %c2_31 = arith.constant 2 : index
    %c0_32 = arith.constant 0 : index
    %c0_33 = arith.constant 0 : index
    %81 = vector.load %arg3[%c2_31, %c0_32, %c0_33] : memref<9x1x256xf32, #tpu.memory_space<vmem>>, vector<1x1x256xf32>
    %82 = vector.shape_cast %81 : vector<1x1x256xf32> to vector<1x256xf32>
    %83 = vector.shape_cast %82 : vector<1x256xf32> to vector<1x1x256xf32>
    %84 = vector.broadcast %83 : vector<1x1x256xf32> to vector<2x4x256xf32>
    %85 = arith.mulf %80, %84 : vector<2x4x256xf32>
    %c8 = arith.constant 8 : index
    %c0_34 = arith.constant 0 : index
    %c0_35 = arith.constant 0 : index
    %86 = vector.load %arg2[%c8, %c0_34, %c0_35] : memref<36x32x1xf32, #tpu.memory_space<vmem>>, vector<1x32x1xf32>
    %87 = vector.shape_cast %86 : vector<1x32x1xf32> to vector<32x1xf32>
    %88 = vector.extract_strided_slice %85 {offsets = [0, 0, 0], sizes = [2, 1, 256], strides = [1, 1, 1]} : vector<2x4x256xf32> to vector<2x1x256xf32>
    %89 = vector.shape_cast %87 : vector<32x1xf32> to vector<1x32x1xf32>
    %90 = vector.broadcast %89 : vector<1x32x1xf32> to vector<2x32x256xf32>
    %91 = vector.broadcast %88 : vector<2x1x256xf32> to vector<2x32x256xf32>
    %92 = arith.mulf %90, %91 : vector<2x32x256xf32>
    %93 = arith.addf %79, %92 : vector<2x32x256xf32>
    %c9 = arith.constant 9 : index
    %c0_36 = arith.constant 0 : index
    %c0_37 = arith.constant 0 : index
    %94 = vector.load %arg2[%c9, %c0_36, %c0_37] : memref<36x32x1xf32, #tpu.memory_space<vmem>>, vector<1x32x1xf32>
    %95 = vector.shape_cast %94 : vector<1x32x1xf32> to vector<32x1xf32>
    %96 = vector.extract_strided_slice %85 {offsets = [0, 1, 0], sizes = [2, 1, 256], strides = [1, 1, 1]} : vector<2x4x256xf32> to vector<2x1x256xf32>
    %97 = vector.shape_cast %95 : vector<32x1xf32> to vector<1x32x1xf32>
    %98 = vector.broadcast %97 : vector<1x32x1xf32> to vector<2x32x256xf32>
    %99 = vector.broadcast %96 : vector<2x1x256xf32> to vector<2x32x256xf32>
    %100 = arith.mulf %98, %99 : vector<2x32x256xf32>
    %101 = arith.addf %93, %100 : vector<2x32x256xf32>
    %c10 = arith.constant 10 : index
    %c0_38 = arith.constant 0 : index
    %c0_39 = arith.constant 0 : index
    %102 = vector.load %arg2[%c10, %c0_38, %c0_39] : memref<36x32x1xf32, #tpu.memory_space<vmem>>, vector<1x32x1xf32>
    %103 = vector.shape_cast %102 : vector<1x32x1xf32> to vector<32x1xf32>
    %104 = vector.extract_strided_slice %85 {offsets = [0, 2, 0], sizes = [2, 1, 256], strides = [1, 1, 1]} : vector<2x4x256xf32> to vector<2x1x256xf32>
    %105 = vector.shape_cast %103 : vector<32x1xf32> to vector<1x32x1xf32>
    %106 = vector.broadcast %105 : vector<1x32x1xf32> to vector<2x32x256xf32>
    %107 = vector.broadcast %104 : vector<2x1x256xf32> to vector<2x32x256xf32>
    %108 = arith.mulf %106, %107 : vector<2x32x256xf32>
    %109 = arith.addf %101, %108 : vector<2x32x256xf32>
    %c11 = arith.constant 11 : index
    %c0_40 = arith.constant 0 : index
    %c0_41 = arith.constant 0 : index
    %110 = vector.load %arg2[%c11, %c0_40, %c0_41] : memref<36x32x1xf32, #tpu.memory_space<vmem>>, vector<1x32x1xf32>
    %111 = vector.shape_cast %110 : vector<1x32x1xf32> to vector<32x1xf32>
    %112 = vector.extract_strided_slice %85 {offsets = [0, 3, 0], sizes = [2, 1, 256], strides = [1, 1, 1]} : vector<2x4x256xf32> to vector<2x1x256xf32>
    %113 = vector.shape_cast %111 : vector<32x1xf32> to vector<1x32x1xf32>
    %114 = vector.broadcast %113 : vector<1x32x1xf32> to vector<2x32x256xf32>
    %115 = vector.broadcast %112 : vector<2x1x256xf32> to vector<2x32x256xf32>
    %116 = arith.mulf %114, %115 : vector<2x32x256xf32>
    %117 = arith.addf %109, %116 : vector<2x32x256xf32>
    %c1_i32 = arith.constant 1 : i32
    %118 = tpu.dynamic_rotate %2 by %c1_i32 dim 2 : vector<2x4x256xf32>, i32 -> vector<2x4x256xf32>
    %c3_42 = arith.constant 3 : index
    %c0_43 = arith.constant 0 : index
    %c0_44 = arith.constant 0 : index
    %119 = vector.load %arg3[%c3_42, %c0_43, %c0_44] : memref<9x1x256xf32, #tpu.memory_space<vmem>>, vector<1x1x256xf32>
    %120 = vector.shape_cast %119 : vector<1x1x256xf32> to vector<1x256xf32>
    %121 = vector.shape_cast %120 : vector<1x256xf32> to vector<1x1x256xf32>
    %122 = vector.broadcast %121 : vector<1x1x256xf32> to vector<2x4x256xf32>
    %123 = arith.mulf %118, %122 : vector<2x4x256xf32>
    %c12 = arith.constant 12 : index
    %c0_45 = arith.constant 0 : index
    %c0_46 = arith.constant 0 : index
    %124 = vector.load %arg2[%c12, %c0_45, %c0_46] : memref<36x32x1xf32, #tpu.memory_space<vmem>>, vector<1x32x1xf32>
    %125 = vector.shape_cast %124 : vector<1x32x1xf32> to vector<32x1xf32>
    %126 = vector.extract_strided_slice %123 {offsets = [0, 0, 0], sizes = [2, 1, 256], strides = [1, 1, 1]} : vector<2x4x256xf32> to vector<2x1x256xf32>
    %127 = vector.shape_cast %125 : vector<32x1xf32> to vector<1x32x1xf32>
    %128 = vector.broadcast %127 : vector<1x32x1xf32> to vector<2x32x256xf32>
    %129 = vector.broadcast %126 : vector<2x1x256xf32> to vector<2x32x256xf32>
    %130 = arith.mulf %128, %129 : vector<2x32x256xf32>
    %131 = arith.addf %117, %130 : vector<2x32x256xf32>
    %c13 = arith.constant 13 : index
    %c0_47 = arith.constant 0 : index
    %c0_48 = arith.constant 0 : index
    %132 = vector.load %arg2[%c13, %c0_47, %c0_48] : memref<36x32x1xf32, #tpu.memory_space<vmem>>, vector<1x32x1xf32>
    %133 = vector.shape_cast %132 : vector<1x32x1xf32> to vector<32x1xf32>
    %134 = vector.extract_strided_slice %123 {offsets = [0, 1, 0], sizes = [2, 1, 256], strides = [1, 1, 1]} : vector<2x4x256xf32> to vector<2x1x256xf32>
    %135 = vector.shape_cast %133 : vector<32x1xf32> to vector<1x32x1xf32>
    %136 = vector.broadcast %135 : vector<1x32x1xf32> to vector<2x32x256xf32>
    %137 = vector.broadcast %134 : vector<2x1x256xf32> to vector<2x32x256xf32>
    %138 = arith.mulf %136, %137 : vector<2x32x256xf32>
    %139 = arith.addf %131, %138 : vector<2x32x256xf32>
    %c14 = arith.constant 14 : index
    %c0_49 = arith.constant 0 : index
    %c0_50 = arith.constant 0 : index
    %140 = vector.load %arg2[%c14, %c0_49, %c0_50] : memref<36x32x1xf32, #tpu.memory_space<vmem>>, vector<1x32x1xf32>
    %141 = vector.shape_cast %140 : vector<1x32x1xf32> to vector<32x1xf32>
    %142 = vector.extract_strided_slice %123 {offsets = [0, 2, 0], sizes = [2, 1, 256], strides = [1, 1, 1]} : vector<2x4x256xf32> to vector<2x1x256xf32>
    %143 = vector.shape_cast %141 : vector<32x1xf32> to vector<1x32x1xf32>
    %144 = vector.broadcast %143 : vector<1x32x1xf32> to vector<2x32x256xf32>
    %145 = vector.broadcast %142 : vector<2x1x256xf32> to vector<2x32x256xf32>
    %146 = arith.mulf %144, %145 : vector<2x32x256xf32>
    %147 = arith.addf %139, %146 : vector<2x32x256xf32>
    %c15 = arith.constant 15 : index
    %c0_51 = arith.constant 0 : index
    %c0_52 = arith.constant 0 : index
    %148 = vector.load %arg2[%c15, %c0_51, %c0_52] : memref<36x32x1xf32, #tpu.memory_space<vmem>>, vector<1x32x1xf32>
    %149 = vector.shape_cast %148 : vector<1x32x1xf32> to vector<32x1xf32>
    %150 = vector.extract_strided_slice %123 {offsets = [0, 3, 0], sizes = [2, 1, 256], strides = [1, 1, 1]} : vector<2x4x256xf32> to vector<2x1x256xf32>
    %151 = vector.shape_cast %149 : vector<32x1xf32> to vector<1x32x1xf32>
    %152 = vector.broadcast %151 : vector<1x32x1xf32> to vector<2x32x256xf32>
    %153 = vector.broadcast %150 : vector<2x1x256xf32> to vector<2x32x256xf32>
    %154 = arith.mulf %152, %153 : vector<2x32x256xf32>
    %155 = arith.addf %147, %154 : vector<2x32x256xf32>
    %c16 = arith.constant 16 : index
    %c0_53 = arith.constant 0 : index
    %c0_54 = arith.constant 0 : index
    %156 = vector.load %arg2[%c16, %c0_53, %c0_54] : memref<36x32x1xf32, #tpu.memory_space<vmem>>, vector<1x32x1xf32>
    %157 = vector.shape_cast %156 : vector<1x32x1xf32> to vector<32x1xf32>
    %158 = vector.extract_strided_slice %2 {offsets = [0, 0, 0], sizes = [2, 1, 256], strides = [1, 1, 1]} : vector<2x4x256xf32> to vector<2x1x256xf32>
    %159 = vector.shape_cast %157 : vector<32x1xf32> to vector<1x32x1xf32>
    %160 = vector.broadcast %159 : vector<1x32x1xf32> to vector<2x32x256xf32>
    %161 = vector.broadcast %158 : vector<2x1x256xf32> to vector<2x32x256xf32>
    %162 = arith.mulf %160, %161 : vector<2x32x256xf32>
    %163 = arith.addf %155, %162 : vector<2x32x256xf32>
    %c17 = arith.constant 17 : index
    %c0_55 = arith.constant 0 : index
    %c0_56 = arith.constant 0 : index
    %164 = vector.load %arg2[%c17, %c0_55, %c0_56] : memref<36x32x1xf32, #tpu.memory_space<vmem>>, vector<1x32x1xf32>
    %165 = vector.shape_cast %164 : vector<1x32x1xf32> to vector<32x1xf32>
    %166 = vector.extract_strided_slice %2 {offsets = [0, 1, 0], sizes = [2, 1, 256], strides = [1, 1, 1]} : vector<2x4x256xf32> to vector<2x1x256xf32>
    %167 = vector.shape_cast %165 : vector<32x1xf32> to vector<1x32x1xf32>
    %168 = vector.broadcast %167 : vector<1x32x1xf32> to vector<2x32x256xf32>
    %169 = vector.broadcast %166 : vector<2x1x256xf32> to vector<2x32x256xf32>
    %170 = arith.mulf %168, %169 : vector<2x32x256xf32>
    %171 = arith.addf %163, %170 : vector<2x32x256xf32>
    %c18 = arith.constant 18 : index
    %c0_57 = arith.constant 0 : index
    %c0_58 = arith.constant 0 : index
    %172 = vector.load %arg2[%c18, %c0_57, %c0_58] : memref<36x32x1xf32, #tpu.memory_space<vmem>>, vector<1x32x1xf32>
    %173 = vector.shape_cast %172 : vector<1x32x1xf32> to vector<32x1xf32>
    %174 = vector.extract_strided_slice %2 {offsets = [0, 2, 0], sizes = [2, 1, 256], strides = [1, 1, 1]} : vector<2x4x256xf32> to vector<2x1x256xf32>
    %175 = vector.shape_cast %173 : vector<32x1xf32> to vector<1x32x1xf32>
    %176 = vector.broadcast %175 : vector<1x32x1xf32> to vector<2x32x256xf32>
    %177 = vector.broadcast %174 : vector<2x1x256xf32> to vector<2x32x256xf32>
    %178 = arith.mulf %176, %177 : vector<2x32x256xf32>
    %179 = arith.addf %171, %178 : vector<2x32x256xf32>
    %c19 = arith.constant 19 : index
    %c0_59 = arith.constant 0 : index
    %c0_60 = arith.constant 0 : index
    %180 = vector.load %arg2[%c19, %c0_59, %c0_60] : memref<36x32x1xf32, #tpu.memory_space<vmem>>, vector<1x32x1xf32>
    %181 = vector.shape_cast %180 : vector<1x32x1xf32> to vector<32x1xf32>
    %182 = vector.extract_strided_slice %2 {offsets = [0, 3, 0], sizes = [2, 1, 256], strides = [1, 1, 1]} : vector<2x4x256xf32> to vector<2x1x256xf32>
    %183 = vector.shape_cast %181 : vector<32x1xf32> to vector<1x32x1xf32>
    %184 = vector.broadcast %183 : vector<1x32x1xf32> to vector<2x32x256xf32>
    %185 = vector.broadcast %182 : vector<2x1x256xf32> to vector<2x32x256xf32>
    %186 = arith.mulf %184, %185 : vector<2x32x256xf32>
    %187 = arith.addf %179, %186 : vector<2x32x256xf32>
    %c255_i32 = arith.constant 255 : i32
    %188 = tpu.dynamic_rotate %2 by %c255_i32 dim 2 : vector<2x4x256xf32>, i32 -> vector<2x4x256xf32>
    %c5_61 = arith.constant 5 : index
    %c0_62 = arith.constant 0 : index
    %c0_63 = arith.constant 0 : index
    %189 = vector.load %arg3[%c5_61, %c0_62, %c0_63] : memref<9x1x256xf32, #tpu.memory_space<vmem>>, vector<1x1x256xf32>
    %190 = vector.shape_cast %189 : vector<1x1x256xf32> to vector<1x256xf32>
    %191 = vector.shape_cast %190 : vector<1x256xf32> to vector<1x1x256xf32>
    %192 = vector.broadcast %191 : vector<1x1x256xf32> to vector<2x4x256xf32>
    %193 = arith.mulf %188, %192 : vector<2x4x256xf32>
    %c20 = arith.constant 20 : index
    %c0_64 = arith.constant 0 : index
    %c0_65 = arith.constant 0 : index
    %194 = vector.load %arg2[%c20, %c0_64, %c0_65] : memref<36x32x1xf32, #tpu.memory_space<vmem>>, vector<1x32x1xf32>
    %195 = vector.shape_cast %194 : vector<1x32x1xf32> to vector<32x1xf32>
    %196 = vector.extract_strided_slice %193 {offsets = [0, 0, 0], sizes = [2, 1, 256], strides = [1, 1, 1]} : vector<2x4x256xf32> to vector<2x1x256xf32>
    %197 = vector.shape_cast %195 : vector<32x1xf32> to vector<1x32x1xf32>
    %198 = vector.broadcast %197 : vector<1x32x1xf32> to vector<2x32x256xf32>
    %199 = vector.broadcast %196 : vector<2x1x256xf32> to vector<2x32x256xf32>
    %200 = arith.mulf %198, %199 : vector<2x32x256xf32>
    %201 = arith.addf %187, %200 : vector<2x32x256xf32>
    %c21 = arith.constant 21 : index
    %c0_66 = arith.constant 0 : index
    %c0_67 = arith.constant 0 : index
    %202 = vector.load %arg2[%c21, %c0_66, %c0_67] : memref<36x32x1xf32, #tpu.memory_space<vmem>>, vector<1x32x1xf32>
    %203 = vector.shape_cast %202 : vector<1x32x1xf32> to vector<32x1xf32>
    %204 = vector.extract_strided_slice %193 {offsets = [0, 1, 0], sizes = [2, 1, 256], strides = [1, 1, 1]} : vector<2x4x256xf32> to vector<2x1x256xf32>
    %205 = vector.shape_cast %203 : vector<32x1xf32> to vector<1x32x1xf32>
    %206 = vector.broadcast %205 : vector<1x32x1xf32> to vector<2x32x256xf32>
    %207 = vector.broadcast %204 : vector<2x1x256xf32> to vector<2x32x256xf32>
    %208 = arith.mulf %206, %207 : vector<2x32x256xf32>
    %209 = arith.addf %201, %208 : vector<2x32x256xf32>
    %c22 = arith.constant 22 : index
    %c0_68 = arith.constant 0 : index
    %c0_69 = arith.constant 0 : index
    %210 = vector.load %arg2[%c22, %c0_68, %c0_69] : memref<36x32x1xf32, #tpu.memory_space<vmem>>, vector<1x32x1xf32>
    %211 = vector.shape_cast %210 : vector<1x32x1xf32> to vector<32x1xf32>
    %212 = vector.extract_strided_slice %193 {offsets = [0, 2, 0], sizes = [2, 1, 256], strides = [1, 1, 1]} : vector<2x4x256xf32> to vector<2x1x256xf32>
    %213 = vector.shape_cast %211 : vector<32x1xf32> to vector<1x32x1xf32>
    %214 = vector.broadcast %213 : vector<1x32x1xf32> to vector<2x32x256xf32>
    %215 = vector.broadcast %212 : vector<2x1x256xf32> to vector<2x32x256xf32>
    %216 = arith.mulf %214, %215 : vector<2x32x256xf32>
    %217 = arith.addf %209, %216 : vector<2x32x256xf32>
    %c23 = arith.constant 23 : index
    %c0_70 = arith.constant 0 : index
    %c0_71 = arith.constant 0 : index
    %218 = vector.load %arg2[%c23, %c0_70, %c0_71] : memref<36x32x1xf32, #tpu.memory_space<vmem>>, vector<1x32x1xf32>
    %219 = vector.shape_cast %218 : vector<1x32x1xf32> to vector<32x1xf32>
    %220 = vector.extract_strided_slice %193 {offsets = [0, 3, 0], sizes = [2, 1, 256], strides = [1, 1, 1]} : vector<2x4x256xf32> to vector<2x1x256xf32>
    %221 = vector.shape_cast %219 : vector<32x1xf32> to vector<1x32x1xf32>
    %222 = vector.broadcast %221 : vector<1x32x1xf32> to vector<2x32x256xf32>
    %223 = vector.broadcast %220 : vector<2x1x256xf32> to vector<2x32x256xf32>
    %224 = arith.mulf %222, %223 : vector<2x32x256xf32>
    %225 = arith.addf %217, %224 : vector<2x32x256xf32>
    %c241_i32 = arith.constant 241 : i32
    %226 = tpu.dynamic_rotate %2 by %c241_i32 dim 2 : vector<2x4x256xf32>, i32 -> vector<2x4x256xf32>
    %c6_72 = arith.constant 6 : index
    %c0_73 = arith.constant 0 : index
    %c0_74 = arith.constant 0 : index
    %227 = vector.load %arg3[%c6_72, %c0_73, %c0_74] : memref<9x1x256xf32, #tpu.memory_space<vmem>>, vector<1x1x256xf32>
    %228 = vector.shape_cast %227 : vector<1x1x256xf32> to vector<1x256xf32>
    %229 = vector.shape_cast %228 : vector<1x256xf32> to vector<1x1x256xf32>
    %230 = vector.broadcast %229 : vector<1x1x256xf32> to vector<2x4x256xf32>
    %231 = arith.mulf %226, %230 : vector<2x4x256xf32>
    %c24 = arith.constant 24 : index
    %c0_75 = arith.constant 0 : index
    %c0_76 = arith.constant 0 : index
    %232 = vector.load %arg2[%c24, %c0_75, %c0_76] : memref<36x32x1xf32, #tpu.memory_space<vmem>>, vector<1x32x1xf32>
    %233 = vector.shape_cast %232 : vector<1x32x1xf32> to vector<32x1xf32>
    %234 = vector.extract_strided_slice %231 {offsets = [0, 0, 0], sizes = [2, 1, 256], strides = [1, 1, 1]} : vector<2x4x256xf32> to vector<2x1x256xf32>
    %235 = vector.shape_cast %233 : vector<32x1xf32> to vector<1x32x1xf32>
    %236 = vector.broadcast %235 : vector<1x32x1xf32> to vector<2x32x256xf32>
    %237 = vector.broadcast %234 : vector<2x1x256xf32> to vector<2x32x256xf32>
    %238 = arith.mulf %236, %237 : vector<2x32x256xf32>
    %239 = arith.addf %225, %238 : vector<2x32x256xf32>
    %c25 = arith.constant 25 : index
    %c0_77 = arith.constant 0 : index
    %c0_78 = arith.constant 0 : index
    %240 = vector.load %arg2[%c25, %c0_77, %c0_78] : memref<36x32x1xf32, #tpu.memory_space<vmem>>, vector<1x32x1xf32>
    %241 = vector.shape_cast %240 : vector<1x32x1xf32> to vector<32x1xf32>
    %242 = vector.extract_strided_slice %231 {offsets = [0, 1, 0], sizes = [2, 1, 256], strides = [1, 1, 1]} : vector<2x4x256xf32> to vector<2x1x256xf32>
    %243 = vector.shape_cast %241 : vector<32x1xf32> to vector<1x32x1xf32>
    %244 = vector.broadcast %243 : vector<1x32x1xf32> to vector<2x32x256xf32>
    %245 = vector.broadcast %242 : vector<2x1x256xf32> to vector<2x32x256xf32>
    %246 = arith.mulf %244, %245 : vector<2x32x256xf32>
    %247 = arith.addf %239, %246 : vector<2x32x256xf32>
    %c26 = arith.constant 26 : index
    %c0_79 = arith.constant 0 : index
    %c0_80 = arith.constant 0 : index
    %248 = vector.load %arg2[%c26, %c0_79, %c0_80] : memref<36x32x1xf32, #tpu.memory_space<vmem>>, vector<1x32x1xf32>
    %249 = vector.shape_cast %248 : vector<1x32x1xf32> to vector<32x1xf32>
    %250 = vector.extract_strided_slice %231 {offsets = [0, 2, 0], sizes = [2, 1, 256], strides = [1, 1, 1]} : vector<2x4x256xf32> to vector<2x1x256xf32>
    %251 = vector.shape_cast %249 : vector<32x1xf32> to vector<1x32x1xf32>
    %252 = vector.broadcast %251 : vector<1x32x1xf32> to vector<2x32x256xf32>
    %253 = vector.broadcast %250 : vector<2x1x256xf32> to vector<2x32x256xf32>
    %254 = arith.mulf %252, %253 : vector<2x32x256xf32>
    %255 = arith.addf %247, %254 : vector<2x32x256xf32>
    %c27 = arith.constant 27 : index
    %c0_81 = arith.constant 0 : index
    %c0_82 = arith.constant 0 : index
    %256 = vector.load %arg2[%c27, %c0_81, %c0_82] : memref<36x32x1xf32, #tpu.memory_space<vmem>>, vector<1x32x1xf32>
    %257 = vector.shape_cast %256 : vector<1x32x1xf32> to vector<32x1xf32>
    %258 = vector.extract_strided_slice %231 {offsets = [0, 3, 0], sizes = [2, 1, 256], strides = [1, 1, 1]} : vector<2x4x256xf32> to vector<2x1x256xf32>
    %259 = vector.shape_cast %257 : vector<32x1xf32> to vector<1x32x1xf32>
    %260 = vector.broadcast %259 : vector<1x32x1xf32> to vector<2x32x256xf32>
    %261 = vector.broadcast %258 : vector<2x1x256xf32> to vector<2x32x256xf32>
    %262 = arith.mulf %260, %261 : vector<2x32x256xf32>
    %263 = arith.addf %255, %262 : vector<2x32x256xf32>
    %c240_i32 = arith.constant 240 : i32
    %264 = tpu.dynamic_rotate %2 by %c240_i32 dim 2 : vector<2x4x256xf32>, i32 -> vector<2x4x256xf32>
    %c7_83 = arith.constant 7 : index
    %c0_84 = arith.constant 0 : index
    %c0_85 = arith.constant 0 : index
    %265 = vector.load %arg3[%c7_83, %c0_84, %c0_85] : memref<9x1x256xf32, #tpu.memory_space<vmem>>, vector<1x1x256xf32>
    %266 = vector.shape_cast %265 : vector<1x1x256xf32> to vector<1x256xf32>
    %267 = vector.shape_cast %266 : vector<1x256xf32> to vector<1x1x256xf32>
    %268 = vector.broadcast %267 : vector<1x1x256xf32> to vector<2x4x256xf32>
    %269 = arith.mulf %264, %268 : vector<2x4x256xf32>
    %c28 = arith.constant 28 : index
    %c0_86 = arith.constant 0 : index
    %c0_87 = arith.constant 0 : index
    %270 = vector.load %arg2[%c28, %c0_86, %c0_87] : memref<36x32x1xf32, #tpu.memory_space<vmem>>, vector<1x32x1xf32>
    %271 = vector.shape_cast %270 : vector<1x32x1xf32> to vector<32x1xf32>
    %272 = vector.extract_strided_slice %269 {offsets = [0, 0, 0], sizes = [2, 1, 256], strides = [1, 1, 1]} : vector<2x4x256xf32> to vector<2x1x256xf32>
    %273 = vector.shape_cast %271 : vector<32x1xf32> to vector<1x32x1xf32>
    %274 = vector.broadcast %273 : vector<1x32x1xf32> to vector<2x32x256xf32>
    %275 = vector.broadcast %272 : vector<2x1x256xf32> to vector<2x32x256xf32>
    %276 = arith.mulf %274, %275 : vector<2x32x256xf32>
    %277 = arith.addf %263, %276 : vector<2x32x256xf32>
    %c29 = arith.constant 29 : index
    %c0_88 = arith.constant 0 : index
    %c0_89 = arith.constant 0 : index
    %278 = vector.load %arg2[%c29, %c0_88, %c0_89] : memref<36x32x1xf32, #tpu.memory_space<vmem>>, vector<1x32x1xf32>
    %279 = vector.shape_cast %278 : vector<1x32x1xf32> to vector<32x1xf32>
    %280 = vector.extract_strided_slice %269 {offsets = [0, 1, 0], sizes = [2, 1, 256], strides = [1, 1, 1]} : vector<2x4x256xf32> to vector<2x1x256xf32>
    %281 = vector.shape_cast %279 : vector<32x1xf32> to vector<1x32x1xf32>
    %282 = vector.broadcast %281 : vector<1x32x1xf32> to vector<2x32x256xf32>
    %283 = vector.broadcast %280 : vector<2x1x256xf32> to vector<2x32x256xf32>
    %284 = arith.mulf %282, %283 : vector<2x32x256xf32>
    %285 = arith.addf %277, %284 : vector<2x32x256xf32>
    %c30 = arith.constant 30 : index
    %c0_90 = arith.constant 0 : index
    %c0_91 = arith.constant 0 : index
    %286 = vector.load %arg2[%c30, %c0_90, %c0_91] : memref<36x32x1xf32, #tpu.memory_space<vmem>>, vector<1x32x1xf32>
    %287 = vector.shape_cast %286 : vector<1x32x1xf32> to vector<32x1xf32>
    %288 = vector.extract_strided_slice %269 {offsets = [0, 2, 0], sizes = [2, 1, 256], strides = [1, 1, 1]} : vector<2x4x256xf32> to vector<2x1x256xf32>
    %289 = vector.shape_cast %287 : vector<32x1xf32> to vector<1x32x1xf32>
    %290 = vector.broadcast %289 : vector<1x32x1xf32> to vector<2x32x256xf32>
    %291 = vector.broadcast %288 : vector<2x1x256xf32> to vector<2x32x256xf32>
    %292 = arith.mulf %290, %291 : vector<2x32x256xf32>
    %293 = arith.addf %285, %292 : vector<2x32x256xf32>
    %c31 = arith.constant 31 : index
    %c0_92 = arith.constant 0 : index
    %c0_93 = arith.constant 0 : index
    %294 = vector.load %arg2[%c31, %c0_92, %c0_93] : memref<36x32x1xf32, #tpu.memory_space<vmem>>, vector<1x32x1xf32>
    %295 = vector.shape_cast %294 : vector<1x32x1xf32> to vector<32x1xf32>
    %296 = vector.extract_strided_slice %269 {offsets = [0, 3, 0], sizes = [2, 1, 256], strides = [1, 1, 1]} : vector<2x4x256xf32> to vector<2x1x256xf32>
    %297 = vector.shape_cast %295 : vector<32x1xf32> to vector<1x32x1xf32>
    %298 = vector.broadcast %297 : vector<1x32x1xf32> to vector<2x32x256xf32>
    %299 = vector.broadcast %296 : vector<2x1x256xf32> to vector<2x32x256xf32>
    %300 = arith.mulf %298, %299 : vector<2x32x256xf32>
    %301 = arith.addf %293, %300 : vector<2x32x256xf32>
    %c239_i32 = arith.constant 239 : i32
    %302 = tpu.dynamic_rotate %2 by %c239_i32 dim 2 : vector<2x4x256xf32>, i32 -> vector<2x4x256xf32>
    %c8_94 = arith.constant 8 : index
    %c0_95 = arith.constant 0 : index
    %c0_96 = arith.constant 0 : index
    %303 = vector.load %arg3[%c8_94, %c0_95, %c0_96] : memref<9x1x256xf32, #tpu.memory_space<vmem>>, vector<1x1x256xf32>
    %304 = vector.shape_cast %303 : vector<1x1x256xf32> to vector<1x256xf32>
    %305 = vector.shape_cast %304 : vector<1x256xf32> to vector<1x1x256xf32>
    %306 = vector.broadcast %305 : vector<1x1x256xf32> to vector<2x4x256xf32>
    %307 = arith.mulf %302, %306 : vector<2x4x256xf32>
    %c32 = arith.constant 32 : index
    %c0_97 = arith.constant 0 : index
    %c0_98 = arith.constant 0 : index
    %308 = vector.load %arg2[%c32, %c0_97, %c0_98] : memref<36x32x1xf32, #tpu.memory_space<vmem>>, vector<1x32x1xf32>
    %309 = vector.shape_cast %308 : vector<1x32x1xf32> to vector<32x1xf32>
    %310 = vector.extract_strided_slice %307 {offsets = [0, 0, 0], sizes = [2, 1, 256], strides = [1, 1, 1]} : vector<2x4x256xf32> to vector<2x1x256xf32>
    %311 = vector.shape_cast %309 : vector<32x1xf32> to vector<1x32x1xf32>
    %312 = vector.broadcast %311 : vector<1x32x1xf32> to vector<2x32x256xf32>
    %313 = vector.broadcast %310 : vector<2x1x256xf32> to vector<2x32x256xf32>
    %314 = arith.mulf %312, %313 : vector<2x32x256xf32>
    %315 = arith.addf %301, %314 : vector<2x32x256xf32>
    %c33 = arith.constant 33 : index
    %c0_99 = arith.constant 0 : index
    %c0_100 = arith.constant 0 : index
    %316 = vector.load %arg2[%c33, %c0_99, %c0_100] : memref<36x32x1xf32, #tpu.memory_space<vmem>>, vector<1x32x1xf32>
    %317 = vector.shape_cast %316 : vector<1x32x1xf32> to vector<32x1xf32>
    %318 = vector.extract_strided_slice %307 {offsets = [0, 1, 0], sizes = [2, 1, 256], strides = [1, 1, 1]} : vector<2x4x256xf32> to vector<2x1x256xf32>
    %319 = vector.shape_cast %317 : vector<32x1xf32> to vector<1x32x1xf32>
    %320 = vector.broadcast %319 : vector<1x32x1xf32> to vector<2x32x256xf32>
    %321 = vector.broadcast %318 : vector<2x1x256xf32> to vector<2x32x256xf32>
    %322 = arith.mulf %320, %321 : vector<2x32x256xf32>
    %323 = arith.addf %315, %322 : vector<2x32x256xf32>
    %c34 = arith.constant 34 : index
    %c0_101 = arith.constant 0 : index
    %c0_102 = arith.constant 0 : index
    %324 = vector.load %arg2[%c34, %c0_101, %c0_102] : memref<36x32x1xf32, #tpu.memory_space<vmem>>, vector<1x32x1xf32>
    %325 = vector.shape_cast %324 : vector<1x32x1xf32> to vector<32x1xf32>
    %326 = vector.extract_strided_slice %307 {offsets = [0, 2, 0], sizes = [2, 1, 256], strides = [1, 1, 1]} : vector<2x4x256xf32> to vector<2x1x256xf32>
    %327 = vector.shape_cast %325 : vector<32x1xf32> to vector<1x32x1xf32>
    %328 = vector.broadcast %327 : vector<1x32x1xf32> to vector<2x32x256xf32>
    %329 = vector.broadcast %326 : vector<2x1x256xf32> to vector<2x32x256xf32>
    %330 = arith.mulf %328, %329 : vector<2x32x256xf32>
    %331 = arith.addf %323, %330 : vector<2x32x256xf32>
    %c35 = arith.constant 35 : index
    %c0_103 = arith.constant 0 : index
    %c0_104 = arith.constant 0 : index
    %332 = vector.load %arg2[%c35, %c0_103, %c0_104] : memref<36x32x1xf32, #tpu.memory_space<vmem>>, vector<1x32x1xf32>
    %333 = vector.shape_cast %332 : vector<1x32x1xf32> to vector<32x1xf32>
    %334 = vector.extract_strided_slice %307 {offsets = [0, 3, 0], sizes = [2, 1, 256], strides = [1, 1, 1]} : vector<2x4x256xf32> to vector<2x1x256xf32>
    %335 = vector.shape_cast %333 : vector<32x1xf32> to vector<1x32x1xf32>
    %336 = vector.broadcast %335 : vector<1x32x1xf32> to vector<2x32x256xf32>
    %337 = vector.broadcast %334 : vector<2x1x256xf32> to vector<2x32x256xf32>
    %338 = arith.mulf %336, %337 : vector<2x32x256xf32>
    %339 = arith.addf %331, %338 : vector<2x32x256xf32>
    %c0_105 = arith.constant 0 : index
    %c0_106 = arith.constant 0 : index
    %340 = vector.load %arg4[%c0_105, %c0_106] : memref<32x1xf32, #tpu.memory_space<vmem>>, vector<32x1xf32>
    %341 = vector.shape_cast %340 : vector<32x1xf32> to vector<1x32x1xf32>
    %342 = vector.broadcast %341 : vector<1x32x1xf32> to vector<2x32x256xf32>
    %343 = arith.addf %339, %342 : vector<2x32x256xf32>
    %c0_107 = arith.constant 0 : index
    %c4_108 = arith.constant 4 : index
    %c0_109 = arith.constant 0 : index
    %344 = vector.load %arg5[%c0_107, %c4_108, %c0_109] : memref<2x36x256xf32, #tpu.memory_space<vmem>>, vector<2x32x256xf32>
    tpu.vector_store %arg5[%c0_107, %c4_108, %c0_109], %343 {strides = array<i32>} : memref<2x36x256xf32, #tpu.memory_space<vmem>>, vector<2x32x256xf32>,
    return
  }
  func.func @transform_0(%arg0: i32) -> (i32, i32, i32) {
    %c0_i32 = arith.constant 0 : i32
    %c0_i32_0 = arith.constant 0 : i32
    %c0_i32_1 = arith.constant 0 : i32
    return %arg0, %c0_i32, %c0_i32_0 : i32, i32, i32
  }
  func.func @transform_1(%arg0: i32) -> (i32, i32, i32) {
    %c0_i32 = arith.constant 0 : i32
    %c0_i32_0 = arith.constant 0 : i32
    %c0_i32_1 = arith.constant 0 : i32
    %c0_i32_2 = arith.constant 0 : i32
    return %c0_i32, %c0_i32_0, %c0_i32_1 : i32, i32, i32
  }
  func.func @transform_2(%arg0: i32) -> (i32, i32, i32) {
    %c0_i32 = arith.constant 0 : i32
    %c0_i32_0 = arith.constant 0 : i32
    %c0_i32_1 = arith.constant 0 : i32
    %c0_i32_2 = arith.constant 0 : i32
    return %c0_i32, %c0_i32_0, %c0_i32_1 : i32, i32, i32
  }
  func.func @transform_3(%arg0: i32) -> (i32, i32) {
    %c0_i32 = arith.constant 0 : i32
    %c0_i32_0 = arith.constant 0 : i32
    %c0_i32_1 = arith.constant 0 : i32
    return %c0_i32, %c0_i32_0 : i32, i32
  }
  func.func @transform_4(%arg0: i32) -> (i32, i32, i32) {
    %c0_i32 = arith.constant 0 : i32
    %c0_i32_0 = arith.constant 0 : i32
    %c0_i32_1 = arith.constant 0 : i32
    return %arg0, %c0_i32, %c0_i32_0 : i32, i32, i32
  }
}

</mosaic_0001>

<llo_original>
// kernel: sobel_conv2d.1
$region0: #{sobel_conv2d.1}
  #allocation0 [shape = 'u32[]', space=smem, size = 0x4, offset = 0x4, fixed_abs, tag = 'smem constant byte address 0x4 - core index']
  #allocation1 [shape = 'u32[144,128]{1,0:T(1,128)}', space=vmem, size = 0x12000, scoped, tag = 'internal scratch']
  %s0 = inlined_call_operand.vmem [shape: f32[2,4,256], index: 0, kind: input, shape index: {}]
  %s1 = inlined_call_operand.vmem [shape: f32[36,32,1], index: 1, kind: input, shape index: {}]
  %s2 = inlined_call_operand.vmem [shape: f32[9,1,256], index: 2, kind: input, shape index: {}]
  %s3 = inlined_call_operand.vmem [shape: f32[32,1], index: 3, kind: input, shape index: {}]
  %s4 = inlined_call_operand.vmem [shape: f32[2,36,256], index: 4, kind: output, shape index: {}]
  %s5 = sld [smem:[#allocation0]]
  $region26: #{sobel_conv2d.1} parent=0
    _
  %s7 = ssub.s32 1, %s5
  %s8 = scalar_select 0, %s7, %s5
  // Predicated region
  $region2: #{sobel_conv2d.1} parent=0 // pred_check
    _
  $region3: #{sobel_conv2d.1} parent=0 // pred_check_branch
    %10 = sbr.rel (0) target = $region5
  $region4: #{sobel_conv2d.1} parent=0 // pred_region
    _
  $region5: #{sobel_conv2d.1} parent=0 // pred_fallthru
    _
  // Predicated region
  $region6: #{sobel_conv2d.1} parent=0 // pred_check
    _
  $region7: #{sobel_conv2d.1} parent=0 // pred_check_branch
    %12 = sbr.rel (0) target = $region9
  $region8: #{sobel_conv2d.1} parent=0 // pred_region
    _
  $region9: #{sobel_conv2d.1} parent=0 // pred_fallthru
    _
  // Predicated region
  $region10: #{sobel_conv2d.1} parent=0 // pred_check
    _
  $region11: #{sobel_conv2d.1} parent=0 // pred_check_branch
    %14 = sbr.rel (0) target = $region13
  $region12: #{sobel_conv2d.1} parent=0 // pred_region
    _
  $region13: #{sobel_conv2d.1} parent=0 // pred_fallthru
    _
  // Predicated region
  $region14: #{sobel_conv2d.1} parent=0 // pred_check
    _
  $region15: #{sobel_conv2d.1} parent=0 // pred_check_branch
    %16 = sbr.rel (0) target = $region17
  $region16: #{sobel_conv2d.1} parent=0 // pred_region
    _
  $region17: #{sobel_conv2d.1} parent=0 // pred_fallthru
    _
  %v17 = vld [vmem:[%s0] sm:$0xff]
  %v18 = vld [vmem:[%s0 + $0x8] sm:$0xff]
  %v21 = vcombine.high %v17, %v17
  %v22 = vcombine.high %v18, %v18
  %25 = vst [vmem:[%s4] sm:$0xf] %v17
  %26 = vst [vmem:[%s4 + $0x8] sm:$0xf] %v21
  %27 = vst [vmem:[%s4 + $0x50] sm:$0xf] %v18
  %28 = vst [vmem:[%s4 + $0x58] sm:$0xf] %v22
  %v29 = vld [vmem:[%s0] sm:$0xff]
  %v30 = vld [vmem:[%s0 + $0x8] sm:$0xff]
  %v33 = vcombine.high %v29, %v29
  %v34 = vcombine.high %v30, %v30
  %37 = vrot.lane.b32.xlu0 %v29, 17
  %v38 = vpop.permute.xlu0 %37
  %39 = vrot.lane.b32.xlu0 %v30, 17
  %v40 = vpop.permute.xlu0 %39
  %41 = vrot.lane.b32.xlu0 %v33, 17
  %v42 = vpop.permute.xlu0 %41
  %43 = vrot.lane.b32.xlu0 %v34, 17
  %v44 = vpop.permute.xlu0 %43
  %v45 = vlaneseq
  %v46 = vand.u32 %v45, 127
  %vm47 = vcmp.lt.s32.totalorder %v46, 17
  %v48 = vsel %vm47, %v38, %v42
  %v49 = vsel %vm47, %v40, %v44
  %v50 = vsel %vm47, %v42, %v38
  %v51 = vsel %vm47, %v44, %v40
  %v52 = vld [vmem:[%s2] sm:$0x3]
  %v54 = vlaneseq
  %v55 = vshrl.u32 %v54, 7
  %v56 = vsub.s32 0, %v55
  %v57 = vrot.slane %v52, %v56
  %v58 = vlaneseq
  %v59 = vshrl.u32 %v58, 7
  %v60 = vsub.s32 1, %v59
  %v61 = vrot.slane %v52, %v60
  %v64 = vmul.f32 %v50, %v57
  %v65 = vmul.f32 %v48, %v61
  %v66 = vmul.f32 %v51, %v57
  %v67 = vmul.f32 %v49, %v61
  %v68 = vld [vmem:[%s1] sm:$0xff]
  %v69 = vld [vmem:[%s1 + $0x8] sm:$0xff]
  %v70 = vld [vmem:[%s1 + $0x10] sm:$0xff]
  %v71 = vld [vmem:[%s1 + $0x18] sm:$0xff]
  %73 = vset.pattern.permute.xlu0 0
  %74 = vperm.xlu0 %73, %v68
  %v75 = vpop.permute.xlu0 %74
  %78 = vset.pattern.permute.xlu0 0
  %79 = vperm.xlu0 %78, %v69
  %v80 = vpop.permute.xlu0 %79
  %83 = vset.pattern.permute.xlu0 0
  %84 = vperm.xlu0 %83, %v70
  %v85 = vpop.permute.xlu0 %84
  %88 = vset.pattern.permute.xlu0 0
  %89 = vperm.xlu0 %88, %v71
  %v90 = vpop.permute.xlu0 %89
  %v92 = vlaneseq
  %v93 = vshrl.u32 %v92, 7
  %v94 = vsub.s32 0, %v93
  %v95 = vrot.slane %v64, %v94
  %v96 = vlaneseq
  %v97 = vshrl.u32 %v96, 7
  %v98 = vsub.s32 0, %v97
  %v99 = vrot.slane %v65, %v98
  %v100 = vlaneseq
  %v101 = vshrl.u32 %v100, 7
  %v102 = vsub.s32 0, %v101
  %v103 = vrot.slane %v66, %v102
  %v104 = vlaneseq
  %v105 = vshrl.u32 %v104, 7
  %v106 = vsub.s32 0, %v105
  %v107 = vrot.slane %v67, %v106
  %v108 = vmul.f32 %v75, %v95
  %v109 = vmul.f32 %v75, %v99
  %v110 = vmul.f32 %v80, %v95
  %v111 = vmul.f32 %v80, %v99
  %v112 = vmul.f32 %v85, %v95
  %v113 = vmul.f32 %v85, %v99
  %v114 = vmul.f32 %v90, %v95
  %v115 = vmul.f32 %v90, %v99
  %v116 = vmul.f32 %v75, %v103
  %v117 = vmul.f32 %v75, %v107
  %v118 = vmul.f32 %v80, %v103
  %v119 = vmul.f32 %v80, %v107
  %v120 = vmul.f32 %v85, %v103
  %v121 = vmul.f32 %v85, %v107
  %v122 = vmul.f32 %v90, %v103
  %v123 = vmul.f32 %v90, %v107
  %v124 = vadd.f32 %v108, 0.0
  %v125 = vadd.f32 %v109, 0.0
  %v126 = vadd.f32 %v110, 0.0
  %v127 = vadd.f32 %v111, 0.0
  %v128 = vadd.f32 %v112, 0.0
  %v129 = vadd.f32 %v113, 0.0
  %v130 = vadd.f32 %v114, 0.0
  %v131 = vadd.f32 %v115, 0.0
  %v132 = vadd.f32 %v116, 0.0
  %v133 = vadd.f32 %v117, 0.0
  %v134 = vadd.f32 %v118, 0.0
  %v135 = vadd.f32 %v119, 0.0
  %v136 = vadd.f32 %v120, 0.0
  %v137 = vadd.f32 %v121, 0.0
  %v138 = vadd.f32 %v122, 0.0
  %v139 = vadd.f32 %v123, 0.0
  %s140 = scalar_lea.vmem %s1, 32
  %v141 = vld [vmem:[%s140] sm:$0xff]
  %v142 = vld [vmem:[%s140 + $0x8] sm:$0xff]
  %v143 = vld [vmem:[%s140 + $0x10] sm:$0xff]
  %v144 = vld [vmem:[%s140 + $0x18] sm:$0xff]
  %146 = vset.pattern.permute.xlu0 0
  %147 = vperm.xlu0 %146, %v141
  %v148 = vpop.permute.xlu0 %147
  %151 = vset.pattern.permute.xlu0 0
  %152 = vperm.xlu0 %151, %v142
  %v153 = vpop.permute.xlu0 %152
  %156 = vset.pattern.permute.xlu0 0
  %157 = vperm.xlu0 %156, %v143
  %v158 = vpop.permute.xlu0 %157
  %161 = vset.pattern.permute.xlu0 0
  %162 = vperm.xlu0 %161, %v144
  %v163 = vpop.permute.xlu0 %162
  %v165 = vlaneseq
  %v166 = vshrl.u32 %v165, 7
  %v167 = vsub.s32 1, %v166
  %v168 = vrot.slane %v64, %v167
  %v169 = vlaneseq
  %v170 = vshrl.u32 %v169, 7
  %v171 = vsub.s32 1, %v170
  %v172 = vrot.slane %v65, %v171
  %v173 = vlaneseq
  %v174 = vshrl.u32 %v173, 7
  %v175 = vsub.s32 1, %v174
  %v176 = vrot.slane %v66, %v175
  %v177 = vlaneseq
  %v178 = vshrl.u32 %v177, 7
  %v179 = vsub.s32 1, %v178
  %v180 = vrot.slane %v67, %v179
  %v181 = vmul.f32 %v148, %v168
  %v182 = vmul.f32 %v148, %v172
  %v183 = vmul.f32 %v153, %v168
  %v184 = vmul.f32 %v153, %v172
  %v185 = vmul.f32 %v158, %v168
  %v186 = vmul.f32 %v158, %v172
  %v187 = vmul.f32 %v163, %v168
  %v188 = vmul.f32 %v163, %v172
  %v189 = vmul.f32 %v148, %v176
  %v190 = vmul.f32 %v148, %v180
  %v191 = vmul.f32 %v153, %v176
  %v192 = vmul.f32 %v153, %v180
  %v193 = vmul.f32 %v158, %v176
  %v194 = vmul.f32 %v158, %v180
  %v195 = vmul.f32 %v163, %v176
  %v196 = vmul.f32 %v163, %v180
  %v197 = vadd.f32 %v124, %v181
  %v198 = vadd.f32 %v125, %v182
  %v199 = vadd.f32 %v126, %v183
  %v200 = vadd.f32 %v127, %v184
  %v201 = vadd.f32 %v128, %v185
  %v202 = vadd.f32 %v129, %v186
  %v203 = vadd.f32 %v130, %v187
  %v204 = vadd.f32 %v131, %v188
  %v205 = vadd.f32 %v132, %v189
  %v206 = vadd.f32 %v133, %v190
  %v207 = vadd.f32 %v134, %v191
  %v208 = vadd.f32 %v135, %v192
  %v209 = vadd.f32 %v136, %v193
  %v210 = vadd.f32 %v137, %v194
  %v211 = vadd.f32 %v138, %v195
  %v212 = vadd.f32 %v139, %v196
  %s213 = scalar_lea.vmem %s1, 64
  %v214 = vld [vmem:[%s213] sm:$0xff]
  %v215 = vld [vmem:[%s213 + $0x8] sm:$0xff]
  %v216 = vld [vmem:[%s213 + $0x10] sm:$0xff]
  %v217 = vld [vmem:[%s213 + $0x18] sm:$0xff]
  %219 = vset.pattern.permute.xlu0 0
  %220 = vperm.xlu0 %219, %v214
  %v221 = vpop.permute.xlu0 %220
  %224 = vset.pattern.permute.xlu0 0
  %225 = vperm.xlu0 %224, %v215
  %v226 = vpop.permute.xlu0 %225
  %229 = vset.pattern.permute.xlu0 0
  %230 = vperm.xlu0 %229, %v216
  %v231 = vpop.permute.xlu0 %230
  %234 = vset.pattern.permute.xlu0 0
  %235 = vperm.xlu0 %234, %v217
  %v236 = vpop.permute.xlu0 %235
  %v238 = vlaneseq
  %v239 = vshrl.u32 %v238, 7
  %v240 = vsub.s32 2, %v239
  %v241 = vrot.slane %v64, %v240
  %v242 = vlaneseq
  %v243 = vshrl.u32 %v242, 7
  %v244 = vsub.s32 2, %v243
  %v245 = vrot.slane %v65, %v244
  %v246 = vlaneseq
  %v247 = vshrl.u32 %v246, 7
  %v248 = vsub.s32 2, %v247
  %v249 = vrot.slane %v66, %v248
  %v250 = vlaneseq
  %v251 = vshrl.u32 %v250, 7
  %v252 = vsub.s32 2, %v251
  %v253 = vrot.slane %v67, %v252
  %v254 = vmul.f32 %v221, %v241
  %v255 = vmul.f32 %v221, %v245
  %v256 = vmul.f32 %v226, %v241
  %v257 = vmul.f32 %v226, %v245
  %v258 = vmul.f32 %v231, %v241
  %v259 = vmul.f32 %v231, %v245
  %v260 = vmul.f32 %v236, %v241
  %v261 = vmul.f32 %v236, %v245
  %v262 = vmul.f32 %v221, %v249
  %v263 = vmul.f32 %v221, %v253
  %v264 = vmul.f32 %v226, %v249
  %v265 = vmul.f32 %v226, %v253
  %v266 = vmul.f32 %v231, %v249
  %v267 = vmul.f32 %v231, %v253
  %v268 = vmul.f32 %v236, %v249
  %v269 = vmul.f32 %v236, %v253
  %v270 = vadd.f32 %v197, %v254
  %v271 = vadd.f32 %v198, %v255
  %v272 = vadd.f32 %v199, %v256
  %v273 = vadd.f32 %v200, %v257
  %v274 = vadd.f32 %v201, %v258
  %v275 = vadd.f32 %v202, %v259
  %v276 = vadd.f32 %v203, %v260
  %v277 = vadd.f32 %v204, %v261
  %v278 = vadd.f32 %v205, %v262
  %v279 = vadd.f32 %v206, %v263
  %v280 = vadd.f32 %v207, %v264
  %v281 = vadd.f32 %v208, %v265
  %v282 = vadd.f32 %v209, %v266
  %v283 = vadd.f32 %v210, %v267
  %v284 = vadd.f32 %v211, %v268
  %v285 = vadd.f32 %v212, %v269
  %s286 = scalar_lea.vmem %s1, 96
  %v287 = vld [vmem:[%s286] sm:$0xff]
  %v288 = vld [vmem:[%s286 + $0x8] sm:$0xff]
  %v289 = vld [vmem:[%s286 + $0x10] sm:$0xff]
  %v290 = vld [vmem:[%s286 + $0x18] sm:$0xff]
  %292 = vset.pattern.permute.xlu0 0
  %293 = vperm.xlu0 %292, %v287
  %v294 = vpop.permute.xlu0 %293
  %297 = vset.pattern.permute.xlu0 0
  %298 = vperm.xlu0 %297, %v288
  %v299 = vpop.permute.xlu0 %298
  %302 = vset.pattern.permute.xlu0 0
  %303 = vperm.xlu0 %302, %v289
  %v304 = vpop.permute.xlu0 %303
  %307 = vset.pattern.permute.xlu0 0
  %308 = vperm.xlu0 %307, %v290
  %v309 = vpop.permute.xlu0 %308
  %v311 = vlaneseq
  %v312 = vshrl.u32 %v311, 7
  %v313 = vsub.s32 3, %v312
  %v314 = vrot.slane %v64, %v313
  %v315 = vlaneseq
  %v316 = vshrl.u32 %v315, 7
  %v317 = vsub.s32 3, %v316
  %v318 = vrot.slane %v65, %v317
  %v319 = vlaneseq
  %v320 = vshrl.u32 %v319, 7
  %v321 = vsub.s32 3, %v320
  %v322 = vrot.slane %v66, %v321
  %v323 = vlaneseq
  %v324 = vshrl.u32 %v323, 7
  %v325 = vsub.s32 3, %v324
  %v326 = vrot.slane %v67, %v325
  %v327 = vmul.f32 %v294, %v314
  %v328 = vmul.f32 %v294, %v318
  %v329 = vmul.f32 %v299, %v314
  %v330 = vmul.f32 %v299, %v318
  %v331 = vmul.f32 %v304, %v314
  %v332 = vmul.f32 %v304, %v318
  %v333 = vmul.f32 %v309, %v314
  %v334 = vmul.f32 %v309, %v318
  %v335 = vmul.f32 %v294, %v322
  %v336 = vmul.f32 %v294, %v326
  %v337 = vmul.f32 %v299, %v322
  %v338 = vmul.f32 %v299, %v326
  %v339 = vmul.f32 %v304, %v322
  %v340 = vmul.f32 %v304, %v326
  %v341 = vmul.f32 %v309, %v322
  %v342 = vmul.f32 %v309, %v326
  %v343 = vadd.f32 %v270, %v327
  %v344 = vadd.f32 %v271, %v328
  %v345 = vadd.f32 %v272, %v329
  %v346 = vadd.f32 %v273, %v330
  %v347 = vadd.f32 %v274, %v331
  %v348 = vadd.f32 %v275, %v332
  %v349 = vadd.f32 %v276, %v333
  %v350 = vadd.f32 %v277, %v334
  %v351 = vadd.f32 %v278, %v335
  %v352 = vadd.f32 %v279, %v336
  %v353 = vadd.f32 %v280, %v337
  %v354 = vadd.f32 %v281, %v338
  %v355 = vadd.f32 %v282, %v339
  %v356 = vadd.f32 %v283, %v340
  %v357 = vadd.f32 %v284, %v341
  %v358 = vadd.f32 %v285, %v342
  %359 = vrot.lane.b32.xlu0 %v29, 16
  %v360 = vpop.permute.xlu0 %359
  %361 = vrot.lane.b32.xlu0 %v30, 16
  %v362 = vpop.permute.xlu0 %361
  %363 = vrot.lane.b32.xlu0 %v33, 16
  %v364 = vpop.permute.xlu0 %363
  %365 = vrot.lane.b32.xlu0 %v34, 16
  %v366 = vpop.permute.xlu0 %365
  %vm367 = vcmp.lt.s32.totalorder %v46, 16
  %v368 = vsel %vm367, %v360, %v364
  %v369 = vsel %vm367, %v362, %v366
  %v370 = vsel %vm367, %v364, %v360
  %v371 = vsel %vm367, %v366, %v362
  %s372 = scalar_lea.vmem %s2, 2
  %v373 = vld [vmem:[%s372] sm:$0x3]
  %v375 = vlaneseq
  %v376 = vshrl.u32 %v375, 7
  %v377 = vsub.s32 0, %v376
  %v378 = vrot.slane %v373, %v377
  %v379 = vlaneseq
  %v380 = vshrl.u32 %v379, 7
  %v381 = vsub.s32 1, %v380
  %v382 = vrot.slane %v373, %v381
  %v385 = vmul.f32 %v370, %v378
  %v386 = vmul.f32 %v368, %v382
  %v387 = vmul.f32 %v371, %v378
  %v388 = vmul.f32 %v369, %v382
  %s389 = scalar_lea.vmem %s1, 128
  %v390 = vld [vmem:[%s389] sm:$0xff]
  %v391 = vld [vmem:[%s389 + $0x8] sm:$0xff]
  %v392 = vld [vmem:[%s389 + $0x10] sm:$0xff]
  %v393 = vld [vmem:[%s389 + $0x18] sm:$0xff]
  %395 = vset.pattern.permute.xlu0 0
  %396 = vperm.xlu0 %395, %v390
  %v397 = vpop.permute.xlu0 %396
  %400 = vset.pattern.permute.xlu0 0
  %401 = vperm.xlu0 %400, %v391
  %v402 = vpop.permute.xlu0 %401
  %405 = vset.pattern.permute.xlu0 0
  %406 = vperm.xlu0 %405, %v392
  %v407 = vpop.permute.xlu0 %406
  %410 = vset.pattern.permute.xlu0 0
  %411 = vperm.xlu0 %410, %v393
  %v412 = vpop.permute.xlu0 %411
  %v414 = vlaneseq
  %v415 = vshrl.u32 %v414, 7
  %v416 = vsub.s32 0, %v415
  %v417 = vrot.slane %v385, %v416
  %v418 = vlaneseq
  %v419 = vshrl.u32 %v418, 7
  %v420 = vsub.s32 0, %v419
  %v421 = vrot.slane %v386, %v420
  %v422 = vlaneseq
  %v423 = vshrl.u32 %v422, 7
  %v424 = vsub.s32 0, %v423
  %v425 = vrot.slane %v387, %v424
  %v426 = vlaneseq
  %v427 = vshrl.u32 %v426, 7
  %v428 = vsub.s32 0, %v427
  %v429 = vrot.slane %v388, %v428
  %v430 = vmul.f32 %v397, %v417
  %v431 = vmul.f32 %v397, %v421
  %v432 = vmul.f32 %v402, %v417
  %v433 = vmul.f32 %v402, %v421
  %v434 = vmul.f32 %v407, %v417
  %v435 = vmul.f32 %v407, %v421
  %v436 = vmul.f32 %v412, %v417
  %v437 = vmul.f32 %v412, %v421
  %v438 = vmul.f32 %v397, %v425
  %v439 = vmul.f32 %v397, %v429
  %v440 = vmul.f32 %v402, %v425
  %v441 = vmul.f32 %v402, %v429
  %v442 = vmul.f32 %v407, %v425
  %v443 = vmul.f32 %v407, %v429
  %v444 = vmul.f32 %v412, %v425
  %v445 = vmul.f32 %v412, %v429
  %v446 = vadd.f32 %v343, %v430
  %v447 = vadd.f32 %v344, %v431
  %v448 = vadd.f32 %v345, %v432
  %v449 = vadd.f32 %v346, %v433
  %v450 = vadd.f32 %v347, %v434
  %v451 = vadd.f32 %v348, %v435
  %v452 = vadd.f32 %v349, %v436
  %v453 = vadd.f32 %v350, %v437
  %v454 = vadd.f32 %v351, %v438
  %v455 = vadd.f32 %v352, %v439
  %v456 = vadd.f32 %v353, %v440
  %v457 = vadd.f32 %v354, %v441
  %v458 = vadd.f32 %v355, %v442
  %v459 = vadd.f32 %v356, %v443
  %v460 = vadd.f32 %v357, %v444
  %v461 = vadd.f32 %v358, %v445
  %s462 = scalar_lea.vmem %s1, 160
  %v463 = vld [vmem:[%s462] sm:$0xff]
  %v464 = vld [vmem:[%s462 + $0x8] sm:$0xff]
  %v465 = vld [vmem:[%s462 + $0x10] sm:$0xff]
  %v466 = vld [vmem:[%s462 + $0x18] sm:$0xff]
  %468 = vset.pattern.permute.xlu0 0
  %469 = vperm.xlu0 %468, %v463
  %v470 = vpop.permute.xlu0 %469
  %473 = vset.pattern.permute.xlu0 0
  %474 = vperm.xlu0 %473, %v464
  %v475 = vpop.permute.xlu0 %474
  %478 = vset.pattern.permute.xlu0 0
  %479 = vperm.xlu0 %478, %v465
  %v480 = vpop.permute.xlu0 %479
  %483 = vset.pattern.permute.xlu0 0
  %484 = vperm.xlu0 %483, %v466
  %v485 = vpop.permute.xlu0 %484
  %v487 = vlaneseq
  %v488 = vshrl.u32 %v487, 7
  %v489 = vsub.s32 1, %v488
  %v490 = vrot.slane %v385, %v489
  %v491 = vlaneseq
  %v492 = vshrl.u32 %v491, 7
  %v493 = vsub.s32 1, %v492
  %v494 = vrot.slane %v386, %v493
  %v495 = vlaneseq
  %v496 = vshrl.u32 %v495, 7
  %v497 = vsub.s32 1, %v496
  %v498 = vrot.slane %v387, %v497
  %v499 = vlaneseq
  %v500 = vshrl.u32 %v499, 7
  %v501 = vsub.s32 1, %v500
  %v502 = vrot.slane %v388, %v501
  %v503 = vmul.f32 %v470, %v490
  %v504 = vmul.f32 %v470, %v494
  %v505 = vmul.f32 %v475, %v490
  %v506 = vmul.f32 %v475, %v494
  %v507 = vmul.f32 %v480, %v490
  %v508 = vmul.f32 %v480, %v494
  %v509 = vmul.f32 %v485, %v490
  %v510 = vmul.f32 %v485, %v494
  %v511 = vmul.f32 %v470, %v498
  %v512 = vmul.f32 %v470, %v502
  %v513 = vmul.f32 %v475, %v498
  %v514 = vmul.f32 %v475, %v502
  %v515 = vmul.f32 %v480, %v498
  %v516 = vmul.f32 %v480, %v502
  %v517 = vmul.f32 %v485, %v498
  %v518 = vmul.f32 %v485, %v502
  %v519 = vadd.f32 %v446, %v503
  %v520 = vadd.f32 %v447, %v504
  %v521 = vadd.f32 %v448, %v505
  %v522 = vadd.f32 %v449, %v506
  %v523 = vadd.f32 %v450, %v507
  %v524 = vadd.f32 %v451, %v508
  %v525 = vadd.f32 %v452, %v509
  %v526 = vadd.f32 %v453, %v510
  %v527 = vadd.f32 %v454, %v511
  %v528 = vadd.f32 %v455, %v512
  %v529 = vadd.f32 %v456, %v513
  %v530 = vadd.f32 %v457, %v514
  %v531 = vadd.f32 %v458, %v515
  %v532 = vadd.f32 %v459, %v516
  %v533 = vadd.f32 %v460, %v517
  %v534 = vadd.f32 %v461, %v518
  %s535 = scalar_lea.vmem %s1, 192
  %v536 = vld [vmem:[%s535] sm:$0xff]
  %v537 = vld [vmem:[%s535 + $0x8] sm:$0xff]
  %v538 = vld [vmem:[%s535 + $0x10] sm:$0xff]
  %v539 = vld [vmem:[%s535 + $0x18] sm:$0xff]
  %541 = vset.pattern.permute.xlu0 0
  %542 = vperm.xlu0 %541, %v536
  %v543 = vpop.permute.xlu0 %542
  %546 = vset.pattern.permute.xlu0 0
  %547 = vperm.xlu0 %546, %v537
  %v548 = vpop.permute.xlu0 %547
  %551 = vset.pattern.permute.xlu0 0
  %552 = vperm.xlu0 %551, %v538
  %v553 = vpop.permute.xlu0 %552
  %556 = vset.pattern.permute.xlu0 0
  %557 = vperm.xlu0 %556, %v539
  %v558 = vpop.permute.xlu0 %557
  %v560 = vlaneseq
  %v561 = vshrl.u32 %v560, 7
  %v562 = vsub.s32 2, %v561
  %v563 = vrot.slane %v385, %v562
  %v564 = vlaneseq
  %v565 = vshrl.u32 %v564, 7
  %v566 = vsub.s32 2, %v565
  %v567 = vrot.slane %v386, %v566
  %v568 = vlaneseq
  %v569 = vshrl.u32 %v568, 7
  %v570 = vsub.s32 2, %v569
  %v571 = vrot.slane %v387, %v570
  %v572 = vlaneseq
  %v573 = vshrl.u32 %v572, 7
  %v574 = vsub.s32 2, %v573
  %v575 = vrot.slane %v388, %v574
  %v576 = vmul.f32 %v543, %v563
  %v577 = vmul.f32 %v543, %v567
  %v578 = vmul.f32 %v548, %v563
  %v579 = vmul.f32 %v548, %v567
  %v580 = vmul.f32 %v553, %v563
  %v581 = vmul.f32 %v553, %v567
  %v582 = vmul.f32 %v558, %v563
  %v583 = vmul.f32 %v558, %v567
  %v584 = vmul.f32 %v543, %v571
  %v585 = vmul.f32 %v543, %v575
  %v586 = vmul.f32 %v548, %v571
  %v587 = vmul.f32 %v548, %v575
  %v588 = vmul.f32 %v553, %v571
  %v589 = vmul.f32 %v553, %v575
  %v590 = vmul.f32 %v558, %v571
  %v591 = vmul.f32 %v558, %v575
  %v592 = vadd.f32 %v519, %v576
  %v593 = vadd.f32 %v520, %v577
  %v594 = vadd.f32 %v521, %v578
  %v595 = vadd.f32 %v522, %v579
  %v596 = vadd.f32 %v523, %v580
  %v597 = vadd.f32 %v524, %v581
  %v598 = vadd.f32 %v525, %v582
  %v599 = vadd.f32 %v526, %v583
  %v600 = vadd.f32 %v527, %v584
  %v601 = vadd.f32 %v528, %v585
  %v602 = vadd.f32 %v529, %v586
  %v603 = vadd.f32 %v530, %v587
  %v604 = vadd.f32 %v531, %v588
  %v605 = vadd.f32 %v532, %v589
  %v606 = vadd.f32 %v533, %v590
  %v607 = vadd.f32 %v534, %v591
  %s608 = scalar_lea.vmem %s1, 224
  %v609 = vld [vmem:[%s608] sm:$0xff]
  %v610 = vld [vmem:[%s608 + $0x8] sm:$0xff]
  %v611 = vld [vmem:[%s608 + $0x10] sm:$0xff]
  %v612 = vld [vmem:[%s608 + $0x18] sm:$0xff]
  %614 = vset.pattern.permute.xlu0 0
  %615 = vperm.xlu0 %614, %v609
  %v616 = vpop.permute.xlu0 %615
  %619 = vset.pattern.permute.xlu0 0
  %620 = vperm.xlu0 %619, %v610
  %v621 = vpop.permute.xlu0 %620
  %624 = vset.pattern.permute.xlu0 0
  %625 = vperm.xlu0 %624, %v611
  %v626 = vpop.permute.xlu0 %625
  %629 = vset.pattern.permute.xlu0 0
  %630 = vperm.xlu0 %629, %v612
  %v631 = vpop.permute.xlu0 %630
  %v633 = vlaneseq
  %v634 = vshrl.u32 %v633, 7
  %v635 = vsub.s32 3, %v634
  %v636 = vrot.slane %v385, %v635
  %v637 = vlaneseq
  %v638 = vshrl.u32 %v637, 7
  %v639 = vsub.s32 3, %v638
  %v640 = vrot.slane %v386, %v639
  %v641 = vlaneseq
  %v642 = vshrl.u32 %v641, 7
  %v643 = vsub.s32 3, %v642
  %v644 = vrot.slane %v387, %v643
  %v645 = vlaneseq
  %v646 = vshrl.u32 %v645, 7
  %v647 = vsub.s32 3, %v646
  %v648 = vrot.slane %v388, %v647
  %v649 = vmul.f32 %v616, %v636
  %v650 = vmul.f32 %v616, %v640
  %v651 = vmul.f32 %v621, %v636
  %v652 = vmul.f32 %v621, %v640
  %v653 = vmul.f32 %v626, %v636
  %v654 = vmul.f32 %v626, %v640
  %v655 = vmul.f32 %v631, %v636
  %v656 = vmul.f32 %v631, %v640
  %v657 = vmul.f32 %v616, %v644
  %v658 = vmul.f32 %v616, %v648
  %v659 = vmul.f32 %v621, %v644
  %v660 = vmul.f32 %v621, %v648
  %v661 = vmul.f32 %v626, %v644
  %v662 = vmul.f32 %v626, %v648
  %v663 = vmul.f32 %v631, %v644
  %v664 = vmul.f32 %v631, %v648
  %v665 = vadd.f32 %v592, %v649
  %v666 = vadd.f32 %v593, %v650
  %v667 = vadd.f32 %v594, %v651
  %v668 = vadd.f32 %v595, %v652
  %v669 = vadd.f32 %v596, %v653
  %v670 = vadd.f32 %v597, %v654
  %v671 = vadd.f32 %v598, %v655
  %v672 = vadd.f32 %v599, %v656
  %v673 = vadd.f32 %v600, %v657
  %v674 = vadd.f32 %v601, %v658
  %v675 = vadd.f32 %v602, %v659
  %v676 = vadd.f32 %v603, %v660
  %v677 = vadd.f32 %v604, %v661
  %v678 = vadd.f32 %v605, %v662
  %v679 = vadd.f32 %v606, %v663
  %v680 = vadd.f32 %v607, %v664
  %681 = vrot.lane.b32.xlu0 %v29, 15
  %v682 = vpop.permute.xlu0 %681
  %683 = vrot.lane.b32.xlu0 %v30, 15
  %v684 = vpop.permute.xlu0 %683
  %685 = vrot.lane.b32.xlu0 %v33, 15
  %v686 = vpop.permute.xlu0 %685
  %687 = vrot.lane.b32.xlu0 %v34, 15
  %v688 = vpop.permute.xlu0 %687
  %vm689 = vcmp.lt.s32.totalorder %v46, 15
  %v690 = vsel %vm689, %v682, %v686
  %v691 = vsel %vm689, %v684, %v688
  %v692 = vsel %vm689, %v686, %v682
  %v693 = vsel %vm689, %v688, %v684
  %s694 = scalar_lea.vmem %s2, 4
  %v695 = vld [vmem:[%s694] sm:$0x3]
  %v697 = vlaneseq
  %v698 = vshrl.u32 %v697, 7
  %v699 = vsub.s32 0, %v698
  %v700 = vrot.slane %v695, %v699
  %v701 = vlaneseq
  %v702 = vshrl.u32 %v701, 7
  %v703 = vsub.s32 1, %v702
  %v704 = vrot.slane %v695, %v703
  %v707 = vmul.f32 %v692, %v700
  %v708 = vmul.f32 %v690, %v704
  %v709 = vmul.f32 %v693, %v700
  %v710 = vmul.f32 %v691, %v704
  %s711 = scalar_lea.vmem %s1, 256
  %v712 = vld [vmem:[%s711] sm:$0xff]
  %v713 = vld [vmem:[%s711 + $0x8] sm:$0xff]
  %v714 = vld [vmem:[%s711 + $0x10] sm:$0xff]
  %v715 = vld [vmem:[%s711 + $0x18] sm:$0xff]
  %717 = vset.pattern.permute.xlu0 0
  %718 = vperm.xlu0 %717, %v712
  %v719 = vpop.permute.xlu0 %718
  %722 = vset.pattern.permute.xlu0 0
  %723 = vperm.xlu0 %722, %v713
  %v724 = vpop.permute.xlu0 %723
  %727 = vset.pattern.permute.xlu0 0
  %728 = vperm.xlu0 %727, %v714
  %v729 = vpop.permute.xlu0 %728
  %732 = vset.pattern.permute.xlu0 0
  %733 = vperm.xlu0 %732, %v715
  %v734 = vpop.permute.xlu0 %733
  %v736 = vlaneseq
  %v737 = vshrl.u32 %v736, 7
  %v738 = vsub.s32 0, %v737
  %v739 = vrot.slane %v707, %v738
  %v740 = vlaneseq
  %v741 = vshrl.u32 %v740, 7
  %v742 = vsub.s32 0, %v741
  %v743 = vrot.slane %v708, %v742
  %v744 = vlaneseq
  %v745 = vshrl.u32 %v744, 7
  %v746 = vsub.s32 0, %v745
  %v747 = vrot.slane %v709, %v746
  %v748 = vlaneseq
  %v749 = vshrl.u32 %v748, 7
  %v750 = vsub.s32 0, %v749
  %v751 = vrot.slane %v710, %v750
  %v752 = vmul.f32 %v719, %v739
  %v753 = vmul.f32 %v719, %v743
  %v754 = vmul.f32 %v724, %v739
  %v755 = vmul.f32 %v724, %v743
  %v756 = vmul.f32 %v729, %v739
  %v757 = vmul.f32 %v729, %v743
  %v758 = vmul.f32 %v734, %v739
  %v759 = vmul.f32 %v734, %v743
  %v760 = vmul.f32 %v719, %v747
  %v761 = vmul.f32 %v719, %v751
  %v762 = vmul.f32 %v724, %v747
  %v763 = vmul.f32 %v724, %v751
  %v764 = vmul.f32 %v729, %v747
  %v765 = vmul.f32 %v729, %v751
  %v766 = vmul.f32 %v734, %v747
  %v767 = vmul.f32 %v734, %v751
  %v768 = vadd.f32 %v665, %v752
  %v769 = vadd.f32 %v666, %v753
  %v770 = vadd.f32 %v667, %v754
  %v771 = vadd.f32 %v668, %v755
  %v772 = vadd.f32 %v669, %v756
  %v773 = vadd.f32 %v670, %v757
  %v774 = vadd.f32 %v671, %v758
  %v775 = vadd.f32 %v672, %v759
  %v776 = vadd.f32 %v673, %v760
  %v777 = vadd.f32 %v674, %v761
  %v778 = vadd.f32 %v675, %v762
  %v779 = vadd.f32 %v676, %v763
  %v780 = vadd.f32 %v677, %v764
  %v781 = vadd.f32 %v678, %v765
  %v782 = vadd.f32 %v679, %v766
  %v783 = vadd.f32 %v680, %v767
  %s784 = scalar_lea.vmem %s1, 288
  %v785 = vld [vmem:[%s784] sm:$0xff]
  %v786 = vld [vmem:[%s784 + $0x8] sm:$0xff]
  %v787 = vld [vmem:[%s784 + $0x10] sm:$0xff]
  %v788 = vld [vmem:[%s784 + $0x18] sm:$0xff]
  %790 = vset.pattern.permute.xlu0 0
  %791 = vperm.xlu0 %790, %v785
  %v792 = vpop.permute.xlu0 %791
  %795 = vset.pattern.permute.xlu0 0
  %796 = vperm.xlu0 %795, %v786
  %v797 = vpop.permute.xlu0 %796
  %800 = vset.pattern.permute.xlu0 0
  %801 = vperm.xlu0 %800, %v787
  %v802 = vpop.permute.xlu0 %801
  %805 = vset.pattern.permute.xlu0 0
  %806 = vperm.xlu0 %805, %v788
  %v807 = vpop.permute.xlu0 %806
  %v809 = vlaneseq
  %v810 = vshrl.u32 %v809, 7
  %v811 = vsub.s32 1, %v810
  %v812 = vrot.slane %v707, %v811
  %v813 = vlaneseq
  %v814 = vshrl.u32 %v813, 7
  %v815 = vsub.s32 1, %v814
  %v816 = vrot.slane %v708, %v815
  %v817 = vlaneseq
  %v818 = vshrl.u32 %v817, 7
  %v819 = vsub.s32 1, %v818
  %v820 = vrot.slane %v709, %v819
  %v821 = vlaneseq
  %v822 = vshrl.u32 %v821, 7
  %v823 = vsub.s32 1, %v822
  %v824 = vrot.slane %v710, %v823
  %v825 = vmul.f32 %v792, %v812
  %v826 = vmul.f32 %v792, %v816
  %v827 = vmul.f32 %v797, %v812
  %v828 = vmul.f32 %v797, %v816
  %v829 = vmul.f32 %v802, %v812
  %v830 = vmul.f32 %v802, %v816
  %v831 = vmul.f32 %v807, %v812
  %v832 = vmul.f32 %v807, %v816
  %v833 = vmul.f32 %v792, %v820
  %v834 = vmul.f32 %v792, %v824
  %v835 = vmul.f32 %v797, %v820
  %v836 = vmul.f32 %v797, %v824
  %v837 = vmul.f32 %v802, %v820
  %v838 = vmul.f32 %v802, %v824
  %v839 = vmul.f32 %v807, %v820
  %v840 = vmul.f32 %v807, %v824
  %v841 = vadd.f32 %v768, %v825
  %v842 = vadd.f32 %v769, %v826
  %v843 = vadd.f32 %v770, %v827
  %v844 = vadd.f32 %v771, %v828
  %v845 = vadd.f32 %v772, %v829
  %v846 = vadd.f32 %v773, %v830
  %v847 = vadd.f32 %v774, %v831
  %v848 = vadd.f32 %v775, %v832
  %v849 = vadd.f32 %v776, %v833
  %v850 = vadd.f32 %v777, %v834
  %v851 = vadd.f32 %v778, %v835
  %v852 = vadd.f32 %v779, %v836
  %v853 = vadd.f32 %v780, %v837
  %v854 = vadd.f32 %v781, %v838
  %v855 = vadd.f32 %v782, %v839
  %v856 = vadd.f32 %v783, %v840
  %s857 = scalar_lea.vmem %s1, 320
  %v858 = vld [vmem:[%s857] sm:$0xff]
  %v859 = vld [vmem:[%s857 + $0x8] sm:$0xff]
  %v860 = vld [vmem:[%s857 + $0x10] sm:$0xff]
  %v861 = vld [vmem:[%s857 + $0x18] sm:$0xff]
  %863 = vset.pattern.permute.xlu0 0
  %864 = vperm.xlu0 %863, %v858
  %v865 = vpop.permute.xlu0 %864
  %868 = vset.pattern.permute.xlu0 0
  %869 = vperm.xlu0 %868, %v859
  %v870 = vpop.permute.xlu0 %869
  %873 = vset.pattern.permute.xlu0 0
  %874 = vperm.xlu0 %873, %v860
  %v875 = vpop.permute.xlu0 %874
  %878 = vset.pattern.permute.xlu0 0
  %879 = vperm.xlu0 %878, %v861
  %v880 = vpop.permute.xlu0 %879
  %v882 = vlaneseq
  %v883 = vshrl.u32 %v882, 7
  %v884 = vsub.s32 2, %v883
  %v885 = vrot.slane %v707, %v884
  %v886 = vlaneseq
  %v887 = vshrl.u32 %v886, 7
  %v888 = vsub.s32 2, %v887
  %v889 = vrot.slane %v708, %v888
  %v890 = vlaneseq
  %v891 = vshrl.u32 %v890, 7
  %v892 = vsub.s32 2, %v891
  %v893 = vrot.slane %v709, %v892
  %v894 = vlaneseq
  %v895 = vshrl.u32 %v894, 7
  %v896 = vsub.s32 2, %v895
  %v897 = vrot.slane %v710, %v896
  %v898 = vmul.f32 %v865, %v885
  %v899 = vmul.f32 %v865, %v889
  %v900 = vmul.f32 %v870, %v885
  %v901 = vmul.f32 %v870, %v889
  %v902 = vmul.f32 %v875, %v885
  %v903 = vmul.f32 %v875, %v889
  %v904 = vmul.f32 %v880, %v885
  %v905 = vmul.f32 %v880, %v889
  %v906 = vmul.f32 %v865, %v893
  %v907 = vmul.f32 %v865, %v897
  %v908 = vmul.f32 %v870, %v893
  %v909 = vmul.f32 %v870, %v897
  %v910 = vmul.f32 %v875, %v893
  %v911 = vmul.f32 %v875, %v897
  %v912 = vmul.f32 %v880, %v893
  %v913 = vmul.f32 %v880, %v897
  %v914 = vadd.f32 %v841, %v898
  %v915 = vadd.f32 %v842, %v899
  %v916 = vadd.f32 %v843, %v900
  %v917 = vadd.f32 %v844, %v901
  %v918 = vadd.f32 %v845, %v902
  %v919 = vadd.f32 %v846, %v903
  %v920 = vadd.f32 %v847, %v904
  %v921 = vadd.f32 %v848, %v905
  %v922 = vadd.f32 %v849, %v906
  %v923 = vadd.f32 %v850, %v907
  %v924 = vadd.f32 %v851, %v908
  %v925 = vadd.f32 %v852, %v909
  %v926 = vadd.f32 %v853, %v910
  %v927 = vadd.f32 %v854, %v911
  %v928 = vadd.f32 %v855, %v912
  %v929 = vadd.f32 %v856, %v913
  %s930 = scalar_lea.vmem %s1, 352
  %v931 = vld [vmem:[%s930] sm:$0xff]
  %v932 = vld [vmem:[%s930 + $0x8] sm:$0xff]
  %v933 = vld [vmem:[%s930 + $0x10] sm:$0xff]
  %v934 = vld [vmem:[%s930 + $0x18] sm:$0xff]
  %936 = vset.pattern.permute.xlu0 0
  %937 = vperm.xlu0 %936, %v931
  %v938 = vpop.permute.xlu0 %937
  %941 = vset.pattern.permute.xlu0 0
  %942 = vperm.xlu0 %941, %v932
  %v943 = vpop.permute.xlu0 %942
  %946 = vset.pattern.permute.xlu0 0
  %947 = vperm.xlu0 %946, %v933
  %v948 = vpop.permute.xlu0 %947
  %951 = vset.pattern.permute.xlu0 0
  %952 = vperm.xlu0 %951, %v934
  %v953 = vpop.permute.xlu0 %952
  %v955 = vlaneseq
  %v956 = vshrl.u32 %v955, 7
  %v957 = vsub.s32 3, %v956
  %v958 = vrot.slane %v707, %v957
  %v959 = vlaneseq
  %v960 = vshrl.u32 %v959, 7
  %v961 = vsub.s32 3, %v960
  %v962 = vrot.slane %v708, %v961
  %v963 = vlaneseq
  %v964 = vshrl.u32 %v963, 7
  %v965 = vsub.s32 3, %v964
  %v966 = vrot.slane %v709, %v965
  %v967 = vlaneseq
  %v968 = vshrl.u32 %v967, 7
  %v969 = vsub.s32 3, %v968
  %v970 = vrot.slane %v710, %v969
  %v971 = vmul.f32 %v938, %v958
  %v972 = vmul.f32 %v938, %v962
  %v973 = vmul.f32 %v943, %v958
  %v974 = vmul.f32 %v943, %v962
  %v975 = vmul.f32 %v948, %v958
  %v976 = vmul.f32 %v948, %v962
  %v977 = vmul.f32 %v953, %v958
  %v978 = vmul.f32 %v953, %v962
  %v979 = vmul.f32 %v938, %v966
  %v980 = vmul.f32 %v938, %v970
  %v981 = vmul.f32 %v943, %v966
  %v982 = vmul.f32 %v943, %v970
  %v983 = vmul.f32 %v948, %v966
  %v984 = vmul.f32 %v948, %v970
  %v985 = vmul.f32 %v953, %v966
  %v986 = vmul.f32 %v953, %v970
  %v987 = vadd.f32 %v914, %v971
  %v988 = vadd.f32 %v915, %v972
  %v989 = vadd.f32 %v916, %v973
  %v990 = vadd.f32 %v917, %v974
  %v991 = vadd.f32 %v918, %v975
  %v992 = vadd.f32 %v919, %v976
  %v993 = vadd.f32 %v920, %v977
  %v994 = vadd.f32 %v921, %v978
  %v995 = vadd.f32 %v922, %v979
  %v996 = vadd.f32 %v923, %v980
  %v997 = vadd.f32 %v924, %v981
  %v998 = vadd.f32 %v925, %v982
  %v999 = vadd.f32 %v926, %v983
  %v1000 = vadd.f32 %v927, %v984
  %v1001 = vadd.f32 %v928, %v985
  %v1002 = vadd.f32 %v929, %v986
  %1003 = vrot.lane.b32.xlu0 %v29, 1
  %v1004 = vpop.permute.xlu0 %1003
  %1005 = vrot.lane.b32.xlu0 %v30, 1
  %v1006 = vpop.permute.xlu0 %1005
  %1007 = vrot.lane.b32.xlu0 %v33, 1
  %v1008 = vpop.permute.xlu0 %1007
  %1009 = vrot.lane.b32.xlu0 %v34, 1
  %v1010 = vpop.permute.xlu0 %1009
  %vm1011 = vcmp.lt.s32.totalorder %v46, 1
  %v1012 = vsel %vm1011, %v1004, %v1008
  %v1013 = vsel %vm1011, %v1006, %v1010
  %v1014 = vsel %vm1011, %v1008, %v1004
  %v1015 = vsel %vm1011, %v1010, %v1006
  %s1016 = scalar_lea.vmem %s2, 6
  %v1017 = vld [vmem:[%s1016] sm:$0x3]
  %v1019 = vlaneseq
  %v1020 = vshrl.u32 %v1019, 7
  %v1021 = vsub.s32 0, %v1020
  %v1022 = vrot.slane %v1017, %v1021
  %v1023 = vlaneseq
  %v1024 = vshrl.u32 %v1023, 7
  %v1025 = vsub.s32 1, %v1024
  %v1026 = vrot.slane %v1017, %v1025
  %v1029 = vmul.f32 %v1014, %v1022
  %v1030 = vmul.f32 %v1012, %v1026
  %v1031 = vmul.f32 %v1015, %v1022
  %v1032 = vmul.f32 %v1013, %v1026
  %s1033 = scalar_lea.vmem %s1, 384
  %v1034 = vld [vmem:[%s1033] sm:$0xff]
  %v1035 = vld [vmem:[%s1033 + $0x8] sm:$0xff]
  %v1036 = vld [vmem:[%s1033 + $0x10] sm:$0xff]
  %v1037 = vld [vmem:[%s1033 + $0x18] sm:$0xff]
  %1039 = vset.pattern.permute.xlu0 0
  %1040 = vperm.xlu0 %1039, %v1034
  %v1041 = vpop.permute.xlu0 %1040
  %1044 = vset.pattern.permute.xlu0 0
  %1045 = vperm.xlu0 %1044, %v1035
  %v1046 = vpop.permute.xlu0 %1045
  %1049 = vset.pattern.permute.xlu0 0
  %1050 = vperm.xlu0 %1049, %v1036
  %v1051 = vpop.permute.xlu0 %1050
  %1054 = vset.pattern.permute.xlu0 0
  %1055 = vperm.xlu0 %1054, %v1037
  %v1056 = vpop.permute.xlu0 %1055
  %v1058 = vlaneseq
  %v1059 = vshrl.u32 %v1058, 7
  %v1060 = vsub.s32 0, %v1059
  %v1061 = vrot.slane %v1029, %v1060
  %v1062 = vlaneseq
  %v1063 = vshrl.u32 %v1062, 7
  %v1064 = vsub.s32 0, %v1063
  %v1065 = vrot.slane %v1030, %v1064
  %v1066 = vlaneseq
  %v1067 = vshrl.u32 %v1066, 7
  %v1068 = vsub.s32 0, %v1067
  %v1069 = vrot.slane %v1031, %v1068
  %v1070 = vlaneseq
  %v1071 = vshrl.u32 %v1070, 7
  %v1072 = vsub.s32 0, %v1071
  %v1073 = vrot.slane %v1032, %v1072
  %v1074 = vmul.f32 %v1041, %v1061
  %v1075 = vmul.f32 %v1041, %v1065
  %v1076 = vmul.f32 %v1046, %v1061
  %v1077 = vmul.f32 %v1046, %v1065
  %v1078 = vmul.f32 %v1051, %v1061
  %v1079 = vmul.f32 %v1051, %v1065
  %v1080 = vmul.f32 %v1056, %v1061
  %v1081 = vmul.f32 %v1056, %v1065
  %v1082 = vmul.f32 %v1041, %v1069
  %v1083 = vmul.f32 %v1041, %v1073
  %v1084 = vmul.f32 %v1046, %v1069
  %v1085 = vmul.f32 %v1046, %v1073
  %v1086 = vmul.f32 %v1051, %v1069
  %v1087 = vmul.f32 %v1051, %v1073
  %v1088 = vmul.f32 %v1056, %v1069
  %v1089 = vmul.f32 %v1056, %v1073
  %v1090 = vadd.f32 %v987, %v1074
  %v1091 = vadd.f32 %v988, %v1075
  %v1092 = vadd.f32 %v989, %v1076
  %v1093 = vadd.f32 %v990, %v1077
  %v1094 = vadd.f32 %v991, %v1078
  %v1095 = vadd.f32 %v992, %v1079
  %v1096 = vadd.f32 %v993, %v1080
  %v1097 = vadd.f32 %v994, %v1081
  %v1098 = vadd.f32 %v995, %v1082
  %v1099 = vadd.f32 %v996, %v1083
  %v1100 = vadd.f32 %v997, %v1084
  %v1101 = vadd.f32 %v998, %v1085
  %v1102 = vadd.f32 %v999, %v1086
  %v1103 = vadd.f32 %v1000, %v1087
  %v1104 = vadd.f32 %v1001, %v1088
  %v1105 = vadd.f32 %v1002, %v1089
  %s1106 = scalar_lea.vmem %s1, 416
  %v1107 = vld [vmem:[%s1106] sm:$0xff]
  %v1108 = vld [vmem:[%s1106 + $0x8] sm:$0xff]
  %v1109 = vld [vmem:[%s1106 + $0x10] sm:$0xff]
  %v1110 = vld [vmem:[%s1106 + $0x18] sm:$0xff]
  %1112 = vset.pattern.permute.xlu0 0
  %1113 = vperm.xlu0 %1112, %v1107
  %v1114 = vpop.permute.xlu0 %1113
  %1117 = vset.pattern.permute.xlu0 0
  %1118 = vperm.xlu0 %1117, %v1108
  %v1119 = vpop.permute.xlu0 %1118
  %1122 = vset.pattern.permute.xlu0 0
  %1123 = vperm.xlu0 %1122, %v1109
  %v1124 = vpop.permute.xlu0 %1123
  %1127 = vset.pattern.permute.xlu0 0
  %1128 = vperm.xlu0 %1127, %v1110
  %v1129 = vpop.permute.xlu0 %1128
  %v1131 = vlaneseq
  %v1132 = vshrl.u32 %v1131, 7
  %v1133 = vsub.s32 1, %v1132
  %v1134 = vrot.slane %v1029, %v1133
  %v1135 = vlaneseq
  %v1136 = vshrl.u32 %v1135, 7
  %v1137 = vsub.s32 1, %v1136
  %v1138 = vrot.slane %v1030, %v1137
  %v1139 = vlaneseq
  %v1140 = vshrl.u32 %v1139, 7
  %v1141 = vsub.s32 1, %v1140
  %v1142 = vrot.slane %v1031, %v1141
  %v1143 = vlaneseq
  %v1144 = vshrl.u32 %v1143, 7
  %v1145 = vsub.s32 1, %v1144
  %v1146 = vrot.slane %v1032, %v1145
  %v1147 = vmul.f32 %v1114, %v1134
  %v1148 = vmul.f32 %v1114, %v1138
  %v1149 = vmul.f32 %v1119, %v1134
  %v1150 = vmul.f32 %v1119, %v1138
  %v1151 = vmul.f32 %v1124, %v1134
  %v1152 = vmul.f32 %v1124, %v1138
  %v1153 = vmul.f32 %v1129, %v1134
  %v1154 = vmul.f32 %v1129, %v1138
  %v1155 = vmul.f32 %v1114, %v1142
  %v1156 = vmul.f32 %v1114, %v1146
  %v1157 = vmul.f32 %v1119, %v1142
  %v1158 = vmul.f32 %v1119, %v1146
  %v1159 = vmul.f32 %v1124, %v1142
  %v1160 = vmul.f32 %v1124, %v1146
  %v1161 = vmul.f32 %v1129, %v1142
  %v1162 = vmul.f32 %v1129, %v1146
  %v1163 = vadd.f32 %v1090, %v1147
  %v1164 = vadd.f32 %v1091, %v1148
  %v1165 = vadd.f32 %v1092, %v1149
  %v1166 = vadd.f32 %v1093, %v1150
  %v1167 = vadd.f32 %v1094, %v1151
  %v1168 = vadd.f32 %v1095, %v1152
  %v1169 = vadd.f32 %v1096, %v1153
  %v1170 = vadd.f32 %v1097, %v1154
  %v1171 = vadd.f32 %v1098, %v1155
  %v1172 = vadd.f32 %v1099, %v1156
  %v1173 = vadd.f32 %v1100, %v1157
  %v1174 = vadd.f32 %v1101, %v1158
  %v1175 = vadd.f32 %v1102, %v1159
  %v1176 = vadd.f32 %v1103, %v1160
  %v1177 = vadd.f32 %v1104, %v1161
  %v1178 = vadd.f32 %v1105, %v1162
  %s1179 = scalar_lea.vmem %s1, 448
  %v1180 = vld [vmem:[%s1179] sm:$0xff]
  %v1181 = vld [vmem:[%s1179 + $0x8] sm:$0xff]
  %v1182 = vld [vmem:[%s1179 + $0x10] sm:$0xff]
  %v1183 = vld [vmem:[%s1179 + $0x18] sm:$0xff]
  %1185 = vset.pattern.permute.xlu0 0
  %1186 = vperm.xlu0 %1185, %v1180
  %v1187 = vpop.permute.xlu0 %1186
  %1190 = vset.pattern.permute.xlu0 0
  %1191 = vperm.xlu0 %1190, %v1181
  %v1192 = vpop.permute.xlu0 %1191
  %1195 = vset.pattern.permute.xlu0 0
  %1196 = vperm.xlu0 %1195, %v1182
  %v1197 = vpop.permute.xlu0 %1196
  %1200 = vset.pattern.permute.xlu0 0
  %1201 = vperm.xlu0 %1200, %v1183
  %v1202 = vpop.permute.xlu0 %1201
  %v1204 = vlaneseq
  %v1205 = vshrl.u32 %v1204, 7
  %v1206 = vsub.s32 2, %v1205
  %v1207 = vrot.slane %v1029, %v1206
  %v1208 = vlaneseq
  %v1209 = vshrl.u32 %v1208, 7
  %v1210 = vsub.s32 2, %v1209
  %v1211 = vrot.slane %v1030, %v1210
  %v1212 = vlaneseq
  %v1213 = vshrl.u32 %v1212, 7
  %v1214 = vsub.s32 2, %v1213
  %v1215 = vrot.slane %v1031, %v1214
  %v1216 = vlaneseq
  %v1217 = vshrl.u32 %v1216, 7
  %v1218 = vsub.s32 2, %v1217
  %v1219 = vrot.slane %v1032, %v1218
  %v1220 = vmul.f32 %v1187, %v1207
  %v1221 = vmul.f32 %v1187, %v1211
  %v1222 = vmul.f32 %v1192, %v1207
  %v1223 = vmul.f32 %v1192, %v1211
  %v1224 = vmul.f32 %v1197, %v1207
  %v1225 = vmul.f32 %v1197, %v1211
  %v1226 = vmul.f32 %v1202, %v1207
  %v1227 = vmul.f32 %v1202, %v1211
  %v1228 = vmul.f32 %v1187, %v1215
  %v1229 = vmul.f32 %v1187, %v1219
  %v1230 = vmul.f32 %v1192, %v1215
  %v1231 = vmul.f32 %v1192, %v1219
  %v1232 = vmul.f32 %v1197, %v1215
  %v1233 = vmul.f32 %v1197, %v1219
  %v1234 = vmul.f32 %v1202, %v1215
  %v1235 = vmul.f32 %v1202, %v1219
  %v1236 = vadd.f32 %v1163, %v1220
  %v1237 = vadd.f32 %v1164, %v1221
  %v1238 = vadd.f32 %v1165, %v1222
  %v1239 = vadd.f32 %v1166, %v1223
  %v1240 = vadd.f32 %v1167, %v1224
  %v1241 = vadd.f32 %v1168, %v1225
  %v1242 = vadd.f32 %v1169, %v1226
  %v1243 = vadd.f32 %v1170, %v1227
  %v1244 = vadd.f32 %v1171, %v1228
  %v1245 = vadd.f32 %v1172, %v1229
  %v1246 = vadd.f32 %v1173, %v1230
  %v1247 = vadd.f32 %v1174, %v1231
  %v1248 = vadd.f32 %v1175, %v1232
  %v1249 = vadd.f32 %v1176, %v1233
  %v1250 = vadd.f32 %v1177, %v1234
  %v1251 = vadd.f32 %v1178, %v1235
  %s1252 = scalar_lea.vmem %s1, 480
  %v1253 = vld [vmem:[%s1252] sm:$0xff]
  %v1254 = vld [vmem:[%s1252 + $0x8] sm:$0xff]
  %v1255 = vld [vmem:[%s1252 + $0x10] sm:$0xff]
  %v1256 = vld [vmem:[%s1252 + $0x18] sm:$0xff]
  %1258 = vset.pattern.permute.xlu0 0
  %1259 = vperm.xlu0 %1258, %v1253
  %v1260 = vpop.permute.xlu0 %1259
  %1263 = vset.pattern.permute.xlu0 0
  %1264 = vperm.xlu0 %1263, %v1254
  %v1265 = vpop.permute.xlu0 %1264
  %1268 = vset.pattern.permute.xlu0 0
  %1269 = vperm.xlu0 %1268, %v1255
  %v1270 = vpop.permute.xlu0 %1269
  %1273 = vset.pattern.permute.xlu0 0
  %1274 = vperm.xlu0 %1273, %v1256
  %v1275 = vpop.permute.xlu0 %1274
  %v1277 = vlaneseq
  %v1278 = vshrl.u32 %v1277, 7
  %v1279 = vsub.s32 3, %v1278
  %v1280 = vrot.slane %v1029, %v1279
  %v1281 = vlaneseq
  %v1282 = vshrl.u32 %v1281, 7
  %v1283 = vsub.s32 3, %v1282
  %v1284 = vrot.slane %v1030, %v1283
  %v1285 = vlaneseq
  %v1286 = vshrl.u32 %v1285, 7
  %v1287 = vsub.s32 3, %v1286
  %v1288 = vrot.slane %v1031, %v1287
  %v1289 = vlaneseq
  %v1290 = vshrl.u32 %v1289, 7
  %v1291 = vsub.s32 3, %v1290
  %v1292 = vrot.slane %v1032, %v1291
  %v1293 = vmul.f32 %v1260, %v1280
  %v1294 = vmul.f32 %v1260, %v1284
  %v1295 = vmul.f32 %v1265, %v1280
  %v1296 = vmul.f32 %v1265, %v1284
  %v1297 = vmul.f32 %v1270, %v1280
  %v1298 = vmul.f32 %v1270, %v1284
  %v1299 = vmul.f32 %v1275, %v1280
  %v1300 = vmul.f32 %v1275, %v1284
  %v1301 = vmul.f32 %v1260, %v1288
  %v1302 = vmul.f32 %v1260, %v1292
  %v1303 = vmul.f32 %v1265, %v1288
  %v1304 = vmul.f32 %v1265, %v1292
  %v1305 = vmul.f32 %v1270, %v1288
  %v1306 = vmul.f32 %v1270, %v1292
  %v1307 = vmul.f32 %v1275, %v1288
  %v1308 = vmul.f32 %v1275, %v1292
  %v1309 = vadd.f32 %v1236, %v1293
  %v1310 = vadd.f32 %v1237, %v1294
  %v1311 = vadd.f32 %v1238, %v1295
  %v1312 = vadd.f32 %v1239, %v1296
  %v1313 = vadd.f32 %v1240, %v1297
  %v1314 = vadd.f32 %v1241, %v1298
  %v1315 = vadd.f32 %v1242, %v1299
  %v1316 = vadd.f32 %v1243, %v1300
  %v1317 = vadd.f32 %v1244, %v1301
  %v1318 = vadd.f32 %v1245, %v1302
  %v1319 = vadd.f32 %v1246, %v1303
  %v1320 = vadd.f32 %v1247, %v1304
  %v1321 = vadd.f32 %v1248, %v1305
  %v1322 = vadd.f32 %v1249, %v1306
  %v1323 = vadd.f32 %v1250, %v1307
  %v1324 = vadd.f32 %v1251, %v1308
  %s1325 = scalar_lea.vmem %s1, 512
  %v1326 = vld [vmem:[%s1325] sm:$0xff]
  %v1327 = vld [vmem:[%s1325 + $0x8] sm:$0xff]
  %v1328 = vld [vmem:[%s1325 + $0x10] sm:$0xff]
  %v1329 = vld [vmem:[%s1325 + $0x18] sm:$0xff]
  %1331 = vset.pattern.permute.xlu0 0
  %1332 = vperm.xlu0 %1331, %v1326
  %v1333 = vpop.permute.xlu0 %1332
  %1336 = vset.pattern.permute.xlu0 0
  %1337 = vperm.xlu0 %1336, %v1327
  %v1338 = vpop.permute.xlu0 %1337
  %1341 = vset.pattern.permute.xlu0 0
  %1342 = vperm.xlu0 %1341, %v1328
  %v1343 = vpop.permute.xlu0 %1342
  %1346 = vset.pattern.permute.xlu0 0
  %1347 = vperm.xlu0 %1346, %v1329
  %v1348 = vpop.permute.xlu0 %1347
  %v1350 = vlaneseq
  %v1351 = vshrl.u32 %v1350, 7
  %v1352 = vsub.s32 0, %v1351
  %v1353 = vrot.slane %v29, %v1352
  %v1354 = vlaneseq
  %v1355 = vshrl.u32 %v1354, 7
  %v1356 = vsub.s32 4, %v1355
  %v1357 = vrot.slane %v29, %v1356
  %v1358 = vlaneseq
  %v1359 = vshrl.u32 %v1358, 7
  %v1360 = vsub.s32 0, %v1359
  %v1361 = vrot.slane %v30, %v1360
  %v1362 = vlaneseq
  %v1363 = vshrl.u32 %v1362, 7
  %v1364 = vsub.s32 4, %v1363
  %v1365 = vrot.slane %v30, %v1364
  %v1370 = vlaneseq
  %v1371 = vshrl.u32 %v1370, 7
  %v1372 = vsub.s32 0, %v1371
  %v1373 = vrot.slane %v1353, %v1372
  %v1374 = vlaneseq
  %v1375 = vshrl.u32 %v1374, 7
  %v1376 = vsub.s32 0, %v1375
  %v1377 = vrot.slane %v1357, %v1376
  %v1378 = vlaneseq
  %v1379 = vshrl.u32 %v1378, 7
  %v1380 = vsub.s32 0, %v1379
  %v1381 = vrot.slane %v1361, %v1380
  %v1382 = vlaneseq
  %v1383 = vshrl.u32 %v1382, 7
  %v1384 = vsub.s32 0, %v1383
  %v1385 = vrot.slane %v1365, %v1384
  %v1386 = vmul.f32 %v1333, %v1373
  %v1387 = vmul.f32 %v1333, %v1377
  %v1388 = vmul.f32 %v1338, %v1373
  %v1389 = vmul.f32 %v1338, %v1377
  %v1390 = vmul.f32 %v1343, %v1373
  %v1391 = vmul.f32 %v1343, %v1377
  %v1392 = vmul.f32 %v1348, %v1373
  %v1393 = vmul.f32 %v1348, %v1377
  %v1394 = vmul.f32 %v1333, %v1381
  %v1395 = vmul.f32 %v1333, %v1385
  %v1396 = vmul.f32 %v1338, %v1381
  %v1397 = vmul.f32 %v1338, %v1385
  %v1398 = vmul.f32 %v1343, %v1381
  %v1399 = vmul.f32 %v1343, %v1385
  %v1400 = vmul.f32 %v1348, %v1381
  %v1401 = vmul.f32 %v1348, %v1385
  %v1402 = vadd.f32 %v1309, %v1386
  %v1403 = vadd.f32 %v1310, %v1387
  %v1404 = vadd.f32 %v1311, %v1388
  %v1405 = vadd.f32 %v1312, %v1389
  %v1406 = vadd.f32 %v1313, %v1390
  %v1407 = vadd.f32 %v1314, %v1391
  %v1408 = vadd.f32 %v1315, %v1392
  %v1409 = vadd.f32 %v1316, %v1393
  %v1410 = vadd.f32 %v1317, %v1394
  %v1411 = vadd.f32 %v1318, %v1395
  %v1412 = vadd.f32 %v1319, %v1396
  %v1413 = vadd.f32 %v1320, %v1397
  %v1414 = vadd.f32 %v1321, %v1398
  %v1415 = vadd.f32 %v1322, %v1399
  %v1416 = vadd.f32 %v1323, %v1400
  %v1417 = vadd.f32 %v1324, %v1401
  %s1418 = scalar_lea.vmem %s1, 544
  %v1419 = vld [vmem:[%s1418] sm:$0xff]
  %v1420 = vld [vmem:[%s1418 + $0x8] sm:$0xff]
  %v1421 = vld [vmem:[%s1418 + $0x10] sm:$0xff]
  %v1422 = vld [vmem:[%s1418 + $0x18] sm:$0xff]
  %1424 = vset.pattern.permute.xlu0 0
  %1425 = vperm.xlu0 %1424, %v1419
  %v1426 = vpop.permute.xlu0 %1425
  %1429 = vset.pattern.permute.xlu0 0
  %1430 = vperm.xlu0 %1429, %v1420
  %v1431 = vpop.permute.xlu0 %1430
  %1434 = vset.pattern.permute.xlu0 0
  %1435 = vperm.xlu0 %1434, %v1421
  %v1436 = vpop.permute.xlu0 %1435
  %1439 = vset.pattern.permute.xlu0 0
  %1440 = vperm.xlu0 %1439, %v1422
  %v1441 = vpop.permute.xlu0 %1440
  %v1443 = vlaneseq
  %v1444 = vshrl.u32 %v1443, 7
  %v1445 = vsub.s32 1, %v1444
  %v1446 = vrot.slane %v29, %v1445
  %v1447 = vlaneseq
  %v1448 = vshrl.u32 %v1447, 7
  %v1449 = vsub.s32 5, %v1448
  %v1450 = vrot.slane %v29, %v1449
  %v1451 = vlaneseq
  %v1452 = vshrl.u32 %v1451, 7
  %v1453 = vsub.s32 1, %v1452
  %v1454 = vrot.slane %v30, %v1453
  %v1455 = vlaneseq
  %v1456 = vshrl.u32 %v1455, 7
  %v1457 = vsub.s32 5, %v1456
  %v1458 = vrot.slane %v30, %v1457
  %v1463 = vlaneseq
  %v1464 = vshrl.u32 %v1463, 7
  %v1465 = vsub.s32 1, %v1464
  %v1466 = vrot.slane %v1446, %v1465
  %v1467 = vlaneseq
  %v1468 = vshrl.u32 %v1467, 7
  %v1469 = vsub.s32 1, %v1468
  %v1470 = vrot.slane %v1450, %v1469
  %v1471 = vlaneseq
  %v1472 = vshrl.u32 %v1471, 7
  %v1473 = vsub.s32 1, %v1472
  %v1474 = vrot.slane %v1454, %v1473
  %v1475 = vlaneseq
  %v1476 = vshrl.u32 %v1475, 7
  %v1477 = vsub.s32 1, %v1476
  %v1478 = vrot.slane %v1458, %v1477
  %v1479 = vmul.f32 %v1426, %v1466
  %v1480 = vmul.f32 %v1426, %v1470
  %v1481 = vmul.f32 %v1431, %v1466
  %v1482 = vmul.f32 %v1431, %v1470
  %v1483 = vmul.f32 %v1436, %v1466
  %v1484 = vmul.f32 %v1436, %v1470
  %v1485 = vmul.f32 %v1441, %v1466
  %v1486 = vmul.f32 %v1441, %v1470
  %v1487 = vmul.f32 %v1426, %v1474
  %v1488 = vmul.f32 %v1426, %v1478
  %v1489 = vmul.f32 %v1431, %v1474
  %v1490 = vmul.f32 %v1431, %v1478
  %v1491 = vmul.f32 %v1436, %v1474
  %v1492 = vmul.f32 %v1436, %v1478
  %v1493 = vmul.f32 %v1441, %v1474
  %v1494 = vmul.f32 %v1441, %v1478
  %v1495 = vadd.f32 %v1402, %v1479
  %v1496 = vadd.f32 %v1403, %v1480
  %v1497 = vadd.f32 %v1404, %v1481
  %v1498 = vadd.f32 %v1405, %v1482
  %v1499 = vadd.f32 %v1406, %v1483
  %v1500 = vadd.f32 %v1407, %v1484
  %v1501 = vadd.f32 %v1408, %v1485
  %v1502 = vadd.f32 %v1409, %v1486
  %v1503 = vadd.f32 %v1410, %v1487
  %v1504 = vadd.f32 %v1411, %v1488
  %v1505 = vadd.f32 %v1412, %v1489
  %v1506 = vadd.f32 %v1413, %v1490
  %v1507 = vadd.f32 %v1414, %v1491
  %v1508 = vadd.f32 %v1415, %v1492
  %v1509 = vadd.f32 %v1416, %v1493
  %v1510 = vadd.f32 %v1417, %v1494
  %s1511 = scalar_lea.vmem %s1, 576
  %v1512 = vld [vmem:[%s1511] sm:$0xff]
  %v1513 = vld [vmem:[%s1511 + $0x8] sm:$0xff]
  %v1514 = vld [vmem:[%s1511 + $0x10] sm:$0xff]
  %v1515 = vld [vmem:[%s1511 + $0x18] sm:$0xff]
  %1517 = vset.pattern.permute.xlu0 0
  %1518 = vperm.xlu0 %1517, %v1512
  %v1519 = vpop.permute.xlu0 %1518
  %1522 = vset.pattern.permute.xlu0 0
  %1523 = vperm.xlu0 %1522, %v1513
  %v1524 = vpop.permute.xlu0 %1523
  %1527 = vset.pattern.permute.xlu0 0
  %1528 = vperm.xlu0 %1527, %v1514
  %v1529 = vpop.permute.xlu0 %1528
  %1532 = vset.pattern.permute.xlu0 0
  %1533 = vperm.xlu0 %1532, %v1515
  %v1534 = vpop.permute.xlu0 %1533
  %v1536 = vlaneseq
  %v1537 = vshrl.u32 %v1536, 7
  %v1538 = vsub.s32 2, %v1537
  %v1539 = vrot.slane %v29, %v1538
  %v1540 = vlaneseq
  %v1541 = vshrl.u32 %v1540, 7
  %v1542 = vsub.s32 6, %v1541
  %v1543 = vrot.slane %v29, %v1542
  %v1544 = vlaneseq
  %v1545 = vshrl.u32 %v1544, 7
  %v1546 = vsub.s32 2, %v1545
  %v1547 = vrot.slane %v30, %v1546
  %v1548 = vlaneseq
  %v1549 = vshrl.u32 %v1548, 7
  %v1550 = vsub.s32 6, %v1549
  %v1551 = vrot.slane %v30, %v1550
  %v1556 = vlaneseq
  %v1557 = vshrl.u32 %v1556, 7
  %v1558 = vsub.s32 2, %v1557
  %v1559 = vrot.slane %v1539, %v1558
  %v1560 = vlaneseq
  %v1561 = vshrl.u32 %v1560, 7
  %v1562 = vsub.s32 2, %v1561
  %v1563 = vrot.slane %v1543, %v1562
  %v1564 = vlaneseq
  %v1565 = vshrl.u32 %v1564, 7
  %v1566 = vsub.s32 2, %v1565
  %v1567 = vrot.slane %v1547, %v1566
  %v1568 = vlaneseq
  %v1569 = vshrl.u32 %v1568, 7
  %v1570 = vsub.s32 2, %v1569
  %v1571 = vrot.slane %v1551, %v1570
  %v1572 = vmul.f32 %v1519, %v1559
  %v1573 = vmul.f32 %v1519, %v1563
  %v1574 = vmul.f32 %v1524, %v1559
  %v1575 = vmul.f32 %v1524, %v1563
  %v1576 = vmul.f32 %v1529, %v1559
  %v1577 = vmul.f32 %v1529, %v1563
  %v1578 = vmul.f32 %v1534, %v1559
  %v1579 = vmul.f32 %v1534, %v1563
  %v1580 = vmul.f32 %v1519, %v1567
  %v1581 = vmul.f32 %v1519, %v1571
  %v1582 = vmul.f32 %v1524, %v1567
  %v1583 = vmul.f32 %v1524, %v1571
  %v1584 = vmul.f32 %v1529, %v1567
  %v1585 = vmul.f32 %v1529, %v1571
  %v1586 = vmul.f32 %v1534, %v1567
  %v1587 = vmul.f32 %v1534, %v1571
  %v1588 = vadd.f32 %v1495, %v1572
  %v1589 = vadd.f32 %v1496, %v1573
  %v1590 = vadd.f32 %v1497, %v1574
  %v1591 = vadd.f32 %v1498, %v1575
  %v1592 = vadd.f32 %v1499, %v1576
  %v1593 = vadd.f32 %v1500, %v1577
  %v1594 = vadd.f32 %v1501, %v1578
  %v1595 = vadd.f32 %v1502, %v1579
  %v1596 = vadd.f32 %v1503, %v1580
  %v1597 = vadd.f32 %v1504, %v1581
  %v1598 = vadd.f32 %v1505, %v1582
  %v1599 = vadd.f32 %v1506, %v1583
  %v1600 = vadd.f32 %v1507, %v1584
  %v1601 = vadd.f32 %v1508, %v1585
  %v1602 = vadd.f32 %v1509, %v1586
  %v1603 = vadd.f32 %v1510, %v1587
  %s1604 = scalar_lea.vmem %s1, 608
  %v1605 = vld [vmem:[%s1604] sm:$0xff]
  %v1606 = vld [vmem:[%s1604 + $0x8] sm:$0xff]
  %v1607 = vld [vmem:[%s1604 + $0x10] sm:$0xff]
  %v1608 = vld [vmem:[%s1604 + $0x18] sm:$0xff]
  %1610 = vset.pattern.permute.xlu0 0
  %1611 = vperm.xlu0 %1610, %v1605
  %v1612 = vpop.permute.xlu0 %1611
  %1615 = vset.pattern.permute.xlu0 0
  %1616 = vperm.xlu0 %1615, %v1606
  %v1617 = vpop.permute.xlu0 %1616
  %1620 = vset.pattern.permute.xlu0 0
  %1621 = vperm.xlu0 %1620, %v1607
  %v1622 = vpop.permute.xlu0 %1621
  %1625 = vset.pattern.permute.xlu0 0
  %1626 = vperm.xlu0 %1625, %v1608
  %v1627 = vpop.permute.xlu0 %1626
  %v1629 = vlaneseq
  %v1630 = vshrl.u32 %v1629, 7
  %v1631 = vsub.s32 3, %v1630
  %v1632 = vrot.slane %v29, %v1631
  %v1633 = vlaneseq
  %v1634 = vshrl.u32 %v1633, 7
  %v1635 = vsub.s32 7, %v1634
  %v1636 = vrot.slane %v29, %v1635
  %v1637 = vlaneseq
  %v1638 = vshrl.u32 %v1637, 7
  %v1639 = vsub.s32 3, %v1638
  %v1640 = vrot.slane %v30, %v1639
  %v1641 = vlaneseq
  %v1642 = vshrl.u32 %v1641, 7
  %v1643 = vsub.s32 7, %v1642
  %v1644 = vrot.slane %v30, %v1643
  %v1649 = vlaneseq
  %v1650 = vshrl.u32 %v1649, 7
  %v1651 = vsub.s32 3, %v1650
  %v1652 = vrot.slane %v1632, %v1651
  %v1653 = vlaneseq
  %v1654 = vshrl.u32 %v1653, 7
  %v1655 = vsub.s32 3, %v1654
  %v1656 = vrot.slane %v1636, %v1655
  %v1657 = vlaneseq
  %v1658 = vshrl.u32 %v1657, 7
  %v1659 = vsub.s32 3, %v1658
  %v1660 = vrot.slane %v1640, %v1659
  %v1661 = vlaneseq
  %v1662 = vshrl.u32 %v1661, 7
  %v1663 = vsub.s32 3, %v1662
  %v1664 = vrot.slane %v1644, %v1663
  %v1665 = vmul.f32 %v1612, %v1652
  %v1666 = vmul.f32 %v1612, %v1656
  %v1667 = vmul.f32 %v1617, %v1652
  %v1668 = vmul.f32 %v1617, %v1656
  %v1669 = vmul.f32 %v1622, %v1652
  %v1670 = vmul.f32 %v1622, %v1656
  %v1671 = vmul.f32 %v1627, %v1652
  %v1672 = vmul.f32 %v1627, %v1656
  %v1673 = vmul.f32 %v1612, %v1660
  %v1674 = vmul.f32 %v1612, %v1664
  %v1675 = vmul.f32 %v1617, %v1660
  %v1676 = vmul.f32 %v1617, %v1664
  %v1677 = vmul.f32 %v1622, %v1660
  %v1678 = vmul.f32 %v1622, %v1664
  %v1679 = vmul.f32 %v1627, %v1660
  %v1680 = vmul.f32 %v1627, %v1664
  %v1681 = vadd.f32 %v1588, %v1665
  %v1682 = vadd.f32 %v1589, %v1666
  %v1683 = vadd.f32 %v1590, %v1667
  %v1684 = vadd.f32 %v1591, %v1668
  %v1685 = vadd.f32 %v1592, %v1669
  %v1686 = vadd.f32 %v1593, %v1670
  %v1687 = vadd.f32 %v1594, %v1671
  %v1688 = vadd.f32 %v1595, %v1672
  %v1689 = vadd.f32 %v1596, %v1673
  %v1690 = vadd.f32 %v1597, %v1674
  %v1691 = vadd.f32 %v1598, %v1675
  %v1692 = vadd.f32 %v1599, %v1676
  %v1693 = vadd.f32 %v1600, %v1677
  %v1694 = vadd.f32 %v1601, %v1678
  %v1695 = vadd.f32 %v1602, %v1679
  %v1696 = vadd.f32 %v1603, %v1680
  %1697 = vrot.lane.b32.xlu0 %v29, 127
  %v1698 = vpop.permute.xlu0 %1697
  %1699 = vrot.lane.b32.xlu0 %v30, 127
  %v1700 = vpop.permute.xlu0 %1699
  %1701 = vrot.lane.b32.xlu0 %v33, 127
  %v1702 = vpop.permute.xlu0 %1701
  %1703 = vrot.lane.b32.xlu0 %v34, 127
  %v1704 = vpop.permute.xlu0 %1703
  %vm1705 = vcmp.lt.s32.totalorder %v46, 127
  %v1706 = vsel %vm1705, %v1698, %v1702
  %v1707 = vsel %vm1705, %v1700, %v1704
  %v1708 = vsel %vm1705, %v1702, %v1698
  %v1709 = vsel %vm1705, %v1704, %v1700
  %s1710 = scalar_lea.vmem %s2, 10
  %v1711 = vld [vmem:[%s1710] sm:$0x3]
  %v1713 = vlaneseq
  %v1714 = vshrl.u32 %v1713, 7
  %v1715 = vsub.s32 0, %v1714
  %v1716 = vrot.slane %v1711, %v1715
  %v1717 = vlaneseq
  %v1718 = vshrl.u32 %v1717, 7
  %v1719 = vsub.s32 1, %v1718
  %v1720 = vrot.slane %v1711, %v1719
  %v1723 = vmul.f32 %v1706, %v1716
  %v1724 = vmul.f32 %v1708, %v1720
  %v1725 = vmul.f32 %v1707, %v1716
  %v1726 = vmul.f32 %v1709, %v1720
  %s1727 = scalar_lea.vmem %s1, 640
  %v1728 = vld [vmem:[%s1727] sm:$0xff]
  %v1729 = vld [vmem:[%s1727 + $0x8] sm:$0xff]
  %v1730 = vld [vmem:[%s1727 + $0x10] sm:$0xff]
  %v1731 = vld [vmem:[%s1727 + $0x18] sm:$0xff]
  %1733 = vset.pattern.permute.xlu0 0
  %1734 = vperm.xlu0 %1733, %v1728
  %v1735 = vpop.permute.xlu0 %1734
  %1738 = vset.pattern.permute.xlu0 0
  %1739 = vperm.xlu0 %1738, %v1729
  %v1740 = vpop.permute.xlu0 %1739
  %1743 = vset.pattern.permute.xlu0 0
  %1744 = vperm.xlu0 %1743, %v1730
  %v1745 = vpop.permute.xlu0 %1744
  %1748 = vset.pattern.permute.xlu0 0
  %1749 = vperm.xlu0 %1748, %v1731
  %v1750 = vpop.permute.xlu0 %1749
  %v1752 = vlaneseq
  %v1753 = vshrl.u32 %v1752, 7
  %v1754 = vsub.s32 0, %v1753
  %v1755 = vrot.slane %v1723, %v1754
  %v1756 = vlaneseq
  %v1757 = vshrl.u32 %v1756, 7
  %v1758 = vsub.s32 0, %v1757
  %v1759 = vrot.slane %v1724, %v1758
  %v1760 = vlaneseq
  %v1761 = vshrl.u32 %v1760, 7
  %v1762 = vsub.s32 0, %v1761
  %v1763 = vrot.slane %v1725, %v1762
  %v1764 = vlaneseq
  %v1765 = vshrl.u32 %v1764, 7
  %v1766 = vsub.s32 0, %v1765
  %v1767 = vrot.slane %v1726, %v1766
  %v1768 = vmul.f32 %v1735, %v1755
  %v1769 = vmul.f32 %v1735, %v1759
  %v1770 = vmul.f32 %v1740, %v1755
  %v1771 = vmul.f32 %v1740, %v1759
  %v1772 = vmul.f32 %v1745, %v1755
  %v1773 = vmul.f32 %v1745, %v1759
  %v1774 = vmul.f32 %v1750, %v1755
  %v1775 = vmul.f32 %v1750, %v1759
  %v1776 = vmul.f32 %v1735, %v1763
  %v1777 = vmul.f32 %v1735, %v1767
  %v1778 = vmul.f32 %v1740, %v1763
  %v1779 = vmul.f32 %v1740, %v1767
  %v1780 = vmul.f32 %v1745, %v1763
  %v1781 = vmul.f32 %v1745, %v1767
  %v1782 = vmul.f32 %v1750, %v1763
  %v1783 = vmul.f32 %v1750, %v1767
  %v1784 = vadd.f32 %v1681, %v1768
  %v1785 = vadd.f32 %v1682, %v1769
  %v1786 = vadd.f32 %v1683, %v1770
  %v1787 = vadd.f32 %v1684, %v1771
  %v1788 = vadd.f32 %v1685, %v1772
  %v1789 = vadd.f32 %v1686, %v1773
  %v1790 = vadd.f32 %v1687, %v1774
  %v1791 = vadd.f32 %v1688, %v1775
  %v1792 = vadd.f32 %v1689, %v1776
  %v1793 = vadd.f32 %v1690, %v1777
  %v1794 = vadd.f32 %v1691, %v1778
  %v1795 = vadd.f32 %v1692, %v1779
  %v1796 = vadd.f32 %v1693, %v1780
  %v1797 = vadd.f32 %v1694, %v1781
  %v1798 = vadd.f32 %v1695, %v1782
  %v1799 = vadd.f32 %v1696, %v1783
  %s1800 = scalar_lea.vmem %s1, 672
  %v1801 = vld [vmem:[%s1800] sm:$0xff]
  %v1802 = vld [vmem:[%s1800 + $0x8] sm:$0xff]
  %v1803 = vld [vmem:[%s1800 + $0x10] sm:$0xff]
  %v1804 = vld [vmem:[%s1800 + $0x18] sm:$0xff]
  %1806 = vset.pattern.permute.xlu0 0
  %1807 = vperm.xlu0 %1806, %v1801
  %v1808 = vpop.permute.xlu0 %1807
  %1811 = vset.pattern.permute.xlu0 0
  %1812 = vperm.xlu0 %1811, %v1802
  %v1813 = vpop.permute.xlu0 %1812
  %1816 = vset.pattern.permute.xlu0 0
  %1817 = vperm.xlu0 %1816, %v1803
  %v1818 = vpop.permute.xlu0 %1817
  %1821 = vset.pattern.permute.xlu0 0
  %1822 = vperm.xlu0 %1821, %v1804
  %v1823 = vpop.permute.xlu0 %1822
  %v1825 = vlaneseq
  %v1826 = vshrl.u32 %v1825, 7
  %v1827 = vsub.s32 1, %v1826
  %v1828 = vrot.slane %v1723, %v1827
  %v1829 = vlaneseq
  %v1830 = vshrl.u32 %v1829, 7
  %v1831 = vsub.s32 1, %v1830
  %v1832 = vrot.slane %v1724, %v1831
  %v1833 = vlaneseq
  %v1834 = vshrl.u32 %v1833, 7
  %v1835 = vsub.s32 1, %v1834
  %v1836 = vrot.slane %v1725, %v1835
  %v1837 = vlaneseq
  %v1838 = vshrl.u32 %v1837, 7
  %v1839 = vsub.s32 1, %v1838
  %v1840 = vrot.slane %v1726, %v1839
  %v1841 = vmul.f32 %v1808, %v1828
  %v1842 = vmul.f32 %v1808, %v1832
  %v1843 = vmul.f32 %v1813, %v1828
  %v1844 = vmul.f32 %v1813, %v1832
  %v1845 = vmul.f32 %v1818, %v1828
  %v1846 = vmul.f32 %v1818, %v1832
  %v1847 = vmul.f32 %v1823, %v1828
  %v1848 = vmul.f32 %v1823, %v1832
  %v1849 = vmul.f32 %v1808, %v1836
  %v1850 = vmul.f32 %v1808, %v1840
  %v1851 = vmul.f32 %v1813, %v1836
  %v1852 = vmul.f32 %v1813, %v1840
  %v1853 = vmul.f32 %v1818, %v1836
  %v1854 = vmul.f32 %v1818, %v1840
  %v1855 = vmul.f32 %v1823, %v1836
  %v1856 = vmul.f32 %v1823, %v1840
  %v1857 = vadd.f32 %v1784, %v1841
  %v1858 = vadd.f32 %v1785, %v1842
  %v1859 = vadd.f32 %v1786, %v1843
  %v1860 = vadd.f32 %v1787, %v1844
  %v1861 = vadd.f32 %v1788, %v1845
  %v1862 = vadd.f32 %v1789, %v1846
  %v1863 = vadd.f32 %v1790, %v1847
  %v1864 = vadd.f32 %v1791, %v1848
  %v1865 = vadd.f32 %v1792, %v1849
  %v1866 = vadd.f32 %v1793, %v1850
  %v1867 = vadd.f32 %v1794, %v1851
  %v1868 = vadd.f32 %v1795, %v1852
  %v1869 = vadd.f32 %v1796, %v1853
  %v1870 = vadd.f32 %v1797, %v1854
  %v1871 = vadd.f32 %v1798, %v1855
  %v1872 = vadd.f32 %v1799, %v1856
  %s1873 = scalar_lea.vmem %s1, 704
  %v1874 = vld [vmem:[%s1873] sm:$0xff]
  %v1875 = vld [vmem:[%s1873 + $0x8] sm:$0xff]
  %v1876 = vld [vmem:[%s1873 + $0x10] sm:$0xff]
  %v1877 = vld [vmem:[%s1873 + $0x18] sm:$0xff]
  %1879 = vset.pattern.permute.xlu0 0
  %1880 = vperm.xlu0 %1879, %v1874
  %v1881 = vpop.permute.xlu0 %1880
  %1884 = vset.pattern.permute.xlu0 0
  %1885 = vperm.xlu0 %1884, %v1875
  %v1886 = vpop.permute.xlu0 %1885
  %1889 = vset.pattern.permute.xlu0 0
  %1890 = vperm.xlu0 %1889, %v1876
  %v1891 = vpop.permute.xlu0 %1890
  %1894 = vset.pattern.permute.xlu0 0
  %1895 = vperm.xlu0 %1894, %v1877
  %v1896 = vpop.permute.xlu0 %1895
  %v1898 = vlaneseq
  %v1899 = vshrl.u32 %v1898, 7
  %v1900 = vsub.s32 2, %v1899
  %v1901 = vrot.slane %v1723, %v1900
  %v1902 = vlaneseq
  %v1903 = vshrl.u32 %v1902, 7
  %v1904 = vsub.s32 2, %v1903
  %v1905 = vrot.slane %v1724, %v1904
  %v1906 = vlaneseq
  %v1907 = vshrl.u32 %v1906, 7
  %v1908 = vsub.s32 2, %v1907
  %v1909 = vrot.slane %v1725, %v1908
  %v1910 = vlaneseq
  %v1911 = vshrl.u32 %v1910, 7
  %v1912 = vsub.s32 2, %v1911
  %v1913 = vrot.slane %v1726, %v1912
  %v1914 = vmul.f32 %v1881, %v1901
  %v1915 = vmul.f32 %v1881, %v1905
  %v1916 = vmul.f32 %v1886, %v1901
  %v1917 = vmul.f32 %v1886, %v1905
  %v1918 = vmul.f32 %v1891, %v1901
  %v1919 = vmul.f32 %v1891, %v1905
  %v1920 = vmul.f32 %v1896, %v1901
  %v1921 = vmul.f32 %v1896, %v1905
  %v1922 = vmul.f32 %v1881, %v1909
  %v1923 = vmul.f32 %v1881, %v1913
  %v1924 = vmul.f32 %v1886, %v1909
  %v1925 = vmul.f32 %v1886, %v1913
  %v1926 = vmul.f32 %v1891, %v1909
  %v1927 = vmul.f32 %v1891, %v1913
  %v1928 = vmul.f32 %v1896, %v1909
  %v1929 = vmul.f32 %v1896, %v1913
  %v1930 = vadd.f32 %v1857, %v1914
  %v1931 = vadd.f32 %v1858, %v1915
  %v1932 = vadd.f32 %v1859, %v1916
  %v1933 = vadd.f32 %v1860, %v1917
  %v1934 = vadd.f32 %v1861, %v1918
  %v1935 = vadd.f32 %v1862, %v1919
  %v1936 = vadd.f32 %v1863, %v1920
  %v1937 = vadd.f32 %v1864, %v1921
  %v1938 = vadd.f32 %v1865, %v1922
  %v1939 = vadd.f32 %v1866, %v1923
  %v1940 = vadd.f32 %v1867, %v1924
  %v1941 = vadd.f32 %v1868, %v1925
  %v1942 = vadd.f32 %v1869, %v1926
  %v1943 = vadd.f32 %v1870, %v1927
  %v1944 = vadd.f32 %v1871, %v1928
  %v1945 = vadd.f32 %v1872, %v1929
  %s1946 = scalar_lea.vmem %s1, 736
  %v1947 = vld [vmem:[%s1946] sm:$0xff]
  %v1948 = vld [vmem:[%s1946 + $0x8] sm:$0xff]
  %v1949 = vld [vmem:[%s1946 + $0x10] sm:$0xff]
  %v1950 = vld [vmem:[%s1946 + $0x18] sm:$0xff]
  %1952 = vset.pattern.permute.xlu0 0
  %1953 = vperm.xlu0 %1952, %v1947
  %v1954 = vpop.permute.xlu0 %1953
  %1957 = vset.pattern.permute.xlu0 0
  %1958 = vperm.xlu0 %1957, %v1948
  %v1959 = vpop.permute.xlu0 %1958
  %1962 = vset.pattern.permute.xlu0 0
  %1963 = vperm.xlu0 %1962, %v1949
  %v1964 = vpop.permute.xlu0 %1963
  %1967 = vset.pattern.permute.xlu0 0
  %1968 = vperm.xlu0 %1967, %v1950
  %v1969 = vpop.permute.xlu0 %1968
  %v1971 = vlaneseq
  %v1972 = vshrl.u32 %v1971, 7
  %v1973 = vsub.s32 3, %v1972
  %v1974 = vrot.slane %v1723, %v1973
  %v1975 = vlaneseq
  %v1976 = vshrl.u32 %v1975, 7
  %v1977 = vsub.s32 3, %v1976
  %v1978 = vrot.slane %v1724, %v1977
  %v1979 = vlaneseq
  %v1980 = vshrl.u32 %v1979, 7
  %v1981 = vsub.s32 3, %v1980
  %v1982 = vrot.slane %v1725, %v1981
  %v1983 = vlaneseq
  %v1984 = vshrl.u32 %v1983, 7
  %v1985 = vsub.s32 3, %v1984
  %v1986 = vrot.slane %v1726, %v1985
  %v1987 = vmul.f32 %v1954, %v1974
  %v1988 = vmul.f32 %v1954, %v1978
  %v1989 = vmul.f32 %v1959, %v1974
  %v1990 = vmul.f32 %v1959, %v1978
  %v1991 = vmul.f32 %v1964, %v1974
  %v1992 = vmul.f32 %v1964, %v1978
  %v1993 = vmul.f32 %v1969, %v1974
  %v1994 = vmul.f32 %v1969, %v1978
  %v1995 = vmul.f32 %v1954, %v1982
  %v1996 = vmul.f32 %v1954, %v1986
  %v1997 = vmul.f32 %v1959, %v1982
  %v1998 = vmul.f32 %v1959, %v1986
  %v1999 = vmul.f32 %v1964, %v1982
  %v2000 = vmul.f32 %v1964, %v1986
  %v2001 = vmul.f32 %v1969, %v1982
  %v2002 = vmul.f32 %v1969, %v1986
  %v2003 = vadd.f32 %v1930, %v1987
  %v2004 = vadd.f32 %v1931, %v1988
  %v2005 = vadd.f32 %v1932, %v1989
  %v2006 = vadd.f32 %v1933, %v1990
  %v2007 = vadd.f32 %v1934, %v1991
  %v2008 = vadd.f32 %v1935, %v1992
  %v2009 = vadd.f32 %v1936, %v1993
  %v2010 = vadd.f32 %v1937, %v1994
  %v2011 = vadd.f32 %v1938, %v1995
  %v2012 = vadd.f32 %v1939, %v1996
  %v2013 = vadd.f32 %v1940, %v1997
  %v2014 = vadd.f32 %v1941, %v1998
  %v2015 = vadd.f32 %v1942, %v1999
  %v2016 = vadd.f32 %v1943, %v2000
  %v2017 = vadd.f32 %v1944, %v2001
  %v2018 = vadd.f32 %v1945, %v2002
  %2019 = vrot.lane.b32.xlu0 %v29, 113
  %v2020 = vpop.permute.xlu0 %2019
  %2021 = vrot.lane.b32.xlu0 %v30, 113
  %v2022 = vpop.permute.xlu0 %2021
  %2023 = vrot.lane.b32.xlu0 %v33, 113
  %v2024 = vpop.permute.xlu0 %2023
  %2025 = vrot.lane.b32.xlu0 %v34, 113
  %v2026 = vpop.permute.xlu0 %2025
  %vm2027 = vcmp.lt.s32.totalorder %v46, 113
  %v2028 = vsel %vm2027, %v2020, %v2024
  %v2029 = vsel %vm2027, %v2022, %v2026
  %v2030 = vsel %vm2027, %v2024, %v2020
  %v2031 = vsel %vm2027, %v2026, %v2022
  %s2032 = scalar_lea.vmem %s2, 12
  %v2033 = vld [vmem:[%s2032] sm:$0x3]
  %v2035 = vlaneseq
  %v2036 = vshrl.u32 %v2035, 7
  %v2037 = vsub.s32 0, %v2036
  %v2038 = vrot.slane %v2033, %v2037
  %v2039 = vlaneseq
  %v2040 = vshrl.u32 %v2039, 7
  %v2041 = vsub.s32 1, %v2040
  %v2042 = vrot.slane %v2033, %v2041
  %v2045 = vmul.f32 %v2028, %v2038
  %v2046 = vmul.f32 %v2030, %v2042
  %v2047 = vmul.f32 %v2029, %v2038
  %v2048 = vmul.f32 %v2031, %v2042
  %s2049 = scalar_lea.vmem %s1, 768
  %v2050 = vld [vmem:[%s2049] sm:$0xff]
  %v2051 = vld [vmem:[%s2049 + $0x8] sm:$0xff]
  %v2052 = vld [vmem:[%s2049 + $0x10] sm:$0xff]
  %v2053 = vld [vmem:[%s2049 + $0x18] sm:$0xff]
  %2055 = vset.pattern.permute.xlu0 0
  %2056 = vperm.xlu0 %2055, %v2050
  %v2057 = vpop.permute.xlu0 %2056
  %2060 = vset.pattern.permute.xlu0 0
  %2061 = vperm.xlu0 %2060, %v2051
  %v2062 = vpop.permute.xlu0 %2061
  %2065 = vset.pattern.permute.xlu0 0
  %2066 = vperm.xlu0 %2065, %v2052
  %v2067 = vpop.permute.xlu0 %2066
  %2070 = vset.pattern.permute.xlu0 0
  %2071 = vperm.xlu0 %2070, %v2053
  %v2072 = vpop.permute.xlu0 %2071
  %v2074 = vlaneseq
  %v2075 = vshrl.u32 %v2074, 7
  %v2076 = vsub.s32 0, %v2075
  %v2077 = vrot.slane %v2045, %v2076
  %v2078 = vlaneseq
  %v2079 = vshrl.u32 %v2078, 7
  %v2080 = vsub.s32 0, %v2079
  %v2081 = vrot.slane %v2046, %v2080
  %v2082 = vlaneseq
  %v2083 = vshrl.u32 %v2082, 7
  %v2084 = vsub.s32 0, %v2083
  %v2085 = vrot.slane %v2047, %v2084
  %v2086 = vlaneseq
  %v2087 = vshrl.u32 %v2086, 7
  %v2088 = vsub.s32 0, %v2087
  %v2089 = vrot.slane %v2048, %v2088
  %v2090 = vmul.f32 %v2057, %v2077
  %v2091 = vmul.f32 %v2057, %v2081
  %v2092 = vmul.f32 %v2062, %v2077
  %v2093 = vmul.f32 %v2062, %v2081
  %v2094 = vmul.f32 %v2067, %v2077
  %v2095 = vmul.f32 %v2067, %v2081
  %v2096 = vmul.f32 %v2072, %v2077
  %v2097 = vmul.f32 %v2072, %v2081
  %v2098 = vmul.f32 %v2057, %v2085
  %v2099 = vmul.f32 %v2057, %v2089
  %v2100 = vmul.f32 %v2062, %v2085
  %v2101 = vmul.f32 %v2062, %v2089
  %v2102 = vmul.f32 %v2067, %v2085
  %v2103 = vmul.f32 %v2067, %v2089
  %v2104 = vmul.f32 %v2072, %v2085
  %v2105 = vmul.f32 %v2072, %v2089
  %v2106 = vadd.f32 %v2003, %v2090
  %v2107 = vadd.f32 %v2004, %v2091
  %v2108 = vadd.f32 %v2005, %v2092
  %v2109 = vadd.f32 %v2006, %v2093
  %v2110 = vadd.f32 %v2007, %v2094
  %v2111 = vadd.f32 %v2008, %v2095
  %v2112 = vadd.f32 %v2009, %v2096
  %v2113 = vadd.f32 %v2010, %v2097
  %v2114 = vadd.f32 %v2011, %v2098
  %v2115 = vadd.f32 %v2012, %v2099
  %v2116 = vadd.f32 %v2013, %v2100
  %v2117 = vadd.f32 %v2014, %v2101
  %v2118 = vadd.f32 %v2015, %v2102
  %v2119 = vadd.f32 %v2016, %v2103
  %v2120 = vadd.f32 %v2017, %v2104
  %v2121 = vadd.f32 %v2018, %v2105
  %s2122 = scalar_lea.vmem %s1, 800
  %v2123 = vld [vmem:[%s2122] sm:$0xff]
  %v2124 = vld [vmem:[%s2122 + $0x8] sm:$0xff]
  %v2125 = vld [vmem:[%s2122 + $0x10] sm:$0xff]
  %v2126 = vld [vmem:[%s2122 + $0x18] sm:$0xff]
  %2128 = vset.pattern.permute.xlu0 0
  %2129 = vperm.xlu0 %2128, %v2123
  %v2130 = vpop.permute.xlu0 %2129
  %2133 = vset.pattern.permute.xlu0 0
  %2134 = vperm.xlu0 %2133, %v2124
  %v2135 = vpop.permute.xlu0 %2134
  %2138 = vset.pattern.permute.xlu0 0
  %2139 = vperm.xlu0 %2138, %v2125
  %v2140 = vpop.permute.xlu0 %2139
  %2143 = vset.pattern.permute.xlu0 0
  %2144 = vperm.xlu0 %2143, %v2126
  %v2145 = vpop.permute.xlu0 %2144
  %v2147 = vlaneseq
  %v2148 = vshrl.u32 %v2147, 7
  %v2149 = vsub.s32 1, %v2148
  %v2150 = vrot.slane %v2045, %v2149
  %v2151 = vlaneseq
  %v2152 = vshrl.u32 %v2151, 7
  %v2153 = vsub.s32 1, %v2152
  %v2154 = vrot.slane %v2046, %v2153
  %v2155 = vlaneseq
  %v2156 = vshrl.u32 %v2155, 7
  %v2157 = vsub.s32 1, %v2156
  %v2158 = vrot.slane %v2047, %v2157
  %v2159 = vlaneseq
  %v2160 = vshrl.u32 %v2159, 7
  %v2161 = vsub.s32 1, %v2160
  %v2162 = vrot.slane %v2048, %v2161
  %v2163 = vmul.f32 %v2130, %v2150
  %v2164 = vmul.f32 %v2130, %v2154
  %v2165 = vmul.f32 %v2135, %v2150
  %v2166 = vmul.f32 %v2135, %v2154
  %v2167 = vmul.f32 %v2140, %v2150
  %v2168 = vmul.f32 %v2140, %v2154
  %v2169 = vmul.f32 %v2145, %v2150
  %v2170 = vmul.f32 %v2145, %v2154
  %v2171 = vmul.f32 %v2130, %v2158
  %v2172 = vmul.f32 %v2130, %v2162
  %v2173 = vmul.f32 %v2135, %v2158
  %v2174 = vmul.f32 %v2135, %v2162
  %v2175 = vmul.f32 %v2140, %v2158
  %v2176 = vmul.f32 %v2140, %v2162
  %v2177 = vmul.f32 %v2145, %v2158
  %v2178 = vmul.f32 %v2145, %v2162
  %v2179 = vadd.f32 %v2106, %v2163
  %v2180 = vadd.f32 %v2107, %v2164
  %v2181 = vadd.f32 %v2108, %v2165
  %v2182 = vadd.f32 %v2109, %v2166
  %v2183 = vadd.f32 %v2110, %v2167
  %v2184 = vadd.f32 %v2111, %v2168
  %v2185 = vadd.f32 %v2112, %v2169
  %v2186 = vadd.f32 %v2113, %v2170
  %v2187 = vadd.f32 %v2114, %v2171
  %v2188 = vadd.f32 %v2115, %v2172
  %v2189 = vadd.f32 %v2116, %v2173
  %v2190 = vadd.f32 %v2117, %v2174
  %v2191 = vadd.f32 %v2118, %v2175
  %v2192 = vadd.f32 %v2119, %v2176
  %v2193 = vadd.f32 %v2120, %v2177
  %v2194 = vadd.f32 %v2121, %v2178
  %s2195 = scalar_lea.vmem %s1, 832
  %v2196 = vld [vmem:[%s2195] sm:$0xff]
  %v2197 = vld [vmem:[%s2195 + $0x8] sm:$0xff]
  %v2198 = vld [vmem:[%s2195 + $0x10] sm:$0xff]
  %v2199 = vld [vmem:[%s2195 + $0x18] sm:$0xff]
  %2201 = vset.pattern.permute.xlu0 0
  %2202 = vperm.xlu0 %2201, %v2196
  %v2203 = vpop.permute.xlu0 %2202
  %2206 = vset.pattern.permute.xlu0 0
  %2207 = vperm.xlu0 %2206, %v2197
  %v2208 = vpop.permute.xlu0 %2207
  %2211 = vset.pattern.permute.xlu0 0
  %2212 = vperm.xlu0 %2211, %v2198
  %v2213 = vpop.permute.xlu0 %2212
  %2216 = vset.pattern.permute.xlu0 0
  %2217 = vperm.xlu0 %2216, %v2199
  %v2218 = vpop.permute.xlu0 %2217
  %v2220 = vlaneseq
  %v2221 = vshrl.u32 %v2220, 7
  %v2222 = vsub.s32 2, %v2221
  %v2223 = vrot.slane %v2045, %v2222
  %v2224 = vlaneseq
  %v2225 = vshrl.u32 %v2224, 7
  %v2226 = vsub.s32 2, %v2225
  %v2227 = vrot.slane %v2046, %v2226
  %v2228 = vlaneseq
  %v2229 = vshrl.u32 %v2228, 7
  %v2230 = vsub.s32 2, %v2229
  %v2231 = vrot.slane %v2047, %v2230
  %v2232 = vlaneseq
  %v2233 = vshrl.u32 %v2232, 7
  %v2234 = vsub.s32 2, %v2233
  %v2235 = vrot.slane %v2048, %v2234
  %v2236 = vmul.f32 %v2203, %v2223
  %v2237 = vmul.f32 %v2203, %v2227
  %v2238 = vmul.f32 %v2208, %v2223
  %v2239 = vmul.f32 %v2208, %v2227
  %v2240 = vmul.f32 %v2213, %v2223
  %v2241 = vmul.f32 %v2213, %v2227
  %v2242 = vmul.f32 %v2218, %v2223
  %v2243 = vmul.f32 %v2218, %v2227
  %v2244 = vmul.f32 %v2203, %v2231
  %v2245 = vmul.f32 %v2203, %v2235
  %v2246 = vmul.f32 %v2208, %v2231
  %v2247 = vmul.f32 %v2208, %v2235
  %v2248 = vmul.f32 %v2213, %v2231
  %v2249 = vmul.f32 %v2213, %v2235
  %v2250 = vmul.f32 %v2218, %v2231
  %v2251 = vmul.f32 %v2218, %v2235
  %v2252 = vadd.f32 %v2179, %v2236
  %v2253 = vadd.f32 %v2180, %v2237
  %v2254 = vadd.f32 %v2181, %v2238
  %v2255 = vadd.f32 %v2182, %v2239
  %v2256 = vadd.f32 %v2183, %v2240
  %v2257 = vadd.f32 %v2184, %v2241
  %v2258 = vadd.f32 %v2185, %v2242
  %v2259 = vadd.f32 %v2186, %v2243
  %v2260 = vadd.f32 %v2187, %v2244
  %v2261 = vadd.f32 %v2188, %v2245
  %v2262 = vadd.f32 %v2189, %v2246
  %v2263 = vadd.f32 %v2190, %v2247
  %v2264 = vadd.f32 %v2191, %v2248
  %v2265 = vadd.f32 %v2192, %v2249
  %v2266 = vadd.f32 %v2193, %v2250
  %v2267 = vadd.f32 %v2194, %v2251
  %s2268 = scalar_lea.vmem %s1, 864
  %v2269 = vld [vmem:[%s2268] sm:$0xff]
  %v2270 = vld [vmem:[%s2268 + $0x8] sm:$0xff]
  %v2271 = vld [vmem:[%s2268 + $0x10] sm:$0xff]
  %v2272 = vld [vmem:[%s2268 + $0x18] sm:$0xff]
  %2274 = vset.pattern.permute.xlu0 0
  %2275 = vperm.xlu0 %2274, %v2269
  %v2276 = vpop.permute.xlu0 %2275
  %2279 = vset.pattern.permute.xlu0 0
  %2280 = vperm.xlu0 %2279, %v2270
  %v2281 = vpop.permute.xlu0 %2280
  %2284 = vset.pattern.permute.xlu0 0
  %2285 = vperm.xlu0 %2284, %v2271
  %v2286 = vpop.permute.xlu0 %2285
  %2289 = vset.pattern.permute.xlu0 0
  %2290 = vperm.xlu0 %2289, %v2272
  %v2291 = vpop.permute.xlu0 %2290
  %v2293 = vlaneseq
  %v2294 = vshrl.u32 %v2293, 7
  %v2295 = vsub.s32 3, %v2294
  %v2296 = vrot.slane %v2045, %v2295
  %v2297 = vlaneseq
  %v2298 = vshrl.u32 %v2297, 7
  %v2299 = vsub.s32 3, %v2298
  %v2300 = vrot.slane %v2046, %v2299
  %v2301 = vlaneseq
  %v2302 = vshrl.u32 %v2301, 7
  %v2303 = vsub.s32 3, %v2302
  %v2304 = vrot.slane %v2047, %v2303
  %v2305 = vlaneseq
  %v2306 = vshrl.u32 %v2305, 7
  %v2307 = vsub.s32 3, %v2306
  %v2308 = vrot.slane %v2048, %v2307
  %v2309 = vmul.f32 %v2276, %v2296
  %v2310 = vmul.f32 %v2276, %v2300
  %v2311 = vmul.f32 %v2281, %v2296
  %v2312 = vmul.f32 %v2281, %v2300
  %v2313 = vmul.f32 %v2286, %v2296
  %v2314 = vmul.f32 %v2286, %v2300
  %v2315 = vmul.f32 %v2291, %v2296
  %v2316 = vmul.f32 %v2291, %v2300
  %v2317 = vmul.f32 %v2276, %v2304
  %v2318 = vmul.f32 %v2276, %v2308
  %v2319 = vmul.f32 %v2281, %v2304
  %v2320 = vmul.f32 %v2281, %v2308
  %v2321 = vmul.f32 %v2286, %v2304
  %v2322 = vmul.f32 %v2286, %v2308
  %v2323 = vmul.f32 %v2291, %v2304
  %v2324 = vmul.f32 %v2291, %v2308
  %v2325 = vadd.f32 %v2252, %v2309
  %v2326 = vadd.f32 %v2253, %v2310
  %v2327 = vadd.f32 %v2254, %v2311
  %v2328 = vadd.f32 %v2255, %v2312
  %v2329 = vadd.f32 %v2256, %v2313
  %v2330 = vadd.f32 %v2257, %v2314
  %v2331 = vadd.f32 %v2258, %v2315
  %v2332 = vadd.f32 %v2259, %v2316
  %v2333 = vadd.f32 %v2260, %v2317
  %v2334 = vadd.f32 %v2261, %v2318
  %v2335 = vadd.f32 %v2262, %v2319
  %v2336 = vadd.f32 %v2263, %v2320
  %v2337 = vadd.f32 %v2264, %v2321
  %v2338 = vadd.f32 %v2265, %v2322
  %v2339 = vadd.f32 %v2266, %v2323
  %v2340 = vadd.f32 %v2267, %v2324
  %2341 = vrot.lane.b32.xlu0 %v29, 112
  %v2342 = vpop.permute.xlu0 %2341
  %2343 = vrot.lane.b32.xlu0 %v30, 112
  %v2344 = vpop.permute.xlu0 %2343
  %2345 = vrot.lane.b32.xlu0 %v33, 112
  %v2346 = vpop.permute.xlu0 %2345
  %2347 = vrot.lane.b32.xlu0 %v34, 112
  %v2348 = vpop.permute.xlu0 %2347
  %vm2349 = vcmp.lt.s32.totalorder %v46, 112
  %v2350 = vsel %vm2349, %v2342, %v2346
  %v2351 = vsel %vm2349, %v2344, %v2348
  %v2352 = vsel %vm2349, %v2346, %v2342
  %v2353 = vsel %vm2349, %v2348, %v2344
  %s2354 = scalar_lea.vmem %s2, 14
  %v2355 = vld [vmem:[%s2354] sm:$0x3]
  %v2357 = vlaneseq
  %v2358 = vshrl.u32 %v2357, 7
  %v2359 = vsub.s32 0, %v2358
  %v2360 = vrot.slane %v2355, %v2359
  %v2361 = vlaneseq
  %v2362 = vshrl.u32 %v2361, 7
  %v2363 = vsub.s32 1, %v2362
  %v2364 = vrot.slane %v2355, %v2363
  %v2367 = vmul.f32 %v2350, %v2360
  %v2368 = vmul.f32 %v2352, %v2364
  %v2369 = vmul.f32 %v2351, %v2360
  %v2370 = vmul.f32 %v2353, %v2364
  %s2371 = scalar_lea.vmem %s1, 896
  %v2372 = vld [vmem:[%s2371] sm:$0xff]
  %v2373 = vld [vmem:[%s2371 + $0x8] sm:$0xff]
  %v2374 = vld [vmem:[%s2371 + $0x10] sm:$0xff]
  %v2375 = vld [vmem:[%s2371 + $0x18] sm:$0xff]
  %2377 = vset.pattern.permute.xlu0 0
  %2378 = vperm.xlu0 %2377, %v2372
  %v2379 = vpop.permute.xlu0 %2378
  %2382 = vset.pattern.permute.xlu0 0
  %2383 = vperm.xlu0 %2382, %v2373
  %v2384 = vpop.permute.xlu0 %2383
  %2387 = vset.pattern.permute.xlu0 0
  %2388 = vperm.xlu0 %2387, %v2374
  %v2389 = vpop.permute.xlu0 %2388
  %2392 = vset.pattern.permute.xlu0 0
  %2393 = vperm.xlu0 %2392, %v2375
  %v2394 = vpop.permute.xlu0 %2393
  %v2396 = vlaneseq
  %v2397 = vshrl.u32 %v2396, 7
  %v2398 = vsub.s32 0, %v2397
  %v2399 = vrot.slane %v2367, %v2398
  %v2400 = vlaneseq
  %v2401 = vshrl.u32 %v2400, 7
  %v2402 = vsub.s32 0, %v2401
  %v2403 = vrot.slane %v2368, %v2402
  %v2404 = vlaneseq
  %v2405 = vshrl.u32 %v2404, 7
  %v2406 = vsub.s32 0, %v2405
  %v2407 = vrot.slane %v2369, %v2406
  %v2408 = vlaneseq
  %v2409 = vshrl.u32 %v2408, 7
  %v2410 = vsub.s32 0, %v2409
  %v2411 = vrot.slane %v2370, %v2410
  %v2412 = vmul.f32 %v2379, %v2399
  %v2413 = vmul.f32 %v2379, %v2403
  %v2414 = vmul.f32 %v2384, %v2399
  %v2415 = vmul.f32 %v2384, %v2403
  %v2416 = vmul.f32 %v2389, %v2399
  %v2417 = vmul.f32 %v2389, %v2403
  %v2418 = vmul.f32 %v2394, %v2399
  %v2419 = vmul.f32 %v2394, %v2403
  %v2420 = vmul.f32 %v2379, %v2407
  %v2421 = vmul.f32 %v2379, %v2411
  %v2422 = vmul.f32 %v2384, %v2407
  %v2423 = vmul.f32 %v2384, %v2411
  %v2424 = vmul.f32 %v2389, %v2407
  %v2425 = vmul.f32 %v2389, %v2411
  %v2426 = vmul.f32 %v2394, %v2407
  %v2427 = vmul.f32 %v2394, %v2411
  %v2428 = vadd.f32 %v2325, %v2412
  %v2429 = vadd.f32 %v2326, %v2413
  %v2430 = vadd.f32 %v2327, %v2414
  %v2431 = vadd.f32 %v2328, %v2415
  %v2432 = vadd.f32 %v2329, %v2416
  %v2433 = vadd.f32 %v2330, %v2417
  %v2434 = vadd.f32 %v2331, %v2418
  %v2435 = vadd.f32 %v2332, %v2419
  %v2436 = vadd.f32 %v2333, %v2420
  %v2437 = vadd.f32 %v2334, %v2421
  %v2438 = vadd.f32 %v2335, %v2422
  %v2439 = vadd.f32 %v2336, %v2423
  %v2440 = vadd.f32 %v2337, %v2424
  %v2441 = vadd.f32 %v2338, %v2425
  %v2442 = vadd.f32 %v2339, %v2426
  %v2443 = vadd.f32 %v2340, %v2427
  %s2444 = scalar_lea.vmem %s1, 928
  %v2445 = vld [vmem:[%s2444] sm:$0xff]
  %v2446 = vld [vmem:[%s2444 + $0x8] sm:$0xff]
  %v2447 = vld [vmem:[%s2444 + $0x10] sm:$0xff]
  %v2448 = vld [vmem:[%s2444 + $0x18] sm:$0xff]
  %2450 = vset.pattern.permute.xlu0 0
  %2451 = vperm.xlu0 %2450, %v2445
  %v2452 = vpop.permute.xlu0 %2451
  %2455 = vset.pattern.permute.xlu0 0
  %2456 = vperm.xlu0 %2455, %v2446
  %v2457 = vpop.permute.xlu0 %2456
  %2460 = vset.pattern.permute.xlu0 0
  %2461 = vperm.xlu0 %2460, %v2447
  %v2462 = vpop.permute.xlu0 %2461
  %2465 = vset.pattern.permute.xlu0 0
  %2466 = vperm.xlu0 %2465, %v2448
  %v2467 = vpop.permute.xlu0 %2466
  %v2469 = vlaneseq
  %v2470 = vshrl.u32 %v2469, 7
  %v2471 = vsub.s32 1, %v2470
  %v2472 = vrot.slane %v2367, %v2471
  %v2473 = vlaneseq
  %v2474 = vshrl.u32 %v2473, 7
  %v2475 = vsub.s32 1, %v2474
  %v2476 = vrot.slane %v2368, %v2475
  %v2477 = vlaneseq
  %v2478 = vshrl.u32 %v2477, 7
  %v2479 = vsub.s32 1, %v2478
  %v2480 = vrot.slane %v2369, %v2479
  %v2481 = vlaneseq
  %v2482 = vshrl.u32 %v2481, 7
  %v2483 = vsub.s32 1, %v2482
  %v2484 = vrot.slane %v2370, %v2483
  %v2485 = vmul.f32 %v2452, %v2472
  %v2486 = vmul.f32 %v2452, %v2476
  %v2487 = vmul.f32 %v2457, %v2472
  %v2488 = vmul.f32 %v2457, %v2476
  %v2489 = vmul.f32 %v2462, %v2472
  %v2490 = vmul.f32 %v2462, %v2476
  %v2491 = vmul.f32 %v2467, %v2472
  %v2492 = vmul.f32 %v2467, %v2476
  %v2493 = vmul.f32 %v2452, %v2480
  %v2494 = vmul.f32 %v2452, %v2484
  %v2495 = vmul.f32 %v2457, %v2480
  %v2496 = vmul.f32 %v2457, %v2484
  %v2497 = vmul.f32 %v2462, %v2480
  %v2498 = vmul.f32 %v2462, %v2484
  %v2499 = vmul.f32 %v2467, %v2480
  %v2500 = vmul.f32 %v2467, %v2484
  %v2501 = vadd.f32 %v2428, %v2485
  %v2502 = vadd.f32 %v2429, %v2486
  %v2503 = vadd.f32 %v2430, %v2487
  %v2504 = vadd.f32 %v2431, %v2488
  %v2505 = vadd.f32 %v2432, %v2489
  %v2506 = vadd.f32 %v2433, %v2490
  %v2507 = vadd.f32 %v2434, %v2491
  %v2508 = vadd.f32 %v2435, %v2492
  %v2509 = vadd.f32 %v2436, %v2493
  %v2510 = vadd.f32 %v2437, %v2494
  %v2511 = vadd.f32 %v2438, %v2495
  %v2512 = vadd.f32 %v2439, %v2496
  %v2513 = vadd.f32 %v2440, %v2497
  %v2514 = vadd.f32 %v2441, %v2498
  %v2515 = vadd.f32 %v2442, %v2499
  %v2516 = vadd.f32 %v2443, %v2500
  %s2517 = scalar_lea.vmem %s1, 960
  %v2518 = vld [vmem:[%s2517] sm:$0xff]
  %v2519 = vld [vmem:[%s2517 + $0x8] sm:$0xff]
  %v2520 = vld [vmem:[%s2517 + $0x10] sm:$0xff]
  %v2521 = vld [vmem:[%s2517 + $0x18] sm:$0xff]
  %2523 = vset.pattern.permute.xlu0 0
  %2524 = vperm.xlu0 %2523, %v2518
  %v2525 = vpop.permute.xlu0 %2524
  %2528 = vset.pattern.permute.xlu0 0
  %2529 = vperm.xlu0 %2528, %v2519
  %v2530 = vpop.permute.xlu0 %2529
  %2533 = vset.pattern.permute.xlu0 0
  %2534 = vperm.xlu0 %2533, %v2520
  %v2535 = vpop.permute.xlu0 %2534
  %2538 = vset.pattern.permute.xlu0 0
  %2539 = vperm.xlu0 %2538, %v2521
  %v2540 = vpop.permute.xlu0 %2539
  %v2542 = vlaneseq
  %v2543 = vshrl.u32 %v2542, 7
  %v2544 = vsub.s32 2, %v2543
  %v2545 = vrot.slane %v2367, %v2544
  %v2546 = vlaneseq
  %v2547 = vshrl.u32 %v2546, 7
  %v2548 = vsub.s32 2, %v2547
  %v2549 = vrot.slane %v2368, %v2548
  %v2550 = vlaneseq
  %v2551 = vshrl.u32 %v2550, 7
  %v2552 = vsub.s32 2, %v2551
  %v2553 = vrot.slane %v2369, %v2552
  %v2554 = vlaneseq
  %v2555 = vshrl.u32 %v2554, 7
  %v2556 = vsub.s32 2, %v2555
  %v2557 = vrot.slane %v2370, %v2556
  %v2558 = vmul.f32 %v2525, %v2545
  %v2559 = vmul.f32 %v2525, %v2549
  %v2560 = vmul.f32 %v2530, %v2545
  %v2561 = vmul.f32 %v2530, %v2549
  %v2562 = vmul.f32 %v2535, %v2545
  %v2563 = vmul.f32 %v2535, %v2549
  %v2564 = vmul.f32 %v2540, %v2545
  %v2565 = vmul.f32 %v2540, %v2549
  %v2566 = vmul.f32 %v2525, %v2553
  %v2567 = vmul.f32 %v2525, %v2557
  %v2568 = vmul.f32 %v2530, %v2553
  %v2569 = vmul.f32 %v2530, %v2557
  %v2570 = vmul.f32 %v2535, %v2553
  %v2571 = vmul.f32 %v2535, %v2557
  %v2572 = vmul.f32 %v2540, %v2553
  %v2573 = vmul.f32 %v2540, %v2557
  %v2574 = vadd.f32 %v2501, %v2558
  %v2575 = vadd.f32 %v2502, %v2559
  %v2576 = vadd.f32 %v2503, %v2560
  %v2577 = vadd.f32 %v2504, %v2561
  %v2578 = vadd.f32 %v2505, %v2562
  %v2579 = vadd.f32 %v2506, %v2563
  %v2580 = vadd.f32 %v2507, %v2564
  %v2581 = vadd.f32 %v2508, %v2565
  %v2582 = vadd.f32 %v2509, %v2566
  %v2583 = vadd.f32 %v2510, %v2567
  %v2584 = vadd.f32 %v2511, %v2568
  %v2585 = vadd.f32 %v2512, %v2569
  %v2586 = vadd.f32 %v2513, %v2570
  %v2587 = vadd.f32 %v2514, %v2571
  %v2588 = vadd.f32 %v2515, %v2572
  %v2589 = vadd.f32 %v2516, %v2573
  %s2590 = scalar_lea.vmem %s1, 992
  %v2591 = vld [vmem:[%s2590] sm:$0xff]
  %v2592 = vld [vmem:[%s2590 + $0x8] sm:$0xff]
  %v2593 = vld [vmem:[%s2590 + $0x10] sm:$0xff]
  %v2594 = vld [vmem:[%s2590 + $0x18] sm:$0xff]
  %2596 = vset.pattern.permute.xlu0 0
  %2597 = vperm.xlu0 %2596, %v2591
  %v2598 = vpop.permute.xlu0 %2597
  %2601 = vset.pattern.permute.xlu0 0
  %2602 = vperm.xlu0 %2601, %v2592
  %v2603 = vpop.permute.xlu0 %2602
  %2606 = vset.pattern.permute.xlu0 0
  %2607 = vperm.xlu0 %2606, %v2593
  %v2608 = vpop.permute.xlu0 %2607
  %2611 = vset.pattern.permute.xlu0 0
  %2612 = vperm.xlu0 %2611, %v2594
  %v2613 = vpop.permute.xlu0 %2612
  %v2615 = vlaneseq
  %v2616 = vshrl.u32 %v2615, 7
  %v2617 = vsub.s32 3, %v2616
  %v2618 = vrot.slane %v2367, %v2617
  %v2619 = vlaneseq
  %v2620 = vshrl.u32 %v2619, 7
  %v2621 = vsub.s32 3, %v2620
  %v2622 = vrot.slane %v2368, %v2621
  %v2623 = vlaneseq
  %v2624 = vshrl.u32 %v2623, 7
  %v2625 = vsub.s32 3, %v2624
  %v2626 = vrot.slane %v2369, %v2625
  %v2627 = vlaneseq
  %v2628 = vshrl.u32 %v2627, 7
  %v2629 = vsub.s32 3, %v2628
  %v2630 = vrot.slane %v2370, %v2629
  %v2631 = vmul.f32 %v2598, %v2618
  %v2632 = vmul.f32 %v2598, %v2622
  %v2633 = vmul.f32 %v2603, %v2618
  %v2634 = vmul.f32 %v2603, %v2622
  %v2635 = vmul.f32 %v2608, %v2618
  %v2636 = vmul.f32 %v2608, %v2622
  %v2637 = vmul.f32 %v2613, %v2618
  %v2638 = vmul.f32 %v2613, %v2622
  %v2639 = vmul.f32 %v2598, %v2626
  %v2640 = vmul.f32 %v2598, %v2630
  %v2641 = vmul.f32 %v2603, %v2626
  %v2642 = vmul.f32 %v2603, %v2630
  %v2643 = vmul.f32 %v2608, %v2626
  %v2644 = vmul.f32 %v2608, %v2630
  %v2645 = vmul.f32 %v2613, %v2626
  %v2646 = vmul.f32 %v2613, %v2630
  %v2647 = vadd.f32 %v2574, %v2631
  %v2648 = vadd.f32 %v2575, %v2632
  %v2649 = vadd.f32 %v2576, %v2633
  %v2650 = vadd.f32 %v2577, %v2634
  %v2651 = vadd.f32 %v2578, %v2635
  %v2652 = vadd.f32 %v2579, %v2636
  %v2653 = vadd.f32 %v2580, %v2637
  %v2654 = vadd.f32 %v2581, %v2638
  %v2655 = vadd.f32 %v2582, %v2639
  %v2656 = vadd.f32 %v2583, %v2640
  %v2657 = vadd.f32 %v2584, %v2641
  %v2658 = vadd.f32 %v2585, %v2642
  %v2659 = vadd.f32 %v2586, %v2643
  %v2660 = vadd.f32 %v2587, %v2644
  %v2661 = vadd.f32 %v2588, %v2645
  %v2662 = vadd.f32 %v2589, %v2646
  %2663 = vrot.lane.b32.xlu0 %v29, 111
  %v2664 = vpop.permute.xlu0 %2663
  %2665 = vrot.lane.b32.xlu0 %v30, 111
  %v2666 = vpop.permute.xlu0 %2665
  %2667 = vrot.lane.b32.xlu0 %v33, 111
  %v2668 = vpop.permute.xlu0 %2667
  %2669 = vrot.lane.b32.xlu0 %v34, 111
  %v2670 = vpop.permute.xlu0 %2669
  %vm2671 = vcmp.lt.s32.totalorder %v46, 111
  %v2672 = vsel %vm2671, %v2664, %v2668
  %v2673 = vsel %vm2671, %v2666, %v2670
  %v2674 = vsel %vm2671, %v2668, %v2664
  %v2675 = vsel %vm2671, %v2670, %v2666
  %s2676 = scalar_lea.vmem %s2, 16
  %v2677 = vld [vmem:[%s2676] sm:$0x3]
  %v2679 = vlaneseq
  %v2680 = vshrl.u32 %v2679, 7
  %v2681 = vsub.s32 0, %v2680
  %v2682 = vrot.slane %v2677, %v2681
  %v2683 = vlaneseq
  %v2684 = vshrl.u32 %v2683, 7
  %v2685 = vsub.s32 1, %v2684
  %v2686 = vrot.slane %v2677, %v2685
  %v2689 = vmul.f32 %v2672, %v2682
  %v2690 = vmul.f32 %v2674, %v2686
  %v2691 = vmul.f32 %v2673, %v2682
  %v2692 = vmul.f32 %v2675, %v2686
  %s2693 = scalar_lea.vmem %s1, 1024
  %v2694 = vld [vmem:[%s2693] sm:$0xff]
  %v2695 = vld [vmem:[%s2693 + $0x8] sm:$0xff]
  %v2696 = vld [vmem:[%s2693 + $0x10] sm:$0xff]
  %v2697 = vld [vmem:[%s2693 + $0x18] sm:$0xff]
  %2699 = vset.pattern.permute.xlu0 0
  %2700 = vperm.xlu0 %2699, %v2694
  %v2701 = vpop.permute.xlu0 %2700
  %2704 = vset.pattern.permute.xlu0 0
  %2705 = vperm.xlu0 %2704, %v2695
  %v2706 = vpop.permute.xlu0 %2705
  %2709 = vset.pattern.permute.xlu0 0
  %2710 = vperm.xlu0 %2709, %v2696
  %v2711 = vpop.permute.xlu0 %2710
  %2714 = vset.pattern.permute.xlu0 0
  %2715 = vperm.xlu0 %2714, %v2697
  %v2716 = vpop.permute.xlu0 %2715
  %v2718 = vlaneseq
  %v2719 = vshrl.u32 %v2718, 7
  %v2720 = vsub.s32 0, %v2719
  %v2721 = vrot.slane %v2689, %v2720
  %v2722 = vlaneseq
  %v2723 = vshrl.u32 %v2722, 7
  %v2724 = vsub.s32 0, %v2723
  %v2725 = vrot.slane %v2690, %v2724
  %v2726 = vlaneseq
  %v2727 = vshrl.u32 %v2726, 7
  %v2728 = vsub.s32 0, %v2727
  %v2729 = vrot.slane %v2691, %v2728
  %v2730 = vlaneseq
  %v2731 = vshrl.u32 %v2730, 7
  %v2732 = vsub.s32 0, %v2731
  %v2733 = vrot.slane %v2692, %v2732
  %v2734 = vmul.f32 %v2701, %v2721
  %v2735 = vmul.f32 %v2701, %v2725
  %v2736 = vmul.f32 %v2706, %v2721
  %v2737 = vmul.f32 %v2706, %v2725
  %v2738 = vmul.f32 %v2711, %v2721
  %v2739 = vmul.f32 %v2711, %v2725
  %v2740 = vmul.f32 %v2716, %v2721
  %v2741 = vmul.f32 %v2716, %v2725
  %v2742 = vmul.f32 %v2701, %v2729
  %v2743 = vmul.f32 %v2701, %v2733
  %v2744 = vmul.f32 %v2706, %v2729
  %v2745 = vmul.f32 %v2706, %v2733
  %v2746 = vmul.f32 %v2711, %v2729
  %v2747 = vmul.f32 %v2711, %v2733
  %v2748 = vmul.f32 %v2716, %v2729
  %v2749 = vmul.f32 %v2716, %v2733
  %v2750 = vadd.f32 %v2647, %v2734
  %v2751 = vadd.f32 %v2648, %v2735
  %v2752 = vadd.f32 %v2649, %v2736
  %v2753 = vadd.f32 %v2650, %v2737
  %v2754 = vadd.f32 %v2651, %v2738
  %v2755 = vadd.f32 %v2652, %v2739
  %v2756 = vadd.f32 %v2653, %v2740
  %v2757 = vadd.f32 %v2654, %v2741
  %v2758 = vadd.f32 %v2655, %v2742
  %v2759 = vadd.f32 %v2656, %v2743
  %v2760 = vadd.f32 %v2657, %v2744
  %v2761 = vadd.f32 %v2658, %v2745
  %v2762 = vadd.f32 %v2659, %v2746
  %v2763 = vadd.f32 %v2660, %v2747
  %v2764 = vadd.f32 %v2661, %v2748
  %v2765 = vadd.f32 %v2662, %v2749
  %s2766 = scalar_lea.vmem %s1, 1056
  %v2767 = vld [vmem:[%s2766] sm:$0xff]
  %v2768 = vld [vmem:[%s2766 + $0x8] sm:$0xff]
  %v2769 = vld [vmem:[%s2766 + $0x10] sm:$0xff]
  %v2770 = vld [vmem:[%s2766 + $0x18] sm:$0xff]
  %2772 = vset.pattern.permute.xlu0 0
  %2773 = vperm.xlu0 %2772, %v2767
  %v2774 = vpop.permute.xlu0 %2773
  %2777 = vset.pattern.permute.xlu0 0
  %2778 = vperm.xlu0 %2777, %v2768
  %v2779 = vpop.permute.xlu0 %2778
  %2782 = vset.pattern.permute.xlu0 0
  %2783 = vperm.xlu0 %2782, %v2769
  %v2784 = vpop.permute.xlu0 %2783
  %2787 = vset.pattern.permute.xlu0 0
  %2788 = vperm.xlu0 %2787, %v2770
  %v2789 = vpop.permute.xlu0 %2788
  %v2791 = vlaneseq
  %v2792 = vshrl.u32 %v2791, 7
  %v2793 = vsub.s32 1, %v2792
  %v2794 = vrot.slane %v2689, %v2793
  %v2795 = vlaneseq
  %v2796 = vshrl.u32 %v2795, 7
  %v2797 = vsub.s32 1, %v2796
  %v2798 = vrot.slane %v2690, %v2797
  %v2799 = vlaneseq
  %v2800 = vshrl.u32 %v2799, 7
  %v2801 = vsub.s32 1, %v2800
  %v2802 = vrot.slane %v2691, %v2801
  %v2803 = vlaneseq
  %v2804 = vshrl.u32 %v2803, 7
  %v2805 = vsub.s32 1, %v2804
  %v2806 = vrot.slane %v2692, %v2805
  %v2807 = vmul.f32 %v2774, %v2794
  %v2808 = vmul.f32 %v2774, %v2798
  %v2809 = vmul.f32 %v2779, %v2794
  %v2810 = vmul.f32 %v2779, %v2798
  %v2811 = vmul.f32 %v2784, %v2794
  %v2812 = vmul.f32 %v2784, %v2798
  %v2813 = vmul.f32 %v2789, %v2794
  %v2814 = vmul.f32 %v2789, %v2798
  %v2815 = vmul.f32 %v2774, %v2802
  %v2816 = vmul.f32 %v2774, %v2806
  %v2817 = vmul.f32 %v2779, %v2802
  %v2818 = vmul.f32 %v2779, %v2806
  %v2819 = vmul.f32 %v2784, %v2802
  %v2820 = vmul.f32 %v2784, %v2806
  %v2821 = vmul.f32 %v2789, %v2802
  %v2822 = vmul.f32 %v2789, %v2806
  %v2823 = vadd.f32 %v2750, %v2807
  %v2824 = vadd.f32 %v2751, %v2808
  %v2825 = vadd.f32 %v2752, %v2809
  %v2826 = vadd.f32 %v2753, %v2810
  %v2827 = vadd.f32 %v2754, %v2811
  %v2828 = vadd.f32 %v2755, %v2812
  %v2829 = vadd.f32 %v2756, %v2813
  %v2830 = vadd.f32 %v2757, %v2814
  %v2831 = vadd.f32 %v2758, %v2815
  %v2832 = vadd.f32 %v2759, %v2816
  %v2833 = vadd.f32 %v2760, %v2817
  %v2834 = vadd.f32 %v2761, %v2818
  %v2835 = vadd.f32 %v2762, %v2819
  %v2836 = vadd.f32 %v2763, %v2820
  %v2837 = vadd.f32 %v2764, %v2821
  %v2838 = vadd.f32 %v2765, %v2822
  %s2839 = scalar_lea.vmem %s1, 1088
  %v2840 = vld [vmem:[%s2839] sm:$0xff]
  %v2841 = vld [vmem:[%s2839 + $0x8] sm:$0xff]
  %v2842 = vld [vmem:[%s2839 + $0x10] sm:$0xff]
  %v2843 = vld [vmem:[%s2839 + $0x18] sm:$0xff]
  %2845 = vset.pattern.permute.xlu0 0
  %2846 = vperm.xlu0 %2845, %v2840
  %v2847 = vpop.permute.xlu0 %2846
  %2850 = vset.pattern.permute.xlu0 0
  %2851 = vperm.xlu0 %2850, %v2841
  %v2852 = vpop.permute.xlu0 %2851
  %2855 = vset.pattern.permute.xlu0 0
  %2856 = vperm.xlu0 %2855, %v2842
  %v2857 = vpop.permute.xlu0 %2856
  %2860 = vset.pattern.permute.xlu0 0
  %2861 = vperm.xlu0 %2860, %v2843
  %v2862 = vpop.permute.xlu0 %2861
  %v2864 = vlaneseq
  %v2865 = vshrl.u32 %v2864, 7
  %v2866 = vsub.s32 2, %v2865
  %v2867 = vrot.slane %v2689, %v2866
  %v2868 = vlaneseq
  %v2869 = vshrl.u32 %v2868, 7
  %v2870 = vsub.s32 2, %v2869
  %v2871 = vrot.slane %v2690, %v2870
  %v2872 = vlaneseq
  %v2873 = vshrl.u32 %v2872, 7
  %v2874 = vsub.s32 2, %v2873
  %v2875 = vrot.slane %v2691, %v2874
  %v2876 = vlaneseq
  %v2877 = vshrl.u32 %v2876, 7
  %v2878 = vsub.s32 2, %v2877
  %v2879 = vrot.slane %v2692, %v2878
  %v2880 = vmul.f32 %v2847, %v2867
  %v2881 = vmul.f32 %v2847, %v2871
  %v2882 = vmul.f32 %v2852, %v2867
  %v2883 = vmul.f32 %v2852, %v2871
  %v2884 = vmul.f32 %v2857, %v2867
  %v2885 = vmul.f32 %v2857, %v2871
  %v2886 = vmul.f32 %v2862, %v2867
  %v2887 = vmul.f32 %v2862, %v2871
  %v2888 = vmul.f32 %v2847, %v2875
  %v2889 = vmul.f32 %v2847, %v2879
  %v2890 = vmul.f32 %v2852, %v2875
  %v2891 = vmul.f32 %v2852, %v2879
  %v2892 = vmul.f32 %v2857, %v2875
  %v2893 = vmul.f32 %v2857, %v2879
  %v2894 = vmul.f32 %v2862, %v2875
  %v2895 = vmul.f32 %v2862, %v2879
  %v2896 = vadd.f32 %v2823, %v2880
  %v2897 = vadd.f32 %v2824, %v2881
  %v2898 = vadd.f32 %v2825, %v2882
  %v2899 = vadd.f32 %v2826, %v2883
  %v2900 = vadd.f32 %v2827, %v2884
  %v2901 = vadd.f32 %v2828, %v2885
  %v2902 = vadd.f32 %v2829, %v2886
  %v2903 = vadd.f32 %v2830, %v2887
  %v2904 = vadd.f32 %v2831, %v2888
  %v2905 = vadd.f32 %v2832, %v2889
  %v2906 = vadd.f32 %v2833, %v2890
  %v2907 = vadd.f32 %v2834, %v2891
  %v2908 = vadd.f32 %v2835, %v2892
  %v2909 = vadd.f32 %v2836, %v2893
  %v2910 = vadd.f32 %v2837, %v2894
  %v2911 = vadd.f32 %v2838, %v2895
  %s2912 = scalar_lea.vmem %s1, 1120
  %v2913 = vld [vmem:[%s2912] sm:$0xff]
  %v2914 = vld [vmem:[%s2912 + $0x8] sm:$0xff]
  %v2915 = vld [vmem:[%s2912 + $0x10] sm:$0xff]
  %v2916 = vld [vmem:[%s2912 + $0x18] sm:$0xff]
  %2918 = vset.pattern.permute.xlu0 0
  %2919 = vperm.xlu0 %2918, %v2913
  %v2920 = vpop.permute.xlu0 %2919
  %2923 = vset.pattern.permute.xlu0 0
  %2924 = vperm.xlu0 %2923, %v2914
  %v2925 = vpop.permute.xlu0 %2924
  %2928 = vset.pattern.permute.xlu0 0
  %2929 = vperm.xlu0 %2928, %v2915
  %v2930 = vpop.permute.xlu0 %2929
  %2933 = vset.pattern.permute.xlu0 0
  %2934 = vperm.xlu0 %2933, %v2916
  %v2935 = vpop.permute.xlu0 %2934
  %v2937 = vlaneseq
  %v2938 = vshrl.u32 %v2937, 7
  %v2939 = vsub.s32 3, %v2938
  %v2940 = vrot.slane %v2689, %v2939
  %v2941 = vlaneseq
  %v2942 = vshrl.u32 %v2941, 7
  %v2943 = vsub.s32 3, %v2942
  %v2944 = vrot.slane %v2690, %v2943
  %v2945 = vlaneseq
  %v2946 = vshrl.u32 %v2945, 7
  %v2947 = vsub.s32 3, %v2946
  %v2948 = vrot.slane %v2691, %v2947
  %v2949 = vlaneseq
  %v2950 = vshrl.u32 %v2949, 7
  %v2951 = vsub.s32 3, %v2950
  %v2952 = vrot.slane %v2692, %v2951
  %v2953 = vmul.f32 %v2920, %v2940
  %v2954 = vmul.f32 %v2920, %v2944
  %v2955 = vmul.f32 %v2925, %v2940
  %v2956 = vmul.f32 %v2925, %v2944
  %v2957 = vmul.f32 %v2930, %v2940
  %v2958 = vmul.f32 %v2930, %v2944
  %v2959 = vmul.f32 %v2935, %v2940
  %v2960 = vmul.f32 %v2935, %v2944
  %v2961 = vmul.f32 %v2920, %v2948
  %v2962 = vmul.f32 %v2920, %v2952
  %v2963 = vmul.f32 %v2925, %v2948
  %v2964 = vmul.f32 %v2925, %v2952
  %v2965 = vmul.f32 %v2930, %v2948
  %v2966 = vmul.f32 %v2930, %v2952
  %v2967 = vmul.f32 %v2935, %v2948
  %v2968 = vmul.f32 %v2935, %v2952
  %v2969 = vadd.f32 %v2896, %v2953
  %v2970 = vadd.f32 %v2897, %v2954
  %v2971 = vadd.f32 %v2898, %v2955
  %v2972 = vadd.f32 %v2899, %v2956
  %v2973 = vadd.f32 %v2900, %v2957
  %v2974 = vadd.f32 %v2901, %v2958
  %v2975 = vadd.f32 %v2902, %v2959
  %v2976 = vadd.f32 %v2903, %v2960
  %v2977 = vadd.f32 %v2904, %v2961
  %v2978 = vadd.f32 %v2905, %v2962
  %v2979 = vadd.f32 %v2906, %v2963
  %v2980 = vadd.f32 %v2907, %v2964
  %v2981 = vadd.f32 %v2908, %v2965
  %v2982 = vadd.f32 %v2909, %v2966
  %v2983 = vadd.f32 %v2910, %v2967
  %v2984 = vadd.f32 %v2911, %v2968
  %v2985 = vld [vmem:[%s3] sm:$0xff]
  %v2986 = vld [vmem:[%s3 + $0x8] sm:$0xff]
  %v2987 = vld [vmem:[%s3 + $0x10] sm:$0xff]
  %v2988 = vld [vmem:[%s3 + $0x18] sm:$0xff]
  %2990 = vset.pattern.permute.xlu0 0
  %2991 = vperm.xlu0 %2990, %v2985
  %v2992 = vpop.permute.xlu0 %2991
  %2995 = vset.pattern.permute.xlu0 0
  %2996 = vperm.xlu0 %2995, %v2986
  %v2997 = vpop.permute.xlu0 %2996
  %3000 = vset.pattern.permute.xlu0 0
  %3001 = vperm.xlu0 %3000, %v2987
  %v3002 = vpop.permute.xlu0 %3001
  %3005 = vset.pattern.permute.xlu0 0
  %3006 = vperm.xlu0 %3005, %v2988
  %v3007 = vpop.permute.xlu0 %3006
  %v3009 = vadd.f32 %v2969, %v2992
  %v3010 = vadd.f32 %v2970, %v2992
  %v3011 = vadd.f32 %v2971, %v2997
  %v3012 = vadd.f32 %v2972, %v2997
  %v3013 = vadd.f32 %v2973, %v3002
  %v3014 = vadd.f32 %v2974, %v3002
  %v3015 = vadd.f32 %v2975, %v3007
  %v3016 = vadd.f32 %v2976, %v3007
  %v3017 = vadd.f32 %v2977, %v2992
  %v3018 = vadd.f32 %v2978, %v2992
  %v3019 = vadd.f32 %v2979, %v2997
  %v3020 = vadd.f32 %v2980, %v2997
  %v3021 = vadd.f32 %v2981, %v3002
  %v3022 = vadd.f32 %v2982, %v3002
  %v3023 = vadd.f32 %v2983, %v3007
  %v3024 = vadd.f32 %v2984, %v3007
  %vm3041 = vcmask 1043456
  %v3042 = vrot.slane %v3009, 4
  %v3043 = vrot.slane %v3010, 4
  %v3044 = vrot.slane %v3011, 4
  %v3045 = vsel %vm3041, %v3042, %v3044
  %v3046 = vrot.slane %v3012, 4
  %v3047 = vsel %vm3041, %v3043, %v3046
  %v3048 = vrot.slane %v3013, 4
  %v3049 = vsel %vm3041, %v3044, %v3048
  %v3050 = vrot.slane %v3014, 4
  %v3051 = vsel %vm3041, %v3046, %v3050
  %v3052 = vrot.slane %v3015, 4
  %v3053 = vsel %vm3041, %v3048, %v3052
  %v3054 = vrot.slane %v3016, 4
  %v3055 = vsel %vm3041, %v3050, %v3054
  %v3056 = vrot.slane %v3017, 4
  %v3057 = vrot.slane %v3018, 4
  %v3058 = vrot.slane %v3019, 4
  %v3059 = vsel %vm3041, %v3056, %v3058
  %v3060 = vrot.slane %v3020, 4
  %v3061 = vsel %vm3041, %v3057, %v3060
  %v3062 = vrot.slane %v3021, 4
  %v3063 = vsel %vm3041, %v3058, %v3062
  %v3064 = vrot.slane %v3022, 4
  %v3065 = vsel %vm3041, %v3060, %v3064
  %v3066 = vrot.slane %v3023, 4
  %v3067 = vsel %vm3041, %v3062, %v3066
  %v3068 = vrot.slane %v3024, 4
  %v3069 = vsel %vm3041, %v3064, %v3068
  %3090 = vst [vmem:[%s4] sm:$0xf0] %v3042
  %3091 = vst [vmem:[%s4 + $0x8] sm:$0xf0] %v3043
  %3092 = vst [vmem:[%s4 + $0x10] sm:$0xff] %v3045
  %3093 = vst [vmem:[%s4 + $0x18] sm:$0xff] %v3047
  %3094 = vst [vmem:[%s4 + $0x20] sm:$0xff] %v3049
  %3095 = vst [vmem:[%s4 + $0x28] sm:$0xff] %v3051
  %3096 = vst [vmem:[%s4 + $0x30] sm:$0xff] %v3053
  %3097 = vst [vmem:[%s4 + $0x38] sm:$0xff] %v3055
  %3098 = vst [vmem:[%s4 + $0x40] sm:$0xf] %v3052
  %3099 = vst [vmem:[%s4 + $0x48] sm:$0xf] %v3054
  %3100 = vst [vmem:[%s4 + $0x50] sm:$0xf0] %v3056
  %3101 = vst [vmem:[%s4 + $0x58] sm:$0xf0] %v3057
  %3102 = vst [vmem:[%s4 + $0x60] sm:$0xff] %v3059
  %3103 = vst [vmem:[%s4 + $0x68] sm:$0xff] %v3061
  %3104 = vst [vmem:[%s4 + $0x70] sm:$0xff] %v3063
  %3105 = vst [vmem:[%s4 + $0x78] sm:$0xff] %v3065
  %3106 = vst [vmem:[%s4 + $0x80] sm:$0xff] %v3067
  %3107 = vst [vmem:[%s4 + $0x88] sm:$0xff] %v3069
  %3108 = vst [vmem:[%s4 + $0x90] sm:$0xf] %v3066
  %3109 = vst [vmem:[%s4 + $0x98] sm:$0xf] %v3068
  // Predicated region
  $region18: #{sobel_conv2d.1} parent=0 // pred_check
    _
  $region19: #{sobel_conv2d.1} parent=0 // pred_check_branch
    %3111 = sbr.rel (0) target = $region21
  $region20: #{sobel_conv2d.1} parent=0 // pred_region
    _
  $region21: #{sobel_conv2d.1} parent=0 // pred_fallthru
    _
  // Predicated region
  $region22: #{sobel_conv2d.1} parent=0 // pred_check
    _
  $region23: #{sobel_conv2d.1} parent=0 // pred_check_branch
    %3113 = sbr.rel (0) target = $region25
  $region24: #{sobel_conv2d.1} parent=0 // pred_region
    _
  $region25: #{sobel_conv2d.1} parent=0 // pred_fallthru
    _

</llo_original>
